<compile_context>
chip_gen: v5e
topology: v5e:2x2
jax: 0.10.0
libtpu: 0.0.40
codegen_flags: <defaults>
</compile_context>

<pallas_src>
import functools
import math

import jax
import jax.numpy as jnp
from jax.experimental import pallas as pl
from jax.experimental.pallas import tpu as pltpu


# ----------------------------------------------------------------------------
# chip-aware VMEM budget & default tile sizes
# ----------------------------------------------------------------------------
def _vmem_limit_bytes():
    # 128 MiB physical on v5e/v6e -> ~96 MiB budget; 64 MiB on v7x -> 48 MiB budget.
    try:
        cap = pltpu.get_tpu_info().vmem_capacity_bytes
    except Exception:
        cap = 64 * 1024 * 1024            # conservative (v7x-safe) fallback
    return max(48 * 1024 * 1024, min(cap * 3 // 4, 100 * 1024 * 1024))


_VMEM_LIMIT = _vmem_limit_bytes()
_BIG_VMEM = _VMEM_LIMIT >= 80 * 1024 * 1024
_DEF_TM = 512 if _BIG_VMEM else 256       # row tile
_DEF_TN = 1024 if _BIG_VMEM else 512      # output-column tile
_DEF_TK = 1024 if _BIG_VMEM else 512      # contraction tile
_DEF_TF = 1024 if _BIG_VMEM else 512      # FFN hidden (d_ff) chunk


# ----------------------------------------------------------------------------
# helpers
# ----------------------------------------------------------------------------
def _round_up(a, b):
    return ((a + b - 1) // b) * b


def _pick_tile(dim, pref, align=128):
    """Largest `align`-multiple tile <= pref that divides dim, else the full dim."""
    if dim <= pref:
        return dim
    t = (pref // align) * align
    while t >= align:
        if dim % t == 0:
            return t
        t -= align
    return dim   # TODO(synk): non-128-multiple dims fall back to one full-width tile


def _row_tile(m, pref):
    """Row tile that avoids padding when possible (full array, or a divisor of m)."""
    if m <= pref:
        return m, m
    t = (pref // 8) * 8
    while t >= 8:
        if m % t == 0:
            return t, m
        t -= 8
    return pref, _round_up(m, pref)


def _head_group(n_heads, d_head, max_width=512):
    """Heads per attention grid step: G | H with G*d_head a lane-dense 128-multiple."""
    for g in range(n_heads, 0, -1):
        w = g * d_head
        if n_heads % g == 0 and w % 128 == 0 and (w <= max_width or g == 1):
            return g
    # TODO(synk): host-side head-split fallback for d_model not a multiple of 128.
    raise NotImplementedError(
        "in-kernel head split needs a 128-lane-aligned head group (d_model % 128 == 0)")


def _ffn_chunk_tile(d_model, d_ff, tm, w_bytes, pref):
    """d_ff chunk keeping double-buffered W1/W2 chunks inside the VMEM budget (v7x audit)."""
    fixed = 6 * tm * d_model * 4                            # x/out dbl-buffers + 2 f32 scratches
    avail = max(int(_VMEM_LIMIT * 0.75) - fixed, 4 * 128 * d_model * w_bytes)
    cap = max(128, (avail // (4 * d_model * w_bytes)) // 128 * 128)
    return _pick_tile(d_ff, min(pref, cap))


# ----------------------------------------------------------------------------
# Fused LayerNorm + linear: o = LN(x) @ W + bias
#   grid = (row blocks [parallel], output-column chunks [arbitrary, last])
#   LN(x) (torch unbiased-std semantics) computed once per row block into VMEM scratch.
# ----------------------------------------------------------------------------
def ln_linear_kernel(x_ref, g_ref, b_ref, w_ref, bias_ref, o_ref, xn_ref, *, eps):
    @pl.when(pl.program_id(1) == 0)
    def _():
        x = x_ref[...].astype(jnp.float32)
        d = x.shape[-1]
        mean = jnp.mean(x, axis=-1, keepdims=True)
        var = jnp.sum((x - mean) ** 2, axis=-1, keepdims=True) / (d - 1)   # unbiased
        xn_ref[...] = (g_ref[...].astype(jnp.float32) * (x - mean)
                       / (jnp.sqrt(var) + eps) + b_ref[...].astype(jnp.float32))

    y = jnp.dot(xn_ref[...].astype(w_ref.dtype), w_ref[...],
                preferred_element_type=jnp.float32)
    o_ref[...] = (y + bias_ref[...].astype(jnp.float32)).astype(o_ref.dtype)


def ln_linear(x2, g, b, w, bias, *, eps=1e-6, tm=None, tn=None):
    M, D = x2.shape
    N = w.shape[1]
    tm_eff, Mp = _row_tile(M, tm or _DEF_TM)
    if Mp != M:
        x2 = jnp.pad(x2, ((0, Mp - M), (0, 0)))
    tn_eff = _pick_tile(N, tn or _DEF_TN)

    out = pl.pallas_call(
        functools.partial(ln_linear_kernel, eps=eps),
        out_shape=jax.ShapeDtypeStruct((Mp, N), x2.dtype),
        grid_spec=pltpu.PrefetchScalarGridSpec(
            num_scalar_prefetch=0,
            grid=(Mp // tm_eff, N // tn_eff),
            in_specs=[
                pl.BlockSpec((tm_eff, D), lambda i, j: (i, 0)),     # x (resident over j)
                pl.BlockSpec((1, D), lambda i, j: (0, 0)),          # LN gamma
                pl.BlockSpec((1, D), lambda i, j: (0, 0)),          # LN beta
                pl.BlockSpec((D, tn_eff), lambda i, j: (0, j)),     # W chunk
                pl.BlockSpec((1, tn_eff), lambda i, j: (0, j)),     # bias chunk
            ],
            out_specs=pl.BlockSpec((tm_eff, tn_eff), lambda i, j: (i, j)),
            scratch_shapes=[pltpu.VMEM((tm_eff, D), jnp.float32)],  # LN(x)
        ),
        compiler_params=pltpu.CompilerParams(
            dimension_semantics=("parallel", "arbitrary"),
            vmem_limit_bytes=_VMEM_LIMIT),
    )(x2, g.reshape(1, D), b.reshape(1, D), w, bias.reshape(1, N))
    return out[:M]


# ----------------------------------------------------------------------------
# Generic linear: y = x @ W + b (+ residual), K-chunked f32 accumulator
# ----------------------------------------------------------------------------
def _linear_accumulate(x_ref, w_ref, acc_ref):
    @pl.when(pl.program_id(2) == 0)
    def _():
        acc_ref[...] = jnp.zeros_like(acc_ref)
    acc_ref[...] += jnp.dot(x_ref[...], w_ref[...],
                            preferred_element_type=jnp.float32)


def linear_kernel(x_ref, w_ref, b_ref, o_ref, acc_ref):
    _linear_accumulate(x_ref, w_ref, acc_ref)

    @pl.when(pl.program_id(2) == pl.num_programs(2) - 1)
    def _():
        o_ref[...] = (acc_ref[...] + b_ref[...].astype(jnp.float32)).astype(o_ref.dtype)


def linear_residual_kernel(x_ref, w_ref, b_ref, r_ref, o_ref, acc_ref):
    _linear_accumulate(x_ref, w_ref, acc_ref)

    @pl.when(pl.program_id(2) == pl.num_programs(2) - 1)
    def _():
        o_ref[...] = (acc_ref[...] + b_ref[...].astype(jnp.float32)
                      + r_ref[...].astype(jnp.float32)).astype(o_ref.dtype)


def linear(x2, w, b, residual=None, *, tm=None, tn=None, tk=None):
    M, K = x2.shape
    N = w.shape[1]
    tm_eff, Mp = _row_tile(M, tm or _DEF_TM)
    if Mp != M:
        x2 = jnp.pad(x2, ((0, Mp - M), (0, 0)))
        if residual is not None:
            residual = jnp.pad(residual, ((0, Mp - M), (0, 0)))
    tn_eff = _pick_tile(N, tn or _DEF_TN)
    tk_eff = _pick_tile(K, tk or _DEF_TK)
    grid = (Mp // tm_eff, N // tn_eff, K // tk_eff)

    in_specs = [
        pl.BlockSpec((tm_eff, tk_eff), lambda i, j, k: (i, k)),
        pl.BlockSpec((tk_eff, tn_eff), lambda i, j, k: (k, j)),
        pl.BlockSpec((1, tn_eff), lambda i, j, k: (0, j)),
    ]
    args = [x2, w, b.reshape(1, N)]
    kernel = linear_kernel
    if residual is not None:
        in_specs.append(pl.BlockSpec((tm_eff, tn_eff), lambda i, j, k: (i, j)))
        args.append(residual)
        kernel = linear_residual_kernel

    out = pl.pallas_call(
        kernel,
        out_shape=jax.ShapeDtypeStruct((Mp, N), x2.dtype),
        grid_spec=pltpu.PrefetchScalarGridSpec(
            num_scalar_prefetch=0,
            grid=grid,
            in_specs=in_specs,
            out_specs=pl.BlockSpec((tm_eff, tn_eff), lambda i, j, k: (i, j)),
            scratch_shapes=[pltpu.VMEM((tm_eff, tn_eff), jnp.float32)],
        ),
        compiler_params=pltpu.CompilerParams(
            dimension_semantics=("parallel", "parallel", "arbitrary"),
            vmem_limit_bytes=_VMEM_LIMIT),
    )(*args)
    return out[:M]


# ----------------------------------------------------------------------------
# Attention core: softmax(q k^T / sqrt(dk) + mask) v
#   grid = (batch [parallel], head-group [parallel])
#   q/k/v head columns are sliced straight out of the packed projection arrays via
#   BlockSpec index_maps (no host transposes); the mask is one (B, Sq, Sk) block shared
#   across all heads; the context is stored as a lane-dense (Sq, G*Dk) slab.
# ----------------------------------------------------------------------------
def attention_group_kernel(q_ref, k_ref, v_ref, m_ref, o_ref, *, g_heads, d_head, scale):
    q = q_ref[0]                        # (Sq, G*Dk)  native dtype -> MXU directly
    k = k_ref[0]                        # (Sk, G*Dk)
    v = v_ref[0]                        # (Sk, G*Dk)
    mask = m_ref[0]                     # (Sq, Sk)    shared across heads
    ctx = []
    for h in range(g_heads):            # static unroll over the head group
        sl = slice(h * d_head, (h + 1) * d_head)
        qh = q[:, sl] * scale           # fold 1/sqrt(dk) into q (Sq*Dk elems, not Sq*Sk)
        s = jax.lax.dot_general(qh, k[:, sl], (((1,), (1,)), ((), ())),
                                preferred_element_type=jnp.float32)      # q @ k^T
        s = jnp.where(mask != 0, s, -1e9)               # masked_fill(mask == 0, -1e9)
        s = s - jnp.max(s, axis=-1, keepdims=True)
        p = jnp.exp(s)
        denom = jnp.sum(p, axis=-1, keepdims=True)
        o = jnp.dot(p.astype(v.dtype), v[:, sl], preferred_element_type=jnp.float32)
        # normalize the small (Sq, Dk) context, not the (Sq, Sk) probabilities;
        # approx=True would push the divide fully onto the EUP at reduced precision.
        ctx.append(o * pl.reciprocal(denom, approx=False))
    o_ref[0] = jnp.concatenate(ctx, axis=-1).astype(o_ref.dtype)


def attention_core(q_arr, kv_arr, mask, *, n_heads, d_head, group,
                   q_off, k_off, v_off):
    B, Sq, _ = q_arr.shape
    Sk = kv_arr.shape[1]
    gw = group * d_head
    n_groups = n_heads // group

    return pl.pallas_call(
        functools.partial(attention_group_kernel, g_heads=group, d_head=d_head,
                          scale=1.0 / math.sqrt(d_head)),
        out_shape=jax.ShapeDtypeStruct((B, Sq, n_heads * d_head), q_arr.dtype),
        grid_spec=pltpu.PrefetchScalarGridSpec(
            num_scalar_prefetch=0,
            grid=(B, n_groups),
            in_specs=[
                pl.BlockSpec((1, Sq, gw), lambda b, g: (b, 0, q_off + g)),
                pl.BlockSpec((1, Sk, gw), lambda b, g: (b, 0, k_off + g)),
                pl.BlockSpec((1, Sk, gw), lambda b, g: (b, 0, v_off + g)),
                pl.BlockSpec((1, Sq, Sk), lambda b, g: (b, 0, 0)),        # shared mask
            ],
            out_specs=pl.BlockSpec((1, Sq, gw), lambda b, g: (b, 0, g)),
        ),
        compiler_params=pltpu.CompilerParams(
            dimension_semantics=("parallel", "parallel"),
            vmem_limit_bytes=_VMEM_LIMIT),
    )(q_arr, kv_arr, kv_arr, mask)


# ----------------------------------------------------------------------------
# Fused FFN sublayer: out = x + relu(LN(x) @ W1 + b1) @ W2 + b2
#   grid = (row blocks [parallel], d_ff chunks [arbitrary, last])
# ----------------------------------------------------------------------------
def ffn_sublayer_kernel(x_ref, g_ref, bln_ref, w1_ref, b1_ref, w2_ref, b2_ref,
                        o_ref, xn_ref, acc_ref, *, eps):
    f = pl.program_id(1)

    @pl.when(f == 0)
    def _():
        x = x_ref[...].astype(jnp.float32)
        d = x.shape[-1]
        mean = jnp.mean(x, axis=-1, keepdims=True)
        var = jnp.sum((x - mean) ** 2, axis=-1, keepdims=True) / (d - 1)   # unbiased
        xn_ref[...] = (g_ref[...].astype(jnp.float32) * (x - mean)
                       / (jnp.sqrt(var) + eps) + bln_ref[...].astype(jnp.float32))
        acc_ref[...] = jnp.zeros_like(acc_ref)

    h = jnp.dot(xn_ref[...].astype(w1_ref.dtype), w1_ref[...],
                preferred_element_type=jnp.float32)
    h = jnp.maximum(h + b1_ref[...].astype(jnp.float32), 0.0)       # ReLU
    # dropout == identity (eval mode)
    acc_ref[...] += jnp.dot(h.astype(w2_ref.dtype), w2_ref[...],
                            preferred_element_type=jnp.float32)

    @pl.when(f == pl.num_programs(1) - 1)
    def _():
        o_ref[...] = (x_ref[...].astype(jnp.float32) + acc_ref[...]
                      + b2_ref[...].astype(jnp.float32)).astype(o_ref.dtype)


def ffn_sublayer(x2, ln_g, ln_b, w1, b1, w2, b2, *, eps=1e-6, tm=None, tf=None):
    M, D = x2.shape
    d_ff = w1.shape[1]
    tm_eff, Mp = _row_tile(M, tm or _DEF_TM)
    if Mp != M:
        x2 = jnp.pad(x2, ((0, Mp - M), (0, 0)))
    w_bytes = jnp.dtype(w1.dtype).itemsize
    tf_eff = _ffn_chunk_tile(D, d_ff, tm_eff, w_bytes, tf or _DEF_TF)
    grid = (Mp // tm_eff, d_ff // tf_eff)

    # TODO(synk): on v5e with tiny row tiles, pl.Buffered(3) on the W1/W2 specs would
    #             hide the per-chunk weight DMA further.
    out = pl.pallas_call(
        functools.partial(ffn_sublayer_kernel, eps=eps),
        out_shape=jax.ShapeDtypeStruct((Mp, D), x2.dtype),
        grid_spec=pltpu.PrefetchScalarGridSpec(
            num_scalar_prefetch=0,
            grid=grid,
            in_specs=[
                pl.BlockSpec((tm_eff, D), lambda i, f: (i, 0)),      # x (resident over f)
                pl.BlockSpec((1, D), lambda i, f: (0, 0)),           # LN gamma
                pl.BlockSpec((1, D), lambda i, f: (0, 0)),           # LN beta
                pl.BlockSpec((D, tf_eff), lambda i, f: (0, f)),      # W1 chunk
                pl.BlockSpec((1, tf_eff), lambda i, f: (0, f)),      # b1 chunk
                pl.BlockSpec((tf_eff, D), lambda i, f: (f, 0)),      # W2 chunk
                pl.BlockSpec((1, D), lambda i, f: (0, 0)),           # b2 (epilogue only)
            ],
            out_specs=pl.BlockSpec((tm_eff, D), lambda i, f: (i, 0)),
            scratch_shapes=[pltpu.VMEM((tm_eff, D), jnp.float32),    # LN(x)
                            pltpu.VMEM((tm_eff, D), jnp.float32)],   # f32 accumulator
        ),
        compiler_params=pltpu.CompilerParams(
            dimension_semantics=("parallel", "arbitrary"),
            vmem_limit_bytes=_VMEM_LIMIT),
    )(x2, ln_g.reshape(1, D), ln_b.reshape(1, D),
      w1, b1.reshape(1, d_ff), w2, b2.reshape(1, D))
    return out[:M]


# ----------------------------------------------------------------------------
# Full DecoderLayer forward (eval mode, layer_past=None)
# ----------------------------------------------------------------------------
def decoder_layer(x, memory, src_mask, tgt_mask, params, *, n_heads, eps=1e-6,
                  row_tile=None, ffn_chunk=None):
    B, St, D = x.shape
    Ss = memory.shape[1]
    H = n_heads
    Dk = D // H
    G = _head_group(H, Dk)
    HG = H // G

    # one mask copy per batch, shared across heads inside the attention kernel
    tgt_m = jnp.broadcast_to(tgt_mask.astype(x.dtype), (B, St, St))
    src_m = jnp.broadcast_to(src_mask.astype(x.dtype), (B, St, Ss))

    x2 = x.reshape(B * St, D)
    m2 = memory.reshape(B * Ss, D)

    # ---- sublayer 0: fused LN0 + QKV projection, self-attention, out-proj(+residual)
    pa = params["self_attn"]
    wqkv = jnp.concatenate([pa["wq"], pa["wk"], pa["wv"]], axis=1)
    bqkv = jnp.concatenate([pa["bq"], pa["bk"], pa["bv"]])
    qkv = ln_linear(x2, params["ln0_g"], params["ln0_b"], wqkv, bqkv,
                    eps=eps, tm=row_tile).reshape(B, St, 3 * D)
    ctx = attention_core(qkv, qkv, tgt_m, n_heads=H, d_head=Dk, group=G,
                         q_off=0, k_off=HG, v_off=2 * HG)
    x2 = linear(ctx.reshape(B * St, D), pa["wo"], pa["bo"], residual=x2, tm=row_tile)

    # ---- sublayer 1: fused LN1 + Q projection; K/V from raw memory (cross-attention)
    pa = params["src_attn"]
    wkv = jnp.concatenate([pa["wk"], pa["wv"]], axis=1)
    bkv = jnp.concatenate([pa["bk"], pa["bv"]])
    q = ln_linear(x2, params["ln1_g"], params["ln1_b"], pa["wq"], pa["bq"],
                  eps=eps, tm=row_tile).reshape(B, St, D)
    kv = linear(m2, wkv, bkv, tm=row_tile).reshape(B, Ss, 2 * D)
    ctx = attention_core(q, kv, src_m, n_heads=H, d_head=Dk, group=G,
                         q_off=0, k_off=0, v_off=HG)
    x2 = linear(ctx.reshape(B * St, D), pa["wo"], pa["bo"], residual=x2, tm=row_tile)

    # ---- sublayer 2: fused LN2 + FFN + residual
    out2 = ffn_sublayer(x2, params["ln2_g"], params["ln2_b"],
                        params["ffn"]["w1"], params["ffn"]["b1"],
                        params["ffn"]["w2"], params["ffn"]["b2"],
                        eps=eps, tm=row_tile, tf=ffn_chunk)
    return out2.reshape(B, St, D)


# ----------------------------------------------------------------------------
# Pure-JAX reference (torch semantics) for verification
# ----------------------------------------------------------------------------
def reference_decoder_layer(x, memory, src_mask, tgt_mask, params, n_heads, eps=1e-6):
    def ln(t, g, b):
        d = t.shape[-1]
        mean = jnp.mean(t, axis=-1, keepdims=True)
        std = jnp.sqrt(jnp.sum((t - mean) ** 2, axis=-1, keepdims=True) / (d - 1))
        return g * (t - mean) / (std + eps) + b

    def mha(q_in, k_in, v_in, mask, p):
        B, Sq, D = q_in.shape
        Sk = k_in.shape[1]
        H = n_heads
        Dk = D // H

        def proj(t, w, bias, S):
            return (t @ w + bias).reshape(B, S, H, Dk).transpose(0, 2, 1, 3)

        q = proj(q_in, p["wq"], p["bq"], Sq)
        k = proj(k_in, p["wk"], p["bk"], Sk)
        v = proj(v_in, p["wv"], p["bv"], Sk)
        s = jnp.einsum("bhqd,bhkd->bhqk", q, k) / math.sqrt(Dk)
        m = jnp.broadcast_to(mask, (B, Sq, Sk))[:, None, :, :]
        s = jnp.where(m != 0, s, -1e9)
        a = jax.nn.softmax(s, axis=-1)
        ctx = jnp.einsum("bhqk,bhkd->bhqd", a, v).transpose(0, 2, 1, 3).reshape(B, Sq, D)
        return ctx @ p["wo"] + p["bo"]

    def ffn(t, p):
        return jnp.maximum(t @ p["w1"] + p["b1"], 0.0) @ p["w2"] + p["b2"]

    xn = ln(x, params["ln0_g"], params["ln0_b"])
    x = x + mha(xn, xn, xn, tgt_mask, params["self_attn"])
    xn = ln(x, params["ln1_g"], params["ln1_b"])
    x = x + mha(xn, memory, memory, src_mask, params["src_attn"])
    xn = ln(x, params["ln2_g"], params["ln2_b"])
    return x + ffn(xn, params["ffn"])


# ----------------------------------------------------------------------------
# Parameter init + test
# ----------------------------------------------------------------------------
def init_params(key, d_model, d_ff):
    keys = jax.random.split(key, 32)
    it = iter(keys)

    def linear_init(fan_in, fan_out):
        bound = 1.0 / math.sqrt(fan_in)
        w = jax.random.uniform(next(it), (fan_in, fan_out), jnp.float32, -bound, bound)
        b = jax.random.uniform(next(it), (fan_out,), jnp.float32, -bound, bound)
        return w, b

    def attn_params():
        wq, bq = linear_init(d_model, d_model)
        wk, bk = linear_init(d_model, d_model)
        wv, bv = linear_init(d_model, d_model)
        wo, bo = linear_init(d_model, d_model)
        return dict(wq=wq, bq=bq, wk=wk, bk=bk, wv=wv, bv=bv, wo=wo, bo=bo)

    def ln_params():
        g = 1.0 + 0.05 * jax.random.normal(next(it), (d_model,), jnp.float32)
        b = 0.05 * jax.random.normal(next(it), (d_model,), jnp.float32)
        return g, b

    w1, b1 = linear_init(d_model, d_ff)
    w2, b2 = linear_init(d_ff, d_model)
    ln0_g, ln0_b = ln_params()
    ln1_g, ln1_b = ln_params()
    ln2_g, ln2_b = ln_params()
    return dict(self_attn=attn_params(), src_attn=attn_params(),
                ffn=dict(w1=w1, b1=b1, w2=w2, b2=b2),
                ln0_g=ln0_g, ln0_b=ln0_b, ln1_g=ln1_g, ln1_b=ln1_b,
                ln2_g=ln2_g, ln2_b=ln2_b)


if __name__ == "__main__":
    # Small shapes consistent with the module; d_model = 128 keeps every kernel's output
    # lane dimension dense and gives a head group of 4x32 = 128 lanes.
    B, S_tgt, S_src = 2, 8, 16
    d_model, d_ff, n_heads = 128, 256, 4

    key = jax.random.PRNGKey(0)
    k_x, k_m, k_p = jax.random.split(key, 3)
    x = jax.random.normal(k_x, (B, S_tgt, d_model), jnp.float32)
    memory = jax.random.normal(k_m, (B, S_src, d_model), jnp.float32)

    tgt_mask = jnp.tril(jnp.ones((S_tgt, S_tgt), jnp.float32))[None]   # causal (1,St,St)
    src_mask = jnp.ones((B, 1, S_src), jnp.float32).at[1, 0, S_src - 4:].set(0.0)

    params = init_params(k_p, d_model, d_ff)

    # ffn_chunk=128 forces 2 d_ff chunks on the toy shape so the accumulator /
    # pl.when epilogue path is exercised.
    fwd = jax.jit(functools.partial(decoder_layer, n_heads=n_heads, eps=1e-6,
                                    row_tile=None, ffn_chunk=128))
    y = jax.block_until_ready(fwd(x, memory, src_mask, tgt_mask, params))

    y_ref = reference_decoder_layer(x, memory, src_mask, tgt_mask, params, n_heads)
    assert y.shape == x.shape
    err = float(jnp.max(jnp.abs(y - y_ref)))
    assert jnp.allclose(y, y_ref, atol=2e-3, rtol=2e-3), f"mismatch vs reference: {err}"

    print("KERNEL_OK")
</pallas_src>

<mosaic_0001>
module attributes {stable_mosaic.version = 11 : i64} {
  func.func @ln_linear_kernel(%arg0: i32, %arg1: i32, %arg2: memref<16x128xf32, #tpu.memory_space<vmem>>, %arg3: memref<1x128xf32, #tpu.memory_space<vmem>>, %arg4: memref<1x128xf32, #tpu.memory_space<vmem>>, %arg5: memref<128x384xf32, #tpu.memory_space<vmem>>, %arg6: memref<1x384xf32, #tpu.memory_space<vmem>>, %arg7: memref<16x384xf32, #tpu.memory_space<vmem>>, %arg8: memref<16x128xf32, #tpu.memory_space<vmem>>) attributes {dimension_semantics = [#tpu.dimension_semantics<parallel>, #tpu.dimension_semantics<arbitrary>], iteration_bounds = array<i64: 1, 1>, scalar_prefetch = 0 : i64, scratch_operands = 1 : i64, tpu.core_type = #tpu.core_type<tc>, window_params = [{transform_indices = @transform_0, window_bounds = array<i64: 16, 128>}, {pipeline_mode = #tpu.pipeline_mode<synchronous>, transform_indices = @transform_1, window_bounds = array<i64: 1, 128>}, {pipeline_mode = #tpu.pipeline_mode<synchronous>, transform_indices = @transform_2, window_bounds = array<i64: 1, 128>}, {transform_indices = @transform_3, window_bounds = array<i64: 128, 384>}, {transform_indices = @transform_4, window_bounds = array<i64: 1, 384>}, {transform_indices = @transform_5, window_bounds = array<i64: 16, 384>}]} {
    %c0_i32 = arith.constant 0 : i32
    %0 = arith.cmpi eq, %arg1, %c0_i32 : i32
    %1 = arith.extui %0 : i1 to i32
    %c0_i32_0 = arith.constant 0 : i32
    %2 = arith.cmpi ne, %1, %c0_i32_0 : i32
    scf.if %2 {
      %c0_8 = arith.constant 0 : index
      %c0_9 = arith.constant 0 : index
      %10 = vector.load %arg2[%c0_8, %c0_9] : memref<16x128xf32, #tpu.memory_space<vmem>>, vector<16x128xf32>
      %cst_10 = arith.constant dense<0.000000e+00> : vector<16xf32>
      %11 = vector.multi_reduction <add>, %10, %cst_10 [1] : vector<16x128xf32> to vector<16xf32>
      %12 = vector.shape_cast %11 : vector<16xf32> to vector<16x1xf32>
      %cst_11 = arith.constant 1.280000e+02 : f32
      %13 = vector.broadcast %cst_11 : f32 to vector<16x1xf32>
      %14 = arith.divf %12, %13 : vector<16x1xf32>
      %15 = vector.broadcast %14 : vector<16x1xf32> to vector<16x128xf32>
      %16 = arith.subf %10, %15 : vector<16x128xf32>
      %17 = arith.mulf %16, %16 : vector<16x128xf32>
      %cst_12 = arith.constant dense<0.000000e+00> : vector<16xf32>
      %18 = vector.multi_reduction <add>, %17, %cst_12 [1] : vector<16x128xf32> to vector<16xf32>
      %19 = vector.shape_cast %18 : vector<16xf32> to vector<16x1xf32>
      %cst_13 = arith.constant 1.270000e+02 : f32
      %20 = vector.broadcast %cst_13 : f32 to vector<16x1xf32>
      %21 = arith.divf %19, %20 : vector<16x1xf32>
      %c0_14 = arith.constant 0 : index
      %c0_15 = arith.constant 0 : index
      %22 = vector.load %arg3[%c0_14, %c0_15] : memref<1x128xf32, #tpu.memory_space<vmem>>, vector<1x128xf32>
      %23 = vector.broadcast %14 : vector<16x1xf32> to vector<16x128xf32>
      %24 = arith.subf %10, %23 : vector<16x128xf32>
      %25 = vector.broadcast %22 : vector<1x128xf32> to vector<16x128xf32>
      %26 = arith.mulf %25, %24 : vector<16x128xf32>
      %27 = math.sqrt %21 : vector<16x1xf32>
      %cst_16 = arith.constant 9.99999997E-7 : f32
      %28 = vector.broadcast %cst_16 : f32 to vector<16x1xf32>
      %29 = arith.addf %27, %28 : vector<16x1xf32>
      %30 = vector.broadcast %29 : vector<16x1xf32> to vector<16x128xf32>
      %31 = arith.divf %26, %30 : vector<16x128xf32>
      %c0_17 = arith.constant 0 : index
      %c0_18 = arith.constant 0 : index
      %32 = vector.load %arg4[%c0_17, %c0_18] : memref<1x128xf32, #tpu.memory_space<vmem>>, vector<1x128xf32>
      %33 = vector.broadcast %32 : vector<1x128xf32> to vector<16x128xf32>
      %34 = arith.addf %31, %33 : vector<16x128xf32>
      %c0_19 = arith.constant 0 : index
      %c0_20 = arith.constant 0 : index
      %35 = vector.load %arg8[%c0_19, %c0_20] : memref<16x128xf32, #tpu.memory_space<vmem>>, vector<16x128xf32>
      tpu.vector_store %arg8[%c0_19, %c0_20], %34 {strides = array<i32>} : memref<16x128xf32, #tpu.memory_space<vmem>>, vector<16x128xf32>,
    } else {
    }
    %c0 = arith.constant 0 : index
    %c0_1 = arith.constant 0 : index
    %3 = vector.load %arg8[%c0, %c0_1] : memref<16x128xf32, #tpu.memory_space<vmem>>, vector<16x128xf32>
    %c0_2 = arith.constant 0 : index
    %c0_3 = arith.constant 0 : index
    %4 = vector.load %arg5[%c0_2, %c0_3] : memref<128x384xf32, #tpu.memory_space<vmem>>, vector<128x384xf32>
    %cst = arith.constant dense<0.000000e+00> : vector<16x384xf32>
    %5 = tpu.matmul %3, %4, %cst {dimension_numbers = #tpu.dot_dimension_numbers<[1], [0], [0], [1], [0, 0, 1, 1], [], []>} : vector<16x128xf32>, vector<128x384xf32>, vector<16x384xf32> -> vector<16x384xf32>
    %c0_4 = arith.constant 0 : index
    %c0_5 = arith.constant 0 : index
    %6 = vector.load %arg6[%c0_4, %c0_5] : memref<1x384xf32, #tpu.memory_space<vmem>>, vector<1x384xf32>
    %7 = vector.broadcast %6 : vector<1x384xf32> to vector<16x384xf32>
    %8 = arith.addf %5, %7 : vector<16x384xf32>
    %c0_6 = arith.constant 0 : index
    %c0_7 = arith.constant 0 : index
    %9 = vector.load %arg7[%c0_6, %c0_7] : memref<16x384xf32, #tpu.memory_space<vmem>>, vector<16x384xf32>
    tpu.vector_store %arg7[%c0_6, %c0_7], %8 {strides = array<i32>} : memref<16x384xf32, #tpu.memory_space<vmem>>, vector<16x384xf32>,
    return
  }
  func.func @transform_0(%arg0: i32, %arg1: i32) -> (i32, i32) {
    %c0_i32 = arith.constant 0 : i32
    %c0_i32_0 = arith.constant 0 : i32
    return %arg0, %c0_i32 : i32, i32
  }
  func.func @transform_1(%arg0: i32, %arg1: i32) -> (i32, i32) {
    %c0_i32 = arith.constant 0 : i32
    %c0_i32_0 = arith.constant 0 : i32
    %c0_i32_1 = arith.constant 0 : i32
    return %c0_i32, %c0_i32_0 : i32, i32
  }
  func.func @transform_2(%arg0: i32, %arg1: i32) -> (i32, i32) {
    %c0_i32 = arith.constant 0 : i32
    %c0_i32_0 = arith.constant 0 : i32
    %c0_i32_1 = arith.constant 0 : i32
    return %c0_i32, %c0_i32_0 : i32, i32
  }
  func.func @transform_3(%arg0: i32, %arg1: i32) -> (i32, i32) {
    %c0_i32 = arith.constant 0 : i32
    %c0_i32_0 = arith.constant 0 : i32
    return %c0_i32, %arg1 : i32, i32
  }
  func.func @transform_4(%arg0: i32, %arg1: i32) -> (i32, i32) {
    %c0_i32 = arith.constant 0 : i32
    %c0_i32_0 = arith.constant 0 : i32
    return %c0_i32, %arg1 : i32, i32
  }
  func.func @transform_5(%arg0: i32, %arg1: i32) -> (i32, i32) {
    %c0_i32 = arith.constant 0 : i32
    return %arg0, %arg1 : i32, i32
  }
}

module attributes {stable_mosaic.version = 11 : i64} {
  func.func @attention_group_kernel(%arg0: i32, %arg1: i32, %arg2: memref<1x8x128xf32, #tpu.memory_space<vmem>>, %arg3: memref<1x8x128xf32, #tpu.memory_space<vmem>>, %arg4: memref<1x8x128xf32, #tpu.memory_space<vmem>>, %arg5: memref<1x8x8xf32, #tpu.memory_space<vmem>>, %arg6: memref<1x8x128xf32, #tpu.memory_space<vmem>>) attributes {dimension_semantics = [#tpu.dimension_semantics<parallel>, #tpu.dimension_semantics<parallel>], iteration_bounds = array<i64: 2, 1>, scalar_prefetch = 0 : i64, scratch_operands = 0 : i64, tpu.core_type = #tpu.core_type<tc>, window_params = [{transform_indices = @transform_0, window_bounds = array<i64: 1, 8, 128>}, {transform_indices = @transform_1, window_bounds = array<i64: 1, 8, 128>}, {transform_indices = @transform_2, window_bounds = array<i64: 1, 8, 128>}, {transform_indices = @transform_3, window_bounds = array<i64: 1, 8, 8>}, {transform_indices = @transform_4, window_bounds = array<i64: 1, 8, 128>}]} {
    %c0 = arith.constant 0 : index
    %c0_0 = arith.constant 0 : index
    %c0_1 = arith.constant 0 : index
    %0 = vector.load %arg2[%c0, %c0_0, %c0_1] : memref<1x8x128xf32, #tpu.memory_space<vmem>>, vector<1x8x128xf32>
    %1 = vector.shape_cast %0 : vector<1x8x128xf32> to vector<8x128xf32>
    %c0_2 = arith.constant 0 : index
    %c0_3 = arith.constant 0 : index
    %c0_4 = arith.constant 0 : index
    %2 = vector.load %arg3[%c0_2, %c0_3, %c0_4] : memref<1x8x128xf32, #tpu.memory_space<vmem>>, vector<1x8x128xf32>
    %3 = vector.shape_cast %2 : vector<1x8x128xf32> to vector<8x128xf32>
    %c0_5 = arith.constant 0 : index
    %c0_6 = arith.constant 0 : index
    %c0_7 = arith.constant 0 : index
    %4 = vector.load %arg4[%c0_5, %c0_6, %c0_7] : memref<1x8x128xf32, #tpu.memory_space<vmem>>, vector<1x8x128xf32>
    %5 = vector.shape_cast %4 : vector<1x8x128xf32> to vector<8x128xf32>
    %c0_8 = arith.constant 0 : index
    %c0_9 = arith.constant 0 : index
    %c0_10 = arith.constant 0 : index
    %6 = vector.load %arg5[%c0_8, %c0_9, %c0_10] : memref<1x8x8xf32, #tpu.memory_space<vmem>>, vector<1x8x8xf32>
    %7 = vector.shape_cast %6 : vector<1x8x8xf32> to vector<8x8xf32>
    %8 = vector.extract_strided_slice %1 {offsets = [0, 0], sizes = [8, 32], strides = [1, 1]} : vector<8x128xf32> to vector<8x32xf32>
    %cst = arith.constant 0.176776692 : f32
    %9 = vector.broadcast %cst : f32 to vector<8x32xf32>
    %10 = arith.mulf %8, %9 : vector<8x32xf32>
    %11 = vector.extract_strided_slice %3 {offsets = [0, 0], sizes = [8, 32], strides = [1, 1]} : vector<8x128xf32> to vector<8x32xf32>
    %cst_11 = arith.constant dense<0.000000e+00> : vector<8x8xf32>
    %12 = tpu.matmul %10, %11, %cst_11 {dimension_numbers = #tpu.dot_dimension_numbers<[1], [1], [0], [0], [0, 0, 1, 0], [], []>} : vector<8x32xf32>, vector<8x32xf32>, vector<8x8xf32> -> vector<8x8xf32>
    %cst_12 = arith.constant 0.000000e+00 : f32
    %13 = vector.broadcast %cst_12 : f32 to vector<8x8xf32>
    %14 = arith.cmpf one, %7, %13 : vector<8x8xf32>
    %cst_13 = arith.constant -1.000000e+09 : f32
    %15 = vector.broadcast %cst_13 : f32 to vector<8x8xf32>
    %16 = arith.select %14, %12, %15 : vector<8x8xi1>, vector<8x8xf32>
    %cst_14 = arith.constant dense<0xFF800000> : vector<8xf32>
    %17 = vector.multi_reduction <maximumf>, %16, %cst_14 [1] : vector<8x8xf32> to vector<8xf32>
    %18 = vector.shape_cast %17 : vector<8xf32> to vector<8x1xf32>
    %19 = vector.broadcast %18 : vector<8x1xf32> to vector<8x8xf32>
    %20 = arith.subf %16, %19 : vector<8x8xf32>
    %21 = math.exp %20 : vector<8x8xf32>
    %cst_15 = arith.constant dense<0.000000e+00> : vector<8xf32>
    %22 = vector.multi_reduction <add>, %21, %cst_15 [1] : vector<8x8xf32> to vector<8xf32>
    %23 = vector.shape_cast %22 : vector<8xf32> to vector<8x1xf32>
    %24 = vector.extract_strided_slice %5 {offsets = [0, 0], sizes = [8, 32], strides = [1, 1]} : vector<8x128xf32> to vector<8x32xf32>
    %cst_16 = arith.constant dense<0.000000e+00> : vector<8x32xf32>
    %25 = tpu.matmul %21, %24, %cst_16 {dimension_numbers = #tpu.dot_dimension_numbers<[1], [0], [0], [1], [0, 0, 1, 1], [], []>} : vector<8x8xf32>, vector<8x32xf32>, vector<8x32xf32> -> vector<8x32xf32>
    %26 = tpu.reciprocal %23 : vector<8x1xf32> -> vector<8x1xf32>
    %27 = vector.broadcast %26 : vector<8x1xf32> to vector<8x32xf32>
    %28 = arith.mulf %25, %27 : vector<8x32xf32>
    %29 = vector.extract_strided_slice %1 {offsets = [0, 32], sizes = [8, 32], strides = [1, 1]} : vector<8x128xf32> to vector<8x32xf32>
    %cst_17 = arith.constant 0.176776692 : f32
    %30 = vector.broadcast %cst_17 : f32 to vector<8x32xf32>
    %31 = arith.mulf %29, %30 : vector<8x32xf32>
    %32 = vector.extract_strided_slice %3 {offsets = [0, 32], sizes = [8, 32], strides = [1, 1]} : vector<8x128xf32> to vector<8x32xf32>
    %cst_18 = arith.constant dense<0.000000e+00> : vector<8x8xf32>
    %33 = tpu.matmul %31, %32, %cst_18 {dimension_numbers = #tpu.dot_dimension_numbers<[1], [1], [0], [0], [0, 0, 1, 0], [], []>} : vector<8x32xf32>, vector<8x32xf32>, vector<8x8xf32> -> vector<8x8xf32>
    %cst_19 = arith.constant 0.000000e+00 : f32
    %34 = vector.broadcast %cst_19 : f32 to vector<8x8xf32>
    %35 = arith.cmpf one, %7, %34 : vector<8x8xf32>
    %cst_20 = arith.constant -1.000000e+09 : f32
    %36 = vector.broadcast %cst_20 : f32 to vector<8x8xf32>
    %37 = arith.select %35, %33, %36 : vector<8x8xi1>, vector<8x8xf32>
    %cst_21 = arith.constant dense<0xFF800000> : vector<8xf32>
    %38 = vector.multi_reduction <maximumf>, %37, %cst_21 [1] : vector<8x8xf32> to vector<8xf32>
    %39 = vector.shape_cast %38 : vector<8xf32> to vector<8x1xf32>
    %40 = vector.broadcast %39 : vector<8x1xf32> to vector<8x8xf32>
    %41 = arith.subf %37, %40 : vector<8x8xf32>
    %42 = math.exp %41 : vector<8x8xf32>
    %cst_22 = arith.constant dense<0.000000e+00> : vector<8xf32>
    %43 = vector.multi_reduction <add>, %42, %cst_22 [1] : vector<8x8xf32> to vector<8xf32>
    %44 = vector.shape_cast %43 : vector<8xf32> to vector<8x1xf32>
    %45 = vector.extract_strided_slice %5 {offsets = [0, 32], sizes = [8, 32], strides = [1, 1]} : vector<8x128xf32> to vector<8x32xf32>
    %cst_23 = arith.constant dense<0.000000e+00> : vector<8x32xf32>
    %46 = tpu.matmul %42, %45, %cst_23 {dimension_numbers = #tpu.dot_dimension_numbers<[1], [0], [0], [1], [0, 0, 1, 1], [], []>} : vector<8x8xf32>, vector<8x32xf32>, vector<8x32xf32> -> vector<8x32xf32>
    %47 = tpu.reciprocal %44 : vector<8x1xf32> -> vector<8x1xf32>
    %48 = vector.broadcast %47 : vector<8x1xf32> to vector<8x32xf32>
    %49 = arith.mulf %46, %48 : vector<8x32xf32>
    %50 = vector.extract_strided_slice %1 {offsets = [0, 64], sizes = [8, 32], strides = [1, 1]} : vector<8x128xf32> to vector<8x32xf32>
    %cst_24 = arith.constant 0.176776692 : f32
    %51 = vector.broadcast %cst_24 : f32 to vector<8x32xf32>
    %52 = arith.mulf %50, %51 : vector<8x32xf32>
    %53 = vector.extract_strided_slice %3 {offsets = [0, 64], sizes = [8, 32], strides = [1, 1]} : vector<8x128xf32> to vector<8x32xf32>
    %cst_25 = arith.constant dense<0.000000e+00> : vector<8x8xf32>
    %54 = tpu.matmul %52, %53, %cst_25 {dimension_numbers = #tpu.dot_dimension_numbers<[1], [1], [0], [0], [0, 0, 1, 0], [], []>} : vector<8x32xf32>, vector<8x32xf32>, vector<8x8xf32> -> vector<8x8xf32>
    %cst_26 = arith.constant 0.000000e+00 : f32
    %55 = vector.broadcast %cst_26 : f32 to vector<8x8xf32>
    %56 = arith.cmpf one, %7, %55 : vector<8x8xf32>
    %cst_27 = arith.constant -1.000000e+09 : f32
    %57 = vector.broadcast %cst_27 : f32 to vector<8x8xf32>
    %58 = arith.select %56, %54, %57 : vector<8x8xi1>, vector<8x8xf32>
    %cst_28 = arith.constant dense<0xFF800000> : vector<8xf32>
    %59 = vector.multi_reduction <maximumf>, %58, %cst_28 [1] : vector<8x8xf32> to vector<8xf32>
    %60 = vector.shape_cast %59 : vector<8xf32> to vector<8x1xf32>
    %61 = vector.broadcast %60 : vector<8x1xf32> to vector<8x8xf32>
    %62 = arith.subf %58, %61 : vector<8x8xf32>
    %63 = math.exp %62 : vector<8x8xf32>
    %cst_29 = arith.constant dense<0.000000e+00> : vector<8xf32>
    %64 = vector.multi_reduction <add>, %63, %cst_29 [1] : vector<8x8xf32> to vector<8xf32>
    %65 = vector.shape_cast %64 : vector<8xf32> to vector<8x1xf32>
    %66 = vector.extract_strided_slice %5 {offsets = [0, 64], sizes = [8, 32], strides = [1, 1]} : vector<8x128xf32> to vector<8x32xf32>
    %cst_30 = arith.constant dense<0.000000e+00> : vector<8x32xf32>
    %67 = tpu.matmul %63, %66, %cst_30 {dimension_numbers = #tpu.dot_dimension_numbers<[1], [0], [0], [1], [0, 0, 1, 1], [], []>} : vector<8x8xf32>, vector<8x32xf32>, vector<8x32xf32> -> vector<8x32xf32>
    %68 = tpu.reciprocal %65 : vector<8x1xf32> -> vector<8x1xf32>
    %69 = vector.broadcast %68 : vector<8x1xf32> to vector<8x32xf32>
    %70 = arith.mulf %67, %69 : vector<8x32xf32>
    %71 = vector.extract_strided_slice %1 {offsets = [0, 96], sizes = [8, 32], strides = [1, 1]} : vector<8x128xf32> to vector<8x32xf32>
    %cst_31 = arith.constant 0.176776692 : f32
    %72 = vector.broadcast %cst_31 : f32 to vector<8x32xf32>
    %73 = arith.mulf %71, %72 : vector<8x32xf32>
    %74 = vector.extract_strided_slice %3 {offsets = [0, 96], sizes = [8, 32], strides = [1, 1]} : vector<8x128xf32> to vector<8x32xf32>
    %cst_32 = arith.constant dense<0.000000e+00> : vector<8x8xf32>
    %75 = tpu.matmul %73, %74, %cst_32 {dimension_numbers = #tpu.dot_dimension_numbers<[1], [1], [0], [0], [0, 0, 1, 0], [], []>} : vector<8x32xf32>, vector<8x32xf32>, vector<8x8xf32> -> vector<8x8xf32>
    %cst_33 = arith.constant 0.000000e+00 : f32
    %76 = vector.broadcast %cst_33 : f32 to vector<8x8xf32>
    %77 = arith.cmpf one, %7, %76 : vector<8x8xf32>
    %cst_34 = arith.constant -1.000000e+09 : f32
    %78 = vector.broadcast %cst_34 : f32 to vector<8x8xf32>
    %79 = arith.select %77, %75, %78 : vector<8x8xi1>, vector<8x8xf32>
    %cst_35 = arith.constant dense<0xFF800000> : vector<8xf32>
    %80 = vector.multi_reduction <maximumf>, %79, %cst_35 [1] : vector<8x8xf32> to vector<8xf32>
    %81 = vector.shape_cast %80 : vector<8xf32> to vector<8x1xf32>
    %82 = vector.broadcast %81 : vector<8x1xf32> to vector<8x8xf32>
    %83 = arith.subf %79, %82 : vector<8x8xf32>
    %84 = math.exp %83 : vector<8x8xf32>
    %cst_36 = arith.constant dense<0.000000e+00> : vector<8xf32>
    %85 = vector.multi_reduction <add>, %84, %cst_36 [1] : vector<8x8xf32> to vector<8xf32>
    %86 = vector.shape_cast %85 : vector<8xf32> to vector<8x1xf32>
    %87 = vector.extract_strided_slice %5 {offsets = [0, 96], sizes = [8, 32], strides = [1, 1]} : vector<8x128xf32> to vector<8x32xf32>
    %cst_37 = arith.constant dense<0.000000e+00> : vector<8x32xf32>
    %88 = tpu.matmul %84, %87, %cst_37 {dimension_numbers = #tpu.dot_dimension_numbers<[1], [0], [0], [1], [0, 0, 1, 1], [], []>} : vector<8x8xf32>, vector<8x32xf32>, vector<8x32xf32> -> vector<8x32xf32>
    %89 = tpu.reciprocal %86 : vector<8x1xf32> -> vector<8x1xf32>
    %90 = vector.broadcast %89 : vector<8x1xf32> to vector<8x32xf32>
    %91 = arith.mulf %88, %90 : vector<8x32xf32>
    %92 = tpu.concatenate %28, %49, %70, %91 in 1 : vector<8x32xf32>, vector<8x32xf32>, vector<8x32xf32>, vector<8x32xf32> -> vector<8x128xf32>
    %c0_38 = arith.constant 0 : index
    %c0_39 = arith.constant 0 : index
    %c0_40 = arith.constant 0 : index
    %93 = vector.load %arg6[%c0_38, %c0_39, %c0_40] : memref<1x8x128xf32, #tpu.memory_space<vmem>>, vector<1x8x128xf32>
    %94 = vector.shape_cast %93 : vector<1x8x128xf32> to vector<8x128xf32>
    %95 = vector.shape_cast %92 : vector<8x128xf32> to vector<1x8x128xf32>
    tpu.vector_store %arg6[%c0_38, %c0_39, %c0_40], %95 {strides = array<i32>} : memref<1x8x128xf32, #tpu.memory_space<vmem>>, vector<1x8x128xf32>,
    return
  }
  func.func @transform_0(%arg0: i32, %arg1: i32) -> (i32, i32, i32) {
    %c0_i32 = arith.constant 0 : i32
    %0 = arith.addi %c0_i32, %arg1 : i32
    %c0_i32_0 = arith.constant 0 : i32
    %c0_i32_1 = arith.constant 0 : i32
    return %arg0, %c0_i32_0, %0 : i32, i32, i32
  }
  func.func @transform_1(%arg0: i32, %arg1: i32) -> (i32, i32, i32) {
    %c1_i32 = arith.constant 1 : i32
    %0 = arith.addi %c1_i32, %arg1 : i32
    %c0_i32 = arith.constant 0 : i32
    %c0_i32_0 = arith.constant 0 : i32
    return %arg0, %c0_i32, %0 : i32, i32, i32
  }
  func.func @transform_2(%arg0: i32, %arg1: i32) -> (i32, i32, i32) {
    %c2_i32 = arith.constant 2 : i32
    %0 = arith.addi %c2_i32, %arg1 : i32
    %c0_i32 = arith.constant 0 : i32
    %c0_i32_0 = arith.constant 0 : i32
    return %arg0, %c0_i32, %0 : i32, i32, i32
  }
  func.func @transform_3(%arg0: i32, %arg1: i32) -> (i32, i32, i32) {
    %c0_i32 = arith.constant 0 : i32
    %c0_i32_0 = arith.constant 0 : i32
    %c0_i32_1 = arith.constant 0 : i32
    return %arg0, %c0_i32, %c0_i32_0 : i32, i32, i32
  }
  func.func @transform_4(%arg0: i32, %arg1: i32) -> (i32, i32, i32) {
    %c0_i32 = arith.constant 0 : i32
    %c0_i32_0 = arith.constant 0 : i32
    return %arg0, %c0_i32, %arg1 : i32, i32, i32
  }
}

module attributes {stable_mosaic.version = 11 : i64} {
  func.func @linear_residual_kernel(%arg0: i32, %arg1: i32, %arg2: i32, %arg3: memref<16x128xf32, #tpu.memory_space<vmem>>, %arg4: memref<128x128xf32, #tpu.memory_space<vmem>>, %arg5: memref<1x128xf32, #tpu.memory_space<vmem>>, %arg6: memref<16x128xf32, #tpu.memory_space<vmem>>, %arg7: memref<16x128xf32, #tpu.memory_space<vmem>>, %arg8: memref<16x128xf32, #tpu.memory_space<vmem>>) attributes {dimension_semantics = [#tpu.dimension_semantics<parallel>, #tpu.dimension_semantics<parallel>, #tpu.dimension_semantics<arbitrary>], iteration_bounds = array<i64: 1, 1, 1>, scalar_prefetch = 0 : i64, scratch_operands = 1 : i64, tpu.core_type = #tpu.core_type<tc>, window_params = [{transform_indices = @transform_0, window_bounds = array<i64: 16, 128>}, {transform_indices = @transform_1, window_bounds = array<i64: 128, 128>}, {transform_indices = @transform_2, window_bounds = array<i64: 1, 128>}, {transform_indices = @transform_3, window_bounds = array<i64: 16, 128>}, {transform_indices = @transform_4, window_bounds = array<i64: 16, 128>}]} {
    %c0_i32 = arith.constant 0 : i32
    %0 = arith.cmpi eq, %arg2, %c0_i32 : i32
    %1 = arith.extui %0 : i1 to i32
    %c0_i32_0 = arith.constant 0 : i32
    %2 = arith.cmpi ne, %1, %c0_i32_0 : i32
    scf.if %2 {
      %cst_10 = arith.constant 0.000000e+00 : f32
      %12 = vector.broadcast %cst_10 : f32 to vector<16x128xf32>
      %c0_11 = arith.constant 0 : index
      %c0_12 = arith.constant 0 : index
      %13 = vector.load %arg8[%c0_11, %c0_12] : memref<16x128xf32, #tpu.memory_space<vmem>>, vector<16x128xf32>
      tpu.vector_store %arg8[%c0_11, %c0_12], %12 {strides = array<i32>} : memref<16x128xf32, #tpu.memory_space<vmem>>, vector<16x128xf32>,
    } else {
    }
    %c0 = arith.constant 0 : index
    %c0_1 = arith.constant 0 : index
    %3 = vector.load %arg8[%c0, %c0_1] : memref<16x128xf32, #tpu.memory_space<vmem>>, vector<16x128xf32>
    %c0_2 = arith.constant 0 : index
    %c0_3 = arith.constant 0 : index
    %4 = vector.load %arg3[%c0_2, %c0_3] : memref<16x128xf32, #tpu.memory_space<vmem>>, vector<16x128xf32>
    %c0_4 = arith.constant 0 : index
    %c0_5 = arith.constant 0 : index
    %5 = vector.load %arg4[%c0_4, %c0_5] : memref<128x128xf32, #tpu.memory_space<vmem>>, vector<128x128xf32>
    %cst = arith.constant dense<0.000000e+00> : vector<16x128xf32>
    %6 = tpu.matmul %4, %5, %cst {dimension_numbers = #tpu.dot_dimension_numbers<[1], [0], [0], [1], [0, 0, 1, 1], [], []>} : vector<16x128xf32>, vector<128x128xf32>, vector<16x128xf32> -> vector<16x128xf32>
    %7 = arith.addf %3, %6 : vector<16x128xf32>
    %c0_6 = arith.constant 0 : index
    %c0_7 = arith.constant 0 : index
    %8 = vector.load %arg8[%c0_6, %c0_7] : memref<16x128xf32, #tpu.memory_space<vmem>>, vector<16x128xf32>
    tpu.vector_store %arg8[%c0_6, %c0_7], %7 {strides = array<i32>} : memref<16x128xf32, #tpu.memory_space<vmem>>, vector<16x128xf32>,
    %c0_i32_8 = arith.constant 0 : i32
    %9 = arith.cmpi eq, %arg2, %c0_i32_8 : i32
    %10 = arith.extui %9 : i1 to i32
    %c0_i32_9 = arith.constant 0 : i32
    %11 = arith.cmpi ne, %10, %c0_i32_9 : i32
    scf.if %11 {
      %c0_10 = arith.constant 0 : index
      %c0_11 = arith.constant 0 : index
      %12 = vector.load %arg8[%c0_10, %c0_11] : memref<16x128xf32, #tpu.memory_space<vmem>>, vector<16x128xf32>
      %c0_12 = arith.constant 0 : index
      %c0_13 = arith.constant 0 : index
      %13 = vector.load %arg5[%c0_12, %c0_13] : memref<1x128xf32, #tpu.memory_space<vmem>>, vector<1x128xf32>
      %14 = vector.broadcast %13 : vector<1x128xf32> to vector<16x128xf32>
      %15 = arith.addf %12, %14 : vector<16x128xf32>
      %c0_14 = arith.constant 0 : index
      %c0_15 = arith.constant 0 : index
      %16 = vector.load %arg6[%c0_14, %c0_15] : memref<16x128xf32, #tpu.memory_space<vmem>>, vector<16x128xf32>
      %17 = arith.addf %15, %16 : vector<16x128xf32>
      %c0_16 = arith.constant 0 : index
      %c0_17 = arith.constant 0 : index
      %18 = vector.load %arg7[%c0_16, %c0_17] : memref<16x128xf32, #tpu.memory_space<vmem>>, vector<16x128xf32>
      tpu.vector_store %arg7[%c0_16, %c0_17], %17 {strides = array<i32>} : memref<16x128xf32, #tpu.memory_space<vmem>>, vector<16x128xf32>,
    } else {
    }
    return
  }
  func.func @transform_0(%arg0: i32, %arg1: i32, %arg2: i32) -> (i32, i32) {
    %c0_i32 = arith.constant 0 : i32
    return %arg0, %arg2 : i32, i32
  }
  func.func @transform_1(%arg0: i32, %arg1: i32, %arg2: i32) -> (i32, i32) {
    %c0_i32 = arith.constant 0 : i32
    return %arg2, %arg1 : i32, i32
  }
  func.func @transform_2(%arg0: i32, %arg1: i32, %arg2: i32) -> (i32, i32) {
    %c0_i32 = arith.constant 0 : i32
    %c0_i32_0 = arith.constant 0 : i32
    return %c0_i32, %arg1 : i32, i32
  }
  func.func @transform_3(%arg0: i32, %arg1: i32, %arg2: i32) -> (i32, i32) {
    %c0_i32 = arith.constant 0 : i32
    return %arg0, %arg1 : i32, i32
  }
  func.func @transform_4(%arg0: i32, %arg1: i32, %arg2: i32) -> (i32, i32) {
    %c0_i32 = arith.constant 0 : i32
    return %arg0, %arg1 : i32, i32
  }
}

module attributes {stable_mosaic.version = 11 : i64} {
  func.func @ln_linear_kernel(%arg0: i32, %arg1: i32, %arg2: memref<16x128xf32, #tpu.memory_space<vmem>>, %arg3: memref<1x128xf32, #tpu.memory_space<vmem>>, %arg4: memref<1x128xf32, #tpu.memory_space<vmem>>, %arg5: memref<128x128xf32, #tpu.memory_space<vmem>>, %arg6: memref<1x128xf32, #tpu.memory_space<vmem>>, %arg7: memref<16x128xf32, #tpu.memory_space<vmem>>, %arg8: memref<16x128xf32, #tpu.memory_space<vmem>>) attributes {dimension_semantics = [#tpu.dimension_semantics<parallel>, #tpu.dimension_semantics<arbitrary>], iteration_bounds = array<i64: 1, 1>, scalar_prefetch = 0 : i64, scratch_operands = 1 : i64, tpu.core_type = #tpu.core_type<tc>, window_params = [{transform_indices = @transform_0, window_bounds = array<i64: 16, 128>}, {pipeline_mode = #tpu.pipeline_mode<synchronous>, transform_indices = @transform_1, window_bounds = array<i64: 1, 128>}, {pipeline_mode = #tpu.pipeline_mode<synchronous>, transform_indices = @transform_2, window_bounds = array<i64: 1, 128>}, {transform_indices = @transform_3, window_bounds = array<i64: 128, 128>}, {transform_indices = @transform_4, window_bounds = array<i64: 1, 128>}, {transform_indices = @transform_5, window_bounds = array<i64: 16, 128>}]} {
    %c0_i32 = arith.constant 0 : i32
    %0 = arith.cmpi eq, %arg1, %c0_i32 : i32
    %1 = arith.extui %0 : i1 to i32
    %c0_i32_0 = arith.constant 0 : i32
    %2 = arith.cmpi ne, %1, %c0_i32_0 : i32
    scf.if %2 {
      %c0_8 = arith.constant 0 : index
      %c0_9 = arith.constant 0 : index
      %10 = vector.load %arg2[%c0_8, %c0_9] : memref<16x128xf32, #tpu.memory_space<vmem>>, vector<16x128xf32>
      %cst_10 = arith.constant dense<0.000000e+00> : vector<16xf32>
      %11 = vector.multi_reduction <add>, %10, %cst_10 [1] : vector<16x128xf32> to vector<16xf32>
      %12 = vector.shape_cast %11 : vector<16xf32> to vector<16x1xf32>
      %cst_11 = arith.constant 1.280000e+02 : f32
      %13 = vector.broadcast %cst_11 : f32 to vector<16x1xf32>
      %14 = arith.divf %12, %13 : vector<16x1xf32>
      %15 = vector.broadcast %14 : vector<16x1xf32> to vector<16x128xf32>
      %16 = arith.subf %10, %15 : vector<16x128xf32>
      %17 = arith.mulf %16, %16 : vector<16x128xf32>
      %cst_12 = arith.constant dense<0.000000e+00> : vector<16xf32>
      %18 = vector.multi_reduction <add>, %17, %cst_12 [1] : vector<16x128xf32> to vector<16xf32>
      %19 = vector.shape_cast %18 : vector<16xf32> to vector<16x1xf32>
      %cst_13 = arith.constant 1.270000e+02 : f32
      %20 = vector.broadcast %cst_13 : f32 to vector<16x1xf32>
      %21 = arith.divf %19, %20 : vector<16x1xf32>
      %c0_14 = arith.constant 0 : index
      %c0_15 = arith.constant 0 : index
      %22 = vector.load %arg3[%c0_14, %c0_15] : memref<1x128xf32, #tpu.memory_space<vmem>>, vector<1x128xf32>
      %23 = vector.broadcast %14 : vector<16x1xf32> to vector<16x128xf32>
      %24 = arith.subf %10, %23 : vector<16x128xf32>
      %25 = vector.broadcast %22 : vector<1x128xf32> to vector<16x128xf32>
      %26 = arith.mulf %25, %24 : vector<16x128xf32>
      %27 = math.sqrt %21 : vector<16x1xf32>
      %cst_16 = arith.constant 9.99999997E-7 : f32
      %28 = vector.broadcast %cst_16 : f32 to vector<16x1xf32>
      %29 = arith.addf %27, %28 : vector<16x1xf32>
      %30 = vector.broadcast %29 : vector<16x1xf32> to vector<16x128xf32>
      %31 = arith.divf %26, %30 : vector<16x128xf32>
      %c0_17 = arith.constant 0 : index
      %c0_18 = arith.constant 0 : index
      %32 = vector.load %arg4[%c0_17, %c0_18] : memref<1x128xf32, #tpu.memory_space<vmem>>, vector<1x128xf32>
      %33 = vector.broadcast %32 : vector<1x128xf32> to vector<16x128xf32>
      %34 = arith.addf %31, %33 : vector<16x128xf32>
      %c0_19 = arith.constant 0 : index
      %c0_20 = arith.constant 0 : index
      %35 = vector.load %arg8[%c0_19, %c0_20] : memref<16x128xf32, #tpu.memory_space<vmem>>, vector<16x128xf32>
      tpu.vector_store %arg8[%c0_19, %c0_20], %34 {strides = array<i32>} : memref<16x128xf32, #tpu.memory_space<vmem>>, vector<16x128xf32>,
    } else {
    }
    %c0 = arith.constant 0 : index
    %c0_1 = arith.constant 0 : index
    %3 = vector.load %arg8[%c0, %c0_1] : memref<16x128xf32, #tpu.memory_space<vmem>>, vector<16x128xf32>
    %c0_2 = arith.constant 0 : index
    %c0_3 = arith.constant 0 : index
    %4 = vector.load %arg5[%c0_2, %c0_3] : memref<128x128xf32, #tpu.memory_space<vmem>>, vector<128x128xf32>
    %cst = arith.constant dense<0.000000e+00> : vector<16x128xf32>
    %5 = tpu.matmul %3, %4, %cst {dimension_numbers = #tpu.dot_dimension_numbers<[1], [0], [0], [1], [0, 0, 1, 1], [], []>} : vector<16x128xf32>, vector<128x128xf32>, vector<16x128xf32> -> vector<16x128xf32>
    %c0_4 = arith.constant 0 : index
    %c0_5 = arith.constant 0 : index
    %6 = vector.load %arg6[%c0_4, %c0_5] : memref<1x128xf32, #tpu.memory_space<vmem>>, vector<1x128xf32>
    %7 = vector.broadcast %6 : vector<1x128xf32> to vector<16x128xf32>
    %8 = arith.addf %5, %7 : vector<16x128xf32>
    %c0_6 = arith.constant 0 : index
    %c0_7 = arith.constant 0 : index
    %9 = vector.load %arg7[%c0_6, %c0_7] : memref<16x128xf32, #tpu.memory_space<vmem>>, vector<16x128xf32>
    tpu.vector_store %arg7[%c0_6, %c0_7], %8 {strides = array<i32>} : memref<16x128xf32, #tpu.memory_space<vmem>>, vector<16x128xf32>,
    return
  }
  func.func @transform_0(%arg0: i32, %arg1: i32) -> (i32, i32) {
    %c0_i32 = arith.constant 0 : i32
    %c0_i32_0 = arith.constant 0 : i32
    return %arg0, %c0_i32 : i32, i32
  }
  func.func @transform_1(%arg0: i32, %arg1: i32) -> (i32, i32) {
    %c0_i32 = arith.constant 0 : i32
    %c0_i32_0 = arith.constant 0 : i32
    %c0_i32_1 = arith.constant 0 : i32
    return %c0_i32, %c0_i32_0 : i32, i32
  }
  func.func @transform_2(%arg0: i32, %arg1: i32) -> (i32, i32) {
    %c0_i32 = arith.constant 0 : i32
    %c0_i32_0 = arith.constant 0 : i32
    %c0_i32_1 = arith.constant 0 : i32
    return %c0_i32, %c0_i32_0 : i32, i32
  }
  func.func @transform_3(%arg0: i32, %arg1: i32) -> (i32, i32) {
    %c0_i32 = arith.constant 0 : i32
    %c0_i32_0 = arith.constant 0 : i32
    return %c0_i32, %arg1 : i32, i32
  }
  func.func @transform_4(%arg0: i32, %arg1: i32) -> (i32, i32) {
    %c0_i32 = arith.constant 0 : i32
    %c0_i32_0 = arith.constant 0 : i32
    return %c0_i32, %arg1 : i32, i32
  }
  func.func @transform_5(%arg0: i32, %arg1: i32) -> (i32, i32) {
    %c0_i32 = arith.constant 0 : i32
    return %arg0, %arg1 : i32, i32
  }
}

module attributes {stable_mosaic.version = 11 : i64} {
  func.func @linear_kernel(%arg0: i32, %arg1: i32, %arg2: i32, %arg3: memref<32x128xf32, #tpu.memory_space<vmem>>, %arg4: memref<128x256xf32, #tpu.memory_space<vmem>>, %arg5: memref<1x256xf32, #tpu.memory_space<vmem>>, %arg6: memref<32x256xf32, #tpu.memory_space<vmem>>, %arg7: memref<32x256xf32, #tpu.memory_space<vmem>>) attributes {dimension_semantics = [#tpu.dimension_semantics<parallel>, #tpu.dimension_semantics<parallel>, #tpu.dimension_semantics<arbitrary>], iteration_bounds = array<i64: 1, 1, 1>, scalar_prefetch = 0 : i64, scratch_operands = 1 : i64, tpu.core_type = #tpu.core_type<tc>, window_params = [{transform_indices = @transform_0, window_bounds = array<i64: 32, 128>}, {transform_indices = @transform_1, window_bounds = array<i64: 128, 256>}, {transform_indices = @transform_2, window_bounds = array<i64: 1, 256>}, {transform_indices = @transform_3, window_bounds = array<i64: 32, 256>}]} {
    %c0_i32 = arith.constant 0 : i32
    %0 = arith.cmpi eq, %arg2, %c0_i32 : i32
    %1 = arith.extui %0 : i1 to i32
    %c0_i32_0 = arith.constant 0 : i32
    %2 = arith.cmpi ne, %1, %c0_i32_0 : i32
    scf.if %2 {
      %cst_10 = arith.constant 0.000000e+00 : f32
      %12 = vector.broadcast %cst_10 : f32 to vector<32x256xf32>
      %c0_11 = arith.constant 0 : index
      %c0_12 = arith.constant 0 : index
      %13 = vector.load %arg7[%c0_11, %c0_12] : memref<32x256xf32, #tpu.memory_space<vmem>>, vector<32x256xf32>
      tpu.vector_store %arg7[%c0_11, %c0_12], %12 {strides = array<i32>} : memref<32x256xf32, #tpu.memory_space<vmem>>, vector<32x256xf32>,
    } else {
    }
    %c0 = arith.constant 0 : index
    %c0_1 = arith.constant 0 : index
    %3 = vector.load %arg7[%c0, %c0_1] : memref<32x256xf32, #tpu.memory_space<vmem>>, vector<32x256xf32>
    %c0_2 = arith.constant 0 : index
    %c0_3 = arith.constant 0 : index
    %4 = vector.load %arg3[%c0_2, %c0_3] : memref<32x128xf32, #tpu.memory_space<vmem>>, vector<32x128xf32>
    %c0_4 = arith.constant 0 : index
    %c0_5 = arith.constant 0 : index
    %5 = vector.load %arg4[%c0_4, %c0_5] : memref<128x256xf32, #tpu.memory_space<vmem>>, vector<128x256xf32>
    %cst = arith.constant dense<0.000000e+00> : vector<32x256xf32>
    %6 = tpu.matmul %4, %5, %cst {dimension_numbers = #tpu.dot_dimension_numbers<[1], [0], [0], [1], [0, 0, 1, 1], [], []>} : vector<32x128xf32>, vector<128x256xf32>, vector<32x256xf32> -> vector<32x256xf32>
    %7 = arith.addf %3, %6 : vector<32x256xf32>
    %c0_6 = arith.constant 0 : index
    %c0_7 = arith.constant 0 : index
    %8 = vector.load %arg7[%c0_6, %c0_7] : memref<32x256xf32, #tpu.memory_space<vmem>>, vector<32x256xf32>
    tpu.vector_store %arg7[%c0_6, %c0_7], %7 {strides = array<i32>} : memref<32x256xf32, #tpu.memory_space<vmem>>, vector<32x256xf32>,
    %c0_i32_8 = arith.constant 0 : i32
    %9 = arith.cmpi eq, %arg2, %c0_i32_8 : i32
    %10 = arith.extui %9 : i1 to i32
    %c0_i32_9 = arith.constant 0 : i32
    %11 = arith.cmpi ne, %10, %c0_i32_9 : i32
    scf.if %11 {
      %c0_10 = arith.constant 0 : index
      %c0_11 = arith.constant 0 : index
      %12 = vector.load %arg7[%c0_10, %c0_11] : memref<32x256xf32, #tpu.memory_space<vmem>>, vector<32x256xf32>
      %c0_12 = arith.constant 0 : index
      %c0_13 = arith.constant 0 : index
      %13 = vector.load %arg5[%c0_12, %c0_13] : memref<1x256xf32, #tpu.memory_space<vmem>>, vector<1x256xf32>
      %14 = vector.broadcast %13 : vector<1x256xf32> to vector<32x256xf32>
      %15 = arith.addf %12, %14 : vector<32x256xf32>
      %c0_14 = arith.constant 0 : index
      %c0_15 = arith.constant 0 : index
      %16 = vector.load %arg6[%c0_14, %c0_15] : memref<32x256xf32, #tpu.memory_space<vmem>>, vector<32x256xf32>
      tpu.vector_store %arg6[%c0_14, %c0_15], %15 {strides = array<i32>} : memref<32x256xf32, #tpu.memory_space<vmem>>, vector<32x256xf32>,
    } else {
    }
    return
  }
  func.func @transform_0(%arg0: i32, %arg1: i32, %arg2: i32) -> (i32, i32) {
    %c0_i32 = arith.constant 0 : i32
    return %arg0, %arg2 : i32, i32
  }
  func.func @transform_1(%arg0: i32, %arg1: i32, %arg2: i32) -> (i32, i32) {
    %c0_i32 = arith.constant 0 : i32
    return %arg2, %arg1 : i32, i32
  }
  func.func @transform_2(%arg0: i32, %arg1: i32, %arg2: i32) -> (i32, i32) {
    %c0_i32 = arith.constant 0 : i32
    %c0_i32_0 = arith.constant 0 : i32
    return %c0_i32, %arg1 : i32, i32
  }
  func.func @transform_3(%arg0: i32, %arg1: i32, %arg2: i32) -> (i32, i32) {
    %c0_i32 = arith.constant 0 : i32
    return %arg0, %arg1 : i32, i32
  }
}

module attributes {stable_mosaic.version = 11 : i64} {
  func.func @attention_group_kernel(%arg0: i32, %arg1: i32, %arg2: memref<1x8x128xf32, #tpu.memory_space<vmem>>, %arg3: memref<1x16x128xf32, #tpu.memory_space<vmem>>, %arg4: memref<1x16x128xf32, #tpu.memory_space<vmem>>, %arg5: memref<1x8x16xf32, #tpu.memory_space<vmem>>, %arg6: memref<1x8x128xf32, #tpu.memory_space<vmem>>) attributes {dimension_semantics = [#tpu.dimension_semantics<parallel>, #tpu.dimension_semantics<parallel>], iteration_bounds = array<i64: 2, 1>, scalar_prefetch = 0 : i64, scratch_operands = 0 : i64, tpu.core_type = #tpu.core_type<tc>, window_params = [{transform_indices = @transform_0, window_bounds = array<i64: 1, 8, 128>}, {transform_indices = @transform_1, window_bounds = array<i64: 1, 16, 128>}, {transform_indices = @transform_2, window_bounds = array<i64: 1, 16, 128>}, {transform_indices = @transform_3, window_bounds = array<i64: 1, 8, 16>}, {transform_indices = @transform_4, window_bounds = array<i64: 1, 8, 128>}]} {
    %c0 = arith.constant 0 : index
    %c0_0 = arith.constant 0 : index
    %c0_1 = arith.constant 0 : index
    %0 = vector.load %arg2[%c0, %c0_0, %c0_1] : memref<1x8x128xf32, #tpu.memory_space<vmem>>, vector<1x8x128xf32>
    %1 = vector.shape_cast %0 : vector<1x8x128xf32> to vector<8x128xf32>
    %c0_2 = arith.constant 0 : index
    %c0_3 = arith.constant 0 : index
    %c0_4 = arith.constant 0 : index
    %2 = vector.load %arg3[%c0_2, %c0_3, %c0_4] : memref<1x16x128xf32, #tpu.memory_space<vmem>>, vector<1x16x128xf32>
    %3 = vector.shape_cast %2 : vector<1x16x128xf32> to vector<16x128xf32>
    %c0_5 = arith.constant 0 : index
    %c0_6 = arith.constant 0 : index
    %c0_7 = arith.constant 0 : index
    %4 = vector.load %arg4[%c0_5, %c0_6, %c0_7] : memref<1x16x128xf32, #tpu.memory_space<vmem>>, vector<1x16x128xf32>
    %5 = vector.shape_cast %4 : vector<1x16x128xf32> to vector<16x128xf32>
    %c0_8 = arith.constant 0 : index
    %c0_9 = arith.constant 0 : index
    %c0_10 = arith.constant 0 : index
    %6 = vector.load %arg5[%c0_8, %c0_9, %c0_10] : memref<1x8x16xf32, #tpu.memory_space<vmem>>, vector<1x8x16xf32>
    %7 = vector.shape_cast %6 : vector<1x8x16xf32> to vector<8x16xf32>
    %8 = vector.extract_strided_slice %1 {offsets = [0, 0], sizes = [8, 32], strides = [1, 1]} : vector<8x128xf32> to vector<8x32xf32>
    %cst = arith.constant 0.176776692 : f32
    %9 = vector.broadcast %cst : f32 to vector<8x32xf32>
    %10 = arith.mulf %8, %9 : vector<8x32xf32>
    %11 = vector.extract_strided_slice %3 {offsets = [0, 0], sizes = [16, 32], strides = [1, 1]} : vector<16x128xf32> to vector<16x32xf32>
    %cst_11 = arith.constant dense<0.000000e+00> : vector<8x16xf32>
    %12 = tpu.matmul %10, %11, %cst_11 {dimension_numbers = #tpu.dot_dimension_numbers<[1], [1], [0], [0], [0, 0, 1, 0], [], []>} : vector<8x32xf32>, vector<16x32xf32>, vector<8x16xf32> -> vector<8x16xf32>
    %cst_12 = arith.constant 0.000000e+00 : f32
    %13 = vector.broadcast %cst_12 : f32 to vector<8x16xf32>
    %14 = arith.cmpf one, %7, %13 : vector<8x16xf32>
    %cst_13 = arith.constant -1.000000e+09 : f32
    %15 = vector.broadcast %cst_13 : f32 to vector<8x16xf32>
    %16 = arith.select %14, %12, %15 : vector<8x16xi1>, vector<8x16xf32>
    %cst_14 = arith.constant dense<0xFF800000> : vector<8xf32>
    %17 = vector.multi_reduction <maximumf>, %16, %cst_14 [1] : vector<8x16xf32> to vector<8xf32>
    %18 = vector.shape_cast %17 : vector<8xf32> to vector<8x1xf32>
    %19 = vector.broadcast %18 : vector<8x1xf32> to vector<8x16xf32>
    %20 = arith.subf %16, %19 : vector<8x16xf32>
    %21 = math.exp %20 : vector<8x16xf32>
    %cst_15 = arith.constant dense<0.000000e+00> : vector<8xf32>
    %22 = vector.multi_reduction <add>, %21, %cst_15 [1] : vector<8x16xf32> to vector<8xf32>
    %23 = vector.shape_cast %22 : vector<8xf32> to vector<8x1xf32>
    %24 = vector.extract_strided_slice %5 {offsets = [0, 0], sizes = [16, 32], strides = [1, 1]} : vector<16x128xf32> to vector<16x32xf32>
    %cst_16 = arith.constant dense<0.000000e+00> : vector<8x32xf32>
    %25 = tpu.matmul %21, %24, %cst_16 {dimension_numbers = #tpu.dot_dimension_numbers<[1], [0], [0], [1], [0, 0, 1, 1], [], []>} : vector<8x16xf32>, vector<16x32xf32>, vector<8x32xf32> -> vector<8x32xf32>
    %26 = tpu.reciprocal %23 : vector<8x1xf32> -> vector<8x1xf32>
    %27 = vector.broadcast %26 : vector<8x1xf32> to vector<8x32xf32>
    %28 = arith.mulf %25, %27 : vector<8x32xf32>
    %29 = vector.extract_strided_slice %1 {offsets = [0, 32], sizes = [8, 32], strides = [1, 1]} : vector<8x128xf32> to vector<8x32xf32>
    %cst_17 = arith.constant 0.176776692 : f32
    %30 = vector.broadcast %cst_17 : f32 to vector<8x32xf32>
    %31 = arith.mulf %29, %30 : vector<8x32xf32>
    %32 = vector.extract_strided_slice %3 {offsets = [0, 32], sizes = [16, 32], strides = [1, 1]} : vector<16x128xf32> to vector<16x32xf32>
    %cst_18 = arith.constant dense<0.000000e+00> : vector<8x16xf32>
    %33 = tpu.matmul %31, %32, %cst_18 {dimension_numbers = #tpu.dot_dimension_numbers<[1], [1], [0], [0], [0, 0, 1, 0], [], []>} : vector<8x32xf32>, vector<16x32xf32>, vector<8x16xf32> -> vector<8x16xf32>
    %cst_19 = arith.constant 0.000000e+00 : f32
    %34 = vector.broadcast %cst_19 : f32 to vector<8x16xf32>
    %35 = arith.cmpf one, %7, %34 : vector<8x16xf32>
    %cst_20 = arith.constant -1.000000e+09 : f32
    %36 = vector.broadcast %cst_20 : f32 to vector<8x16xf32>
    %37 = arith.select %35, %33, %36 : vector<8x16xi1>, vector<8x16xf32>
    %cst_21 = arith.constant dense<0xFF800000> : vector<8xf32>
    %38 = vector.multi_reduction <maximumf>, %37, %cst_21 [1] : vector<8x16xf32> to vector<8xf32>
    %39 = vector.shape_cast %38 : vector<8xf32> to vector<8x1xf32>
    %40 = vector.broadcast %39 : vector<8x1xf32> to vector<8x16xf32>
    %41 = arith.subf %37, %40 : vector<8x16xf32>
    %42 = math.exp %41 : vector<8x16xf32>
    %cst_22 = arith.constant dense<0.000000e+00> : vector<8xf32>
    %43 = vector.multi_reduction <add>, %42, %cst_22 [1] : vector<8x16xf32> to vector<8xf32>
    %44 = vector.shape_cast %43 : vector<8xf32> to vector<8x1xf32>
    %45 = vector.extract_strided_slice %5 {offsets = [0, 32], sizes = [16, 32], strides = [1, 1]} : vector<16x128xf32> to vector<16x32xf32>
    %cst_23 = arith.constant dense<0.000000e+00> : vector<8x32xf32>
    %46 = tpu.matmul %42, %45, %cst_23 {dimension_numbers = #tpu.dot_dimension_numbers<[1], [0], [0], [1], [0, 0, 1, 1], [], []>} : vector<8x16xf32>, vector<16x32xf32>, vector<8x32xf32> -> vector<8x32xf32>
    %47 = tpu.reciprocal %44 : vector<8x1xf32> -> vector<8x1xf32>
    %48 = vector.broadcast %47 : vector<8x1xf32> to vector<8x32xf32>
    %49 = arith.mulf %46, %48 : vector<8x32xf32>
    %50 = vector.extract_strided_slice %1 {offsets = [0, 64], sizes = [8, 32], strides = [1, 1]} : vector<8x128xf32> to vector<8x32xf32>
    %cst_24 = arith.constant 0.176776692 : f32
    %51 = vector.broadcast %cst_24 : f32 to vector<8x32xf32>
    %52 = arith.mulf %50, %51 : vector<8x32xf32>
    %53 = vector.extract_strided_slice %3 {offsets = [0, 64], sizes = [16, 32], strides = [1, 1]} : vector<16x128xf32> to vector<16x32xf32>
    %cst_25 = arith.constant dense<0.000000e+00> : vector<8x16xf32>
    %54 = tpu.matmul %52, %53, %cst_25 {dimension_numbers = #tpu.dot_dimension_numbers<[1], [1], [0], [0], [0, 0, 1, 0], [], []>} : vector<8x32xf32>, vector<16x32xf32>, vector<8x16xf32> -> vector<8x16xf32>
    %cst_26 = arith.constant 0.000000e+00 : f32
    %55 = vector.broadcast %cst_26 : f32 to vector<8x16xf32>
    %56 = arith.cmpf one, %7, %55 : vector<8x16xf32>
    %cst_27 = arith.constant -1.000000e+09 : f32
    %57 = vector.broadcast %cst_27 : f32 to vector<8x16xf32>
    %58 = arith.select %56, %54, %57 : vector<8x16xi1>, vector<8x16xf32>
    %cst_28 = arith.constant dense<0xFF800000> : vector<8xf32>
    %59 = vector.multi_reduction <maximumf>, %58, %cst_28 [1] : vector<8x16xf32> to vector<8xf32>
    %60 = vector.shape_cast %59 : vector<8xf32> to vector<8x1xf32>
    %61 = vector.broadcast %60 : vector<8x1xf32> to vector<8x16xf32>
    %62 = arith.subf %58, %61 : vector<8x16xf32>
    %63 = math.exp %62 : vector<8x16xf32>
    %cst_29 = arith.constant dense<0.000000e+00> : vector<8xf32>
    %64 = vector.multi_reduction <add>, %63, %cst_29 [1] : vector<8x16xf32> to vector<8xf32>
    %65 = vector.shape_cast %64 : vector<8xf32> to vector<8x1xf32>
    %66 = vector.extract_strided_slice %5 {offsets = [0, 64], sizes = [16, 32], strides = [1, 1]} : vector<16x128xf32> to vector<16x32xf32>
    %cst_30 = arith.constant dense<0.000000e+00> : vector<8x32xf32>
    %67 = tpu.matmul %63, %66, %cst_30 {dimension_numbers = #tpu.dot_dimension_numbers<[1], [0], [0], [1], [0, 0, 1, 1], [], []>} : vector<8x16xf32>, vector<16x32xf32>, vector<8x32xf32> -> vector<8x32xf32>
    %68 = tpu.reciprocal %65 : vector<8x1xf32> -> vector<8x1xf32>
    %69 = vector.broadcast %68 : vector<8x1xf32> to vector<8x32xf32>
    %70 = arith.mulf %67, %69 : vector<8x32xf32>
    %71 = vector.extract_strided_slice %1 {offsets = [0, 96], sizes = [8, 32], strides = [1, 1]} : vector<8x128xf32> to vector<8x32xf32>
    %cst_31 = arith.constant 0.176776692 : f32
    %72 = vector.broadcast %cst_31 : f32 to vector<8x32xf32>
    %73 = arith.mulf %71, %72 : vector<8x32xf32>
    %74 = vector.extract_strided_slice %3 {offsets = [0, 96], sizes = [16, 32], strides = [1, 1]} : vector<16x128xf32> to vector<16x32xf32>
    %cst_32 = arith.constant dense<0.000000e+00> : vector<8x16xf32>
    %75 = tpu.matmul %73, %74, %cst_32 {dimension_numbers = #tpu.dot_dimension_numbers<[1], [1], [0], [0], [0, 0, 1, 0], [], []>} : vector<8x32xf32>, vector<16x32xf32>, vector<8x16xf32> -> vector<8x16xf32>
    %cst_33 = arith.constant 0.000000e+00 : f32
    %76 = vector.broadcast %cst_33 : f32 to vector<8x16xf32>
    %77 = arith.cmpf one, %7, %76 : vector<8x16xf32>
    %cst_34 = arith.constant -1.000000e+09 : f32
    %78 = vector.broadcast %cst_34 : f32 to vector<8x16xf32>
    %79 = arith.select %77, %75, %78 : vector<8x16xi1>, vector<8x16xf32>
    %cst_35 = arith.constant dense<0xFF800000> : vector<8xf32>
    %80 = vector.multi_reduction <maximumf>, %79, %cst_35 [1] : vector<8x16xf32> to vector<8xf32>
    %81 = vector.shape_cast %80 : vector<8xf32> to vector<8x1xf32>
    %82 = vector.broadcast %81 : vector<8x1xf32> to vector<8x16xf32>
    %83 = arith.subf %79, %82 : vector<8x16xf32>
    %84 = math.exp %83 : vector<8x16xf32>
    %cst_36 = arith.constant dense<0.000000e+00> : vector<8xf32>
    %85 = vector.multi_reduction <add>, %84, %cst_36 [1] : vector<8x16xf32> to vector<8xf32>
    %86 = vector.shape_cast %85 : vector<8xf32> to vector<8x1xf32>
    %87 = vector.extract_strided_slice %5 {offsets = [0, 96], sizes = [16, 32], strides = [1, 1]} : vector<16x128xf32> to vector<16x32xf32>
    %cst_37 = arith.constant dense<0.000000e+00> : vector<8x32xf32>
    %88 = tpu.matmul %84, %87, %cst_37 {dimension_numbers = #tpu.dot_dimension_numbers<[1], [0], [0], [1], [0, 0, 1, 1], [], []>} : vector<8x16xf32>, vector<16x32xf32>, vector<8x32xf32> -> vector<8x32xf32>
    %89 = tpu.reciprocal %86 : vector<8x1xf32> -> vector<8x1xf32>
    %90 = vector.broadcast %89 : vector<8x1xf32> to vector<8x32xf32>
    %91 = arith.mulf %88, %90 : vector<8x32xf32>
    %92 = tpu.concatenate %28, %49, %70, %91 in 1 : vector<8x32xf32>, vector<8x32xf32>, vector<8x32xf32>, vector<8x32xf32> -> vector<8x128xf32>
    %c0_38 = arith.constant 0 : index
    %c0_39 = arith.constant 0 : index
    %c0_40 = arith.constant 0 : index
    %93 = vector.load %arg6[%c0_38, %c0_39, %c0_40] : memref<1x8x128xf32, #tpu.memory_space<vmem>>, vector<1x8x128xf32>
    %94 = vector.shape_cast %93 : vector<1x8x128xf32> to vector<8x128xf32>
    %95 = vector.shape_cast %92 : vector<8x128xf32> to vector<1x8x128xf32>
    tpu.vector_store %arg6[%c0_38, %c0_39, %c0_40], %95 {strides = array<i32>} : memref<1x8x128xf32, #tpu.memory_space<vmem>>, vector<1x8x128xf32>,
    return
  }
  func.func @transform_0(%arg0: i32, %arg1: i32) -> (i32, i32, i32) {
    %c0_i32 = arith.constant 0 : i32
    %0 = arith.addi %c0_i32, %arg1 : i32
    %c0_i32_0 = arith.constant 0 : i32
    %c0_i32_1 = arith.constant 0 : i32
    return %arg0, %c0_i32_0, %0 : i32, i32, i32
  }
  func.func @transform_1(%arg0: i32, %arg1: i32) -> (i32, i32, i32) {
    %c0_i32 = arith.constant 0 : i32
    %0 = arith.addi %c0_i32, %arg1 : i32
    %c0_i32_0 = arith.constant 0 : i32
    %c0_i32_1 = arith.constant 0 : i32
    return %arg0, %c0_i32_0, %0 : i32, i32, i32
  }
  func.func @transform_2(%arg0: i32, %arg1: i32) -> (i32, i32, i32) {
    %c1_i32 = arith.constant 1 : i32
    %0 = arith.addi %c1_i32, %arg1 : i32
    %c0_i32 = arith.constant 0 : i32
    %c0_i32_0 = arith.constant 0 : i32
    return %arg0, %c0_i32, %0 : i32, i32, i32
  }
  func.func @transform_3(%arg0: i32, %arg1: i32) -> (i32, i32, i32) {
    %c0_i32 = arith.constant 0 : i32
    %c0_i32_0 = arith.constant 0 : i32
    %c0_i32_1 = arith.constant 0 : i32
    return %arg0, %c0_i32, %c0_i32_0 : i32, i32, i32
  }
  func.func @transform_4(%arg0: i32, %arg1: i32) -> (i32, i32, i32) {
    %c0_i32 = arith.constant 0 : i32
    %c0_i32_0 = arith.constant 0 : i32
    return %arg0, %c0_i32, %arg1 : i32, i32, i32
  }
}

module attributes {stable_mosaic.version = 11 : i64} {
  func.func @ffn_sublayer_kernel(%arg0: i32, %arg1: i32, %arg2: memref<16x128xf32, #tpu.memory_space<vmem>>, %arg3: memref<1x128xf32, #tpu.memory_space<vmem>>, %arg4: memref<1x128xf32, #tpu.memory_space<vmem>>, %arg5: memref<128x128xf32, #tpu.memory_space<vmem>>, %arg6: memref<1x128xf32, #tpu.memory_space<vmem>>, %arg7: memref<128x128xf32, #tpu.memory_space<vmem>>, %arg8: memref<1x128xf32, #tpu.memory_space<vmem>>, %arg9: memref<16x128xf32, #tpu.memory_space<vmem>>, %arg10: memref<16x128xf32, #tpu.memory_space<vmem>>, %arg11: memref<16x128xf32, #tpu.memory_space<vmem>>) attributes {dimension_semantics = [#tpu.dimension_semantics<parallel>, #tpu.dimension_semantics<arbitrary>], iteration_bounds = array<i64: 1, 2>, scalar_prefetch = 0 : i64, scratch_operands = 2 : i64, tpu.core_type = #tpu.core_type<tc>, window_params = [{transform_indices = @transform_0, window_bounds = array<i64: 16, 128>}, {pipeline_mode = #tpu.pipeline_mode<synchronous>, transform_indices = @transform_1, window_bounds = array<i64: 1, 128>}, {pipeline_mode = #tpu.pipeline_mode<synchronous>, transform_indices = @transform_2, window_bounds = array<i64: 1, 128>}, {transform_indices = @transform_3, window_bounds = array<i64: 128, 128>}, {transform_indices = @transform_4, window_bounds = array<i64: 1, 128>}, {transform_indices = @transform_5, window_bounds = array<i64: 128, 128>}, {pipeline_mode = #tpu.pipeline_mode<synchronous>, transform_indices = @transform_6, window_bounds = array<i64: 1, 128>}, {transform_indices = @transform_7, window_bounds = array<i64: 16, 128>}]} {
    %c0_i32 = arith.constant 0 : i32
    %0 = arith.cmpi eq, %arg1, %c0_i32 : i32
    %1 = arith.extui %0 : i1 to i32
    %c0_i32_0 = arith.constant 0 : i32
    %2 = arith.cmpi ne, %1, %c0_i32_0 : i32
    scf.if %2 {
      %c0_15 = arith.constant 0 : index
      %c0_16 = arith.constant 0 : index
      %19 = vector.load %arg2[%c0_15, %c0_16] : memref<16x128xf32, #tpu.memory_space<vmem>>, vector<16x128xf32>
      %cst_17 = arith.constant dense<0.000000e+00> : vector<16xf32>
      %20 = vector.multi_reduction <add>, %19, %cst_17 [1] : vector<16x128xf32> to vector<16xf32>
      %21 = vector.shape_cast %20 : vector<16xf32> to vector<16x1xf32>
      %cst_18 = arith.constant 1.280000e+02 : f32
      %22 = vector.broadcast %cst_18 : f32 to vector<16x1xf32>
      %23 = arith.divf %21, %22 : vector<16x1xf32>
      %24 = vector.broadcast %23 : vector<16x1xf32> to vector<16x128xf32>
      %25 = arith.subf %19, %24 : vector<16x128xf32>
      %26 = arith.mulf %25, %25 : vector<16x128xf32>
      %cst_19 = arith.constant dense<0.000000e+00> : vector<16xf32>
      %27 = vector.multi_reduction <add>, %26, %cst_19 [1] : vector<16x128xf32> to vector<16xf32>
      %28 = vector.shape_cast %27 : vector<16xf32> to vector<16x1xf32>
      %cst_20 = arith.constant 1.270000e+02 : f32
      %29 = vector.broadcast %cst_20 : f32 to vector<16x1xf32>
      %30 = arith.divf %28, %29 : vector<16x1xf32>
      %c0_21 = arith.constant 0 : index
      %c0_22 = arith.constant 0 : index
      %31 = vector.load %arg3[%c0_21, %c0_22] : memref<1x128xf32, #tpu.memory_space<vmem>>, vector<1x128xf32>
      %32 = vector.broadcast %23 : vector<16x1xf32> to vector<16x128xf32>
      %33 = arith.subf %19, %32 : vector<16x128xf32>
      %34 = vector.broadcast %31 : vector<1x128xf32> to vector<16x128xf32>
      %35 = arith.mulf %34, %33 : vector<16x128xf32>
      %36 = math.sqrt %30 : vector<16x1xf32>
      %cst_23 = arith.constant 9.99999997E-7 : f32
      %37 = vector.broadcast %cst_23 : f32 to vector<16x1xf32>
      %38 = arith.addf %36, %37 : vector<16x1xf32>
      %39 = vector.broadcast %38 : vector<16x1xf32> to vector<16x128xf32>
      %40 = arith.divf %35, %39 : vector<16x128xf32>
      %c0_24 = arith.constant 0 : index
      %c0_25 = arith.constant 0 : index
      %41 = vector.load %arg4[%c0_24, %c0_25] : memref<1x128xf32, #tpu.memory_space<vmem>>, vector<1x128xf32>
      %42 = vector.broadcast %41 : vector<1x128xf32> to vector<16x128xf32>
      %43 = arith.addf %40, %42 : vector<16x128xf32>
      %c0_26 = arith.constant 0 : index
      %c0_27 = arith.constant 0 : index
      %44 = vector.load %arg10[%c0_26, %c0_27] : memref<16x128xf32, #tpu.memory_space<vmem>>, vector<16x128xf32>
      tpu.vector_store %arg10[%c0_26, %c0_27], %43 {strides = array<i32>} : memref<16x128xf32, #tpu.memory_space<vmem>>, vector<16x128xf32>,
      %cst_28 = arith.constant 0.000000e+00 : f32
      %45 = vector.broadcast %cst_28 : f32 to vector<16x128xf32>
      %c0_29 = arith.constant 0 : index
      %c0_30 = arith.constant 0 : index
      %46 = vector.load %arg11[%c0_29, %c0_30] : memref<16x128xf32, #tpu.memory_space<vmem>>, vector<16x128xf32>
      tpu.vector_store %arg11[%c0_29, %c0_30], %45 {strides = array<i32>} : memref<16x128xf32, #tpu.memory_space<vmem>>, vector<16x128xf32>,
    } else {
    }
    %c0 = arith.constant 0 : index
    %c0_1 = arith.constant 0 : index
    %3 = vector.load %arg10[%c0, %c0_1] : memref<16x128xf32, #tpu.memory_space<vmem>>, vector<16x128xf32>
    %c0_2 = arith.constant 0 : index
    %c0_3 = arith.constant 0 : index
    %4 = vector.load %arg5[%c0_2, %c0_3] : memref<128x128xf32, #tpu.memory_space<vmem>>, vector<128x128xf32>
    %cst = arith.constant dense<0.000000e+00> : vector<16x128xf32>
    %5 = tpu.matmul %3, %4, %cst {dimension_numbers = #tpu.dot_dimension_numbers<[1], [0], [0], [1], [0, 0, 1, 1], [], []>} : vector<16x128xf32>, vector<128x128xf32>, vector<16x128xf32> -> vector<16x128xf32>
    %c0_4 = arith.constant 0 : index
    %c0_5 = arith.constant 0 : index
    %6 = vector.load %arg6[%c0_4, %c0_5] : memref<1x128xf32, #tpu.memory_space<vmem>>, vector<1x128xf32>
    %7 = vector.broadcast %6 : vector<1x128xf32> to vector<16x128xf32>
    %8 = arith.addf %5, %7 : vector<16x128xf32>
    %cst_6 = arith.constant 0.000000e+00 : f32
    %9 = vector.broadcast %cst_6 : f32 to vector<16x128xf32>
    %10 = arith.maximumf %8, %9 : vector<16x128xf32>
    %c0_7 = arith.constant 0 : index
    %c0_8 = arith.constant 0 : index
    %11 = vector.load %arg11[%c0_7, %c0_8] : memref<16x128xf32, #tpu.memory_space<vmem>>, vector<16x128xf32>
    %c0_9 = arith.constant 0 : index
    %c0_10 = arith.constant 0 : index
    %12 = vector.load %arg7[%c0_9, %c0_10] : memref<128x128xf32, #tpu.memory_space<vmem>>, vector<128x128xf32>
    %cst_11 = arith.constant dense<0.000000e+00> : vector<16x128xf32>
    %13 = tpu.matmul %10, %12, %cst_11 {dimension_numbers = #tpu.dot_dimension_numbers<[1], [0], [0], [1], [0, 0, 1, 1], [], []>} : vector<16x128xf32>, vector<128x128xf32>, vector<16x128xf32> -> vector<16x128xf32>
    %14 = arith.addf %11, %13 : vector<16x128xf32>
    %c0_12 = arith.constant 0 : index
    %c0_13 = arith.constant 0 : index
    %15 = vector.load %arg11[%c0_12, %c0_13] : memref<16x128xf32, #tpu.memory_space<vmem>>, vector<16x128xf32>
    tpu.vector_store %arg11[%c0_12, %c0_13], %14 {strides = array<i32>} : memref<16x128xf32, #tpu.memory_space<vmem>>, vector<16x128xf32>,
    %c1_i32 = arith.constant 1 : i32
    %16 = arith.cmpi eq, %arg1, %c1_i32 : i32
    %17 = arith.extui %16 : i1 to i32
    %c0_i32_14 = arith.constant 0 : i32
    %18 = arith.cmpi ne, %17, %c0_i32_14 : i32
    scf.if %18 {
      %c0_15 = arith.constant 0 : index
      %c0_16 = arith.constant 0 : index
      %19 = vector.load %arg2[%c0_15, %c0_16] : memref<16x128xf32, #tpu.memory_space<vmem>>, vector<16x128xf32>
      %c0_17 = arith.constant 0 : index
      %c0_18 = arith.constant 0 : index
      %20 = vector.load %arg11[%c0_17, %c0_18] : memref<16x128xf32, #tpu.memory_space<vmem>>, vector<16x128xf32>
      %21 = arith.addf %19, %20 : vector<16x128xf32>
      %c0_19 = arith.constant 0 : index
      %c0_20 = arith.constant 0 : index
      %22 = vector.load %arg8[%c0_19, %c0_20] : memref<1x128xf32, #tpu.memory_space<vmem>>, vector<1x128xf32>
      %23 = vector.broadcast %22 : vector<1x128xf32> to vector<16x128xf32>
      %24 = arith.addf %21, %23 : vector<16x128xf32>
      %c0_21 = arith.constant 0 : index
      %c0_22 = arith.constant 0 : index
      %25 = vector.load %arg9[%c0_21, %c0_22] : memref<16x128xf32, #tpu.memory_space<vmem>>, vector<16x128xf32>
      tpu.vector_store %arg9[%c0_21, %c0_22], %24 {strides = array<i32>} : memref<16x128xf32, #tpu.memory_space<vmem>>, vector<16x128xf32>,
    } else {
    }
    return
  }
  func.func @transform_0(%arg0: i32, %arg1: i32) -> (i32, i32) {
    %c0_i32 = arith.constant 0 : i32
    %c0_i32_0 = arith.constant 0 : i32
    return %arg0, %c0_i32 : i32, i32
  }
  func.func @transform_1(%arg0: i32, %arg1: i32) -> (i32, i32) {
    %c0_i32 = arith.constant 0 : i32
    %c0_i32_0 = arith.constant 0 : i32
    %c0_i32_1 = arith.constant 0 : i32
    return %c0_i32, %c0_i32_0 : i32, i32
  }
  func.func @transform_2(%arg0: i32, %arg1: i32) -> (i32, i32) {
    %c0_i32 = arith.constant 0 : i32
    %c0_i32_0 = arith.constant 0 : i32
    %c0_i32_1 = arith.constant 0 : i32
    return %c0_i32, %c0_i32_0 : i32, i32
  }
  func.func @transform_3(%arg0: i32, %arg1: i32) -> (i32, i32) {
    %c0_i32 = arith.constant 0 : i32
    %c0_i32_0 = arith.constant 0 : i32
    return %c0_i32, %arg1 : i32, i32
  }
  func.func @transform_4(%arg0: i32, %arg1: i32) -> (i32, i32) {
    %c0_i32 = arith.constant 0 : i32
    %c0_i32_0 = arith.constant 0 : i32
    return %c0_i32, %arg1 : i32, i32
  }
  func.func @transform_5(%arg0: i32, %arg1: i32) -> (i32, i32) {
    %c0_i32 = arith.constant 0 : i32
    %c0_i32_0 = arith.constant 0 : i32
    return %arg1, %c0_i32 : i32, i32
  }
  func.func @transform_6(%arg0: i32, %arg1: i32) -> (i32, i32) {
    %c0_i32 = arith.constant 0 : i32
    %c0_i32_0 = arith.constant 0 : i32
    %c0_i32_1 = arith.constant 0 : i32
    return %c0_i32, %c0_i32_0 : i32, i32
  }
  func.func @transform_7(%arg0: i32, %arg1: i32) -> (i32, i32) {
    %c0_i32 = arith.constant 0 : i32
    %c0_i32_0 = arith.constant 0 : i32
    return %arg0, %c0_i32 : i32, i32
  }
}

</mosaic_0001>

<llo_original>
// kernel: decoder_layer.8
$region0: #{decoder_layer.8}
  #allocation0 [shape = 'u32[]', space=smem, size = 0x4, offset = 0x4, fixed_abs, tag = 'smem constant byte address 0x4 - core index']
  #allocation1 [shape = 'u32[72,128]{1,0:T(1,128)}', space=vmem, size = 0x9000, scoped, tag = 'internal scratch']
  #allocation2 [shape = 'f32[16,128]{1,0:T(8,128)}', space=vmem, size = 0x2000, scoped, tag = 'scratch operand']
  %s0 = inlined_call_operand.vmem [shape: f32[16,128], index: 0, kind: input, shape index: {}]
  %s1 = inlined_call_operand.vmem [shape: f32[1,128], index: 1, kind: input, shape index: {}]
  %s2 = inlined_call_operand.vmem [shape: f32[1,128], index: 2, kind: input, shape index: {}]
  %s3 = inlined_call_operand.vmem [shape: f32[128,384], index: 3, kind: input, shape index: {}]
  %s4 = inlined_call_operand.vmem [shape: f32[1,384], index: 4, kind: input, shape index: {}]
  %s5 = inlined_call_operand.vmem [shape: f32[16,384], index: 5, kind: output, shape index: {}]
  %s6 = sld [smem:[#allocation0]]
  $region34: #{decoder_layer.8} parent=0
    _
  %s8 = ssub.s32 1, %s6
  %s9 = scalar_select 0, %s8, %s6
  // Predicated region
  $region2: #{decoder_layer.8} parent=0 // pred_check
    _
  $region3: #{decoder_layer.8} parent=0 // pred_check_branch
    %11 = sbr.rel (0) target = $region5
  $region4: #{decoder_layer.8} parent=0 // pred_region
    _
  $region5: #{decoder_layer.8} parent=0 // pred_fallthru
    _
  // Predicated region
  $region6: #{decoder_layer.8} parent=0 // pred_check
    _
  $region7: #{decoder_layer.8} parent=0 // pred_check_branch
    %13 = sbr.rel (0) target = $region9
  $region8: #{decoder_layer.8} parent=0 // pred_region
    _
  $region9: #{decoder_layer.8} parent=0 // pred_fallthru
    _
  // Predicated region
  $region10: #{decoder_layer.8} parent=0 // pred_check
    _
  $region11: #{decoder_layer.8} parent=0 // pred_check_branch
    %15 = sbr.rel (0) target = $region13
  $region12: #{decoder_layer.8} parent=0 // pred_region
    _
  $region13: #{decoder_layer.8} parent=0 // pred_fallthru
    _
  // Predicated region
  $region14: #{decoder_layer.8} parent=0 // pred_check
    _
  $region15: #{decoder_layer.8} parent=0 // pred_check_branch
    %17 = sbr.rel (0) target = $region17
  $region16: #{decoder_layer.8} parent=0 // pred_region
    _
  $region17: #{decoder_layer.8} parent=0 // pred_fallthru
    _
  // Predicated region
  $region18: #{decoder_layer.8} parent=0 // pred_check
    _
  $region19: #{decoder_layer.8} parent=0 // pred_check_branch
    %19 = sbr.rel (0) target = $region21
  $region20: #{decoder_layer.8} parent=0 // pred_region
    _
  $region21: #{decoder_layer.8} parent=0 // pred_fallthru
    _
  %p20 = scmp.eq.s32.totalorder 0, 0
  // Predicated region
  $region22: #{decoder_layer.8} parent=0 // pred_check
    %p21 = pneg %p20
  $region23: #{decoder_layer.8} parent=0 // pred_check_branch
    %23 = sbr.rel (%p21) target = $region25
  $region24: #{decoder_layer.8} parent=0 // pred_region
    %v24 = vld [vmem:[%s0] sm:$0xff]
    %v25 = vld [vmem:[%s0 + $0x8] sm:$0xff]
    %26 = vadd.xlane.f32.xlu0 %v24
    %v27 = vpop.xlane.xlu0 %26
    %28 = vadd.xlane.f32.xlu0 %v25
    %v29 = vpop.xlane.xlu0 %28
    %v30 = vrcp.pop 128.0
    %v31 = vmul.f32 128.0, %v30
    %v32 = vsub.f32 1.0, %v31
    %v33 = vmul.f32 %v30, %v32
    %v34 = vadd.f32 %v30, %v33
    %vm35 = vweird.f32 %v30
    %v36 = vsel %vm35, %v30, %v34
    %v37 = vmul.f32 %v27, %v36
    %v38 = vmul.f32 %v29, %v36
    %v39 = vsub.f32 %v24, %v37
    %v40 = vsub.f32 %v25, %v38
    %v41 = vmul.f32 %v39, %v39
    %v42 = vmul.f32 %v40, %v40
    %43 = vadd.xlane.f32.xlu0 %v41
    %v44 = vpop.xlane.xlu0 %43
    %45 = vadd.xlane.f32.xlu0 %v42
    %v46 = vpop.xlane.xlu0 %45
    %v47 = vrcp.pop 127.0
    %v48 = vmul.f32 127.0, %v47
    %v49 = vsub.f32 1.0, %v48
    %v50 = vmul.f32 %v47, %v49
    %v51 = vadd.f32 %v47, %v50
    %vm52 = vweird.f32 %v47
    %v53 = vsel %vm52, %v47, %v51
    %v54 = vmul.f32 %v44, %v53
    %v55 = vmul.f32 %v46, %v53
    %v56 = vld [vmem:[%s1] sm:$0x1]
    %v58 = vperm.slane %v56, 0
    %v60 = vmul.f32 %v58, %v39
    %v61 = vmul.f32 %v58, %v40
    %v62 = vrsqrt.pop %v54
    %v63 = vmul.f32 %v62, %v54
    %v64 = vmul.f32 %v63, %v62
    %v65 = vmul.f32 0.5, %v64
    %v66 = vsub.f32 1.5, %v65
    %v67 = vmul.f32 %v62, %v66
    %v68 = vmul.f32 %v54, %v67
    %vm69 = vcmp.eq.f32.partialorder %v54, inf
    %v70 = vsel %vm69, %v54, %v68
    %vm71 = vcmp.eq.f32.partialorder %v54, 0.0
    %v72 = vand.u32 %v54, 2147483648
    %v73 = vsel %vm71, %v72, %v70
    %v74 = vrsqrt.pop %v55
    %v75 = vmul.f32 %v74, %v55
    %v76 = vmul.f32 %v75, %v74
    %v77 = vmul.f32 0.5, %v76
    %v78 = vsub.f32 1.5, %v77
    %v79 = vmul.f32 %v74, %v78
    %v80 = vmul.f32 %v55, %v79
    %vm81 = vcmp.eq.f32.partialorder %v55, inf
    %v82 = vsel %vm81, %v55, %v80
    %vm83 = vcmp.eq.f32.partialorder %v55, 0.0
    %v84 = vand.u32 %v55, 2147483648
    %v85 = vsel %vm83, %v84, %v82
    %v86 = vadd.f32 %v73, 1e-06
    %v87 = vadd.f32 %v85, 1e-06
    %v88 = vrcp.pop %v86
    %v89 = vmul.f32 %v86, %v88
    %v90 = vsub.f32 1.0, %v89
    %v91 = vmul.f32 %v88, %v90
    %v92 = vadd.f32 %v88, %v91
    %vm93 = vweird.f32 %v86
    %vm94 = vweird.f32 %v88
    %vm95 = vmor %vm93, %vm94
    %v96 = vsel %vm95, %v88, %v92
    %v97 = vand.u32 2147483647, %v86
    %vm98 = vcmp.eq.f32.partialorder %v97, 8.507059e+37
    %v99 = vand.u32 %v86, 2147483648
    %v100 = vor.u32 1.1754944e-38, %v99
    %v101 = vsel %vm98, %v100, %v96
    %v102 = vmul.f32 %v60, %v101
    %v103 = vrcp.pop %v87
    %v104 = vmul.f32 %v87, %v103
    %v105 = vsub.f32 1.0, %v104
    %v106 = vmul.f32 %v103, %v105
    %v107 = vadd.f32 %v103, %v106
    %vm108 = vweird.f32 %v87
    %vm109 = vweird.f32 %v103
    %vm110 = vmor %vm108, %vm109
    %v111 = vsel %vm110, %v103, %v107
    %v112 = vand.u32 2147483647, %v87
    %vm113 = vcmp.eq.f32.partialorder %v112, 8.507059e+37
    %v114 = vand.u32 %v87, 2147483648
    %v115 = vor.u32 1.1754944e-38, %v114
    %v116 = vsel %vm113, %v115, %v111
    %v117 = vmul.f32 %v61, %v116
    %v118 = vld [vmem:[%s2] sm:$0x1]
    %v120 = vperm.slane %v118, 0
    %v122 = vadd.f32 %v102, %v120
    %v123 = vadd.f32 %v117, %v120
    %124 = vst [vmem:[#allocation2] sm:$0xff] %v122
    %125 = vst [vmem:[#allocation2 + $0x8] sm:$0xff] %v123
  $region25: #{decoder_layer.8} parent=0 // pred_fallthru
    _
  %v126 = vld [vmem:[#allocation2] sm:$0xff]
  %v127 = vld [vmem:[#allocation2 + $0x8] sm:$0xff]
  %v128 = vld [vmem:[%s3] sm:$0xff]
  %v129 = vld [vmem:[%s3 + $0x8] sm:$0xff]
  %v130 = vld [vmem:[%s3 + $0x10] sm:$0xff]
  %v131 = vld [vmem:[%s3 + $0x18] sm:$0xff]
  %v132 = vld [vmem:[%s3 + $0x20] sm:$0xff]
  %v133 = vld [vmem:[%s3 + $0x28] sm:$0xff]
  %v134 = vld [vmem:[%s3 + $0x30] sm:$0xff]
  %v135 = vld [vmem:[%s3 + $0x38] sm:$0xff]
  %v136 = vld [vmem:[%s3 + $0x40] sm:$0xff]
  %v137 = vld [vmem:[%s3 + $0x48] sm:$0xff]
  %v138 = vld [vmem:[%s3 + $0x50] sm:$0xff]
  %v139 = vld [vmem:[%s3 + $0x58] sm:$0xff]
  %v140 = vld [vmem:[%s3 + $0x60] sm:$0xff]
  %v141 = vld [vmem:[%s3 + $0x68] sm:$0xff]
  %v142 = vld [vmem:[%s3 + $0x70] sm:$0xff]
  %v143 = vld [vmem:[%s3 + $0x78] sm:$0xff]
  %v144 = vld [vmem:[%s3 + $0x80] sm:$0xff]
  %v145 = vld [vmem:[%s3 + $0x88] sm:$0xff]
  %v146 = vld [vmem:[%s3 + $0x90] sm:$0xff]
  %v147 = vld [vmem:[%s3 + $0x98] sm:$0xff]
  %v148 = vld [vmem:[%s3 + $0xa0] sm:$0xff]
  %v149 = vld [vmem:[%s3 + $0xa8] sm:$0xff]
  %v150 = vld [vmem:[%s3 + $0xb0] sm:$0xff]
  %v151 = vld [vmem:[%s3 + $0xb8] sm:$0xff]
  %v152 = vld [vmem:[%s3 + $0xc0] sm:$0xff]
  %v153 = vld [vmem:[%s3 + $0xc8] sm:$0xff]
  %v154 = vld [vmem:[%s3 + $0xd0] sm:$0xff]
  %v155 = vld [vmem:[%s3 + $0xd8] sm:$0xff]
  %v156 = vld [vmem:[%s3 + $0xe0] sm:$0xff]
  %v157 = vld [vmem:[%s3 + $0xe8] sm:$0xff]
  %v158 = vld [vmem:[%s3 + $0xf0] sm:$0xff]
  %v159 = vld [vmem:[%s3 + $0xf8] sm:$0xff]
  %v160 = vld [vmem:[%s3 + $0x100] sm:$0xff]
  %v161 = vld [vmem:[%s3 + $0x108] sm:$0xff]
  %v162 = vld [vmem:[%s3 + $0x110] sm:$0xff]
  %v163 = vld [vmem:[%s3 + $0x118] sm:$0xff]
  %v164 = vld [vmem:[%s3 + $0x120] sm:$0xff]
  %v165 = vld [vmem:[%s3 + $0x128] sm:$0xff]
  %v166 = vld [vmem:[%s3 + $0x130] sm:$0xff]
  %v167 = vld [vmem:[%s3 + $0x138] sm:$0xff]
  %v168 = vld [vmem:[%s3 + $0x140] sm:$0xff]
  %v169 = vld [vmem:[%s3 + $0x148] sm:$0xff]
  %v170 = vld [vmem:[%s3 + $0x150] sm:$0xff]
  %v171 = vld [vmem:[%s3 + $0x158] sm:$0xff]
  %v172 = vld [vmem:[%s3 + $0x160] sm:$0xff]
  %v173 = vld [vmem:[%s3 + $0x168] sm:$0xff]
  %v174 = vld [vmem:[%s3 + $0x170] sm:$0xff]
  %v175 = vld [vmem:[%s3 + $0x178] sm:$0xff]
  %v176 = vld [vmem:[%s4] sm:$0x7]
  %v178 = vperm.slane %v176, 0
  %v179 = vperm.slane %v176, 1
  %v180 = vperm.slane %v176, 2
  %184 = vmatpush.msra.mxu0 %v173
  %185 = vmatpush.msra.mxu0 %v170
  %186 = vmatpush.msra.mxu0 %v167
  %187 = vmatpush.msra.mxu0 %v164
  %188 = vmatpush.msra.mxu0 %v161
  %189 = vmatpush.msra.mxu0 %v158
  %190 = vmatpush.msra.mxu0 %v155
  %191 = vmatpush.msra.mxu0 %v152
  %192 = vmatpush.msra.mxu0 %v149
  %193 = vmatpush.msra.mxu0 %v146
  %194 = vmatpush.msra.mxu0 %v143
  %195 = vmatpush.msra.mxu0 %v140
  %196 = vmatpush.msra.mxu0 %v137
  %197 = vmatpush.msra.mxu0 %v134
  %198 = vmatpush.msra.mxu0 %v131
  %199 = vmatpush.msra.mxu0 %v128
  %200 = vmatmul.f32.gmra.mxu0 %v126
  %v201 = vpop.f32.mrf.mxu0
  %v202 = vadd.f32 %v178, %v201
  %203 = vmatmul.f32.gmra.mxu0 %v127
  %v204 = vpop.f32.mrf.mxu0
  %v205 = vadd.f32 %v178, %v204
  %206 = vdwg.mxu0
  %207 = vmatpush.msra.mxu0 %v174
  %208 = vmatpush.msra.mxu0 %v171
  %209 = vmatpush.msra.mxu0 %v168
  %210 = vmatpush.msra.mxu0 %v165
  %211 = vmatpush.msra.mxu0 %v162
  %212 = vmatpush.msra.mxu0 %v159
  %213 = vmatpush.msra.mxu0 %v156
  %214 = vmatpush.msra.mxu0 %v153
  %215 = vmatpush.msra.mxu0 %v150
  %216 = vmatpush.msra.mxu0 %v147
  %217 = vmatpush.msra.mxu0 %v144
  %218 = vmatpush.msra.mxu0 %v141
  %219 = vmatpush.msra.mxu0 %v138
  %220 = vmatpush.msra.mxu0 %v135
  %221 = vmatpush.msra.mxu0 %v132
  %222 = vmatpush.msra.mxu0 %v129
  %223 = vmatmul.f32.gmra.mxu0 %v126
  %v224 = vpop.f32.mrf.mxu0
  %v225 = vadd.f32 %v179, %v224
  %226 = vmatmul.f32.gmra.mxu0 %v127
  %v227 = vpop.f32.mrf.mxu0
  %v228 = vadd.f32 %v179, %v227
  %229 = vdwg.mxu0
  %230 = vmatpush.msra.mxu0 %v175
  %231 = vmatpush.msra.mxu0 %v172
  %232 = vmatpush.msra.mxu0 %v169
  %233 = vmatpush.msra.mxu0 %v166
  %234 = vmatpush.msra.mxu0 %v163
  %235 = vmatpush.msra.mxu0 %v160
  %236 = vmatpush.msra.mxu0 %v157
  %237 = vmatpush.msra.mxu0 %v154
  %238 = vmatpush.msra.mxu0 %v151
  %239 = vmatpush.msra.mxu0 %v148
  %240 = vmatpush.msra.mxu0 %v145
  %241 = vmatpush.msra.mxu0 %v142
  %242 = vmatpush.msra.mxu0 %v139
  %243 = vmatpush.msra.mxu0 %v136
  %244 = vmatpush.msra.mxu0 %v133
  %245 = vmatpush.msra.mxu0 %v130
  %246 = vmatmul.f32.gmra.mxu0 %v126
  %v247 = vpop.f32.mrf.mxu0
  %v248 = vadd.f32 %v180, %v247
  %249 = vmatmul.f32.gmra.mxu0 %v127
  %v250 = vpop.f32.mrf.mxu0
  %v251 = vadd.f32 %v180, %v250
  %252 = vdwg.mxu0
  %253 = vst [vmem:[%s5] sm:$0xff] %v202
  %254 = vst [vmem:[%s5 + $0x8] sm:$0xff] %v225
  %255 = vst [vmem:[%s5 + $0x10] sm:$0xff] %v248
  %256 = vst [vmem:[%s5 + $0x18] sm:$0xff] %v205
  %257 = vst [vmem:[%s5 + $0x20] sm:$0xff] %v228
  %258 = vst [vmem:[%s5 + $0x28] sm:$0xff] %v251
  // Predicated region
  $region26: #{decoder_layer.8} parent=0 // pred_check
    _
  $region27: #{decoder_layer.8} parent=0 // pred_check_branch
    %260 = sbr.rel (0) target = $region29
  $region28: #{decoder_layer.8} parent=0 // pred_region
    _
  $region29: #{decoder_layer.8} parent=0 // pred_fallthru
    _
  // Predicated region
  $region30: #{decoder_layer.8} parent=0 // pred_check
    _
  $region31: #{decoder_layer.8} parent=0 // pred_check_branch
    %262 = sbr.rel (0) target = $region33
  $region32: #{decoder_layer.8} parent=0 // pred_region
    _
  $region33: #{decoder_layer.8} parent=0 // pred_fallthru
    _

// kernel: decoder_layer.11
$region0: #{decoder_layer.11}
  #allocation0 [shape = 'u32[]', space=smem, size = 0x4, offset = 0x4, fixed_abs, tag = 'smem constant byte address 0x4 - core index']
  #allocation1 [shape = 'u32[72,128]{1,0:T(1,128)}', space=vmem, size = 0x9000, scoped, tag = 'internal scratch']
  #allocation2 [shape = 'f32[16,128]{1,0:T(8,128)}', space=vmem, size = 0x2000, scoped, tag = 'scratch operand']
  %s0 = inlined_call_operand.vmem [shape: f32[16,128], index: 0, kind: input, shape index: {}]
  %s1 = inlined_call_operand.vmem [shape: f32[1,128], index: 1, kind: input, shape index: {}]
  %s2 = inlined_call_operand.vmem [shape: f32[1,128], index: 2, kind: input, shape index: {}]
  %s3 = inlined_call_operand.vmem [shape: f32[128,128], index: 3, kind: input, shape index: {}]
  %s4 = inlined_call_operand.vmem [shape: f32[1,128], index: 4, kind: input, shape index: {}]
  %s5 = inlined_call_operand.vmem [shape: f32[16,128], index: 5, kind: output, shape index: {}]
  %s6 = sld [smem:[#allocation0]]
  $region34: #{decoder_layer.11} parent=0
    _
  %s8 = ssub.s32 1, %s6
  %s9 = scalar_select 0, %s8, %s6
  // Predicated region
  $region2: #{decoder_layer.11} parent=0 // pred_check
    _
  $region3: #{decoder_layer.11} parent=0 // pred_check_branch
    %11 = sbr.rel (0) target = $region5
  $region4: #{decoder_layer.11} parent=0 // pred_region
    _
  $region5: #{decoder_layer.11} parent=0 // pred_fallthru
    _
  // Predicated region
  $region6: #{decoder_layer.11} parent=0 // pred_check
    _
  $region7: #{decoder_layer.11} parent=0 // pred_check_branch
    %13 = sbr.rel (0) target = $region9
  $region8: #{decoder_layer.11} parent=0 // pred_region
    _
  $region9: #{decoder_layer.11} parent=0 // pred_fallthru
    _
  // Predicated region
  $region10: #{decoder_layer.11} parent=0 // pred_check
    _
  $region11: #{decoder_layer.11} parent=0 // pred_check_branch
    %15 = sbr.rel (0) target = $region13
  $region12: #{decoder_layer.11} parent=0 // pred_region
    _
  $region13: #{decoder_layer.11} parent=0 // pred_fallthru
    _
  // Predicated region
  $region14: #{decoder_layer.11} parent=0 // pred_check
    _
  $region15: #{decoder_layer.11} parent=0 // pred_check_branch
    %17 = sbr.rel (0) target = $region17
  $region16: #{decoder_layer.11} parent=0 // pred_region
    _
  $region17: #{decoder_layer.11} parent=0 // pred_fallthru
    _
  // Predicated region
  $region18: #{decoder_layer.11} parent=0 // pred_check
    _
  $region19: #{decoder_layer.11} parent=0 // pred_check_branch
    %19 = sbr.rel (0) target = $region21
  $region20: #{decoder_layer.11} parent=0 // pred_region
    _
  $region21: #{decoder_layer.11} parent=0 // pred_fallthru
    _
  %p20 = scmp.eq.s32.totalorder 0, 0
  // Predicated region
  $region22: #{decoder_layer.11} parent=0 // pred_check
    %p21 = pneg %p20
  $region23: #{decoder_layer.11} parent=0 // pred_check_branch
    %23 = sbr.rel (%p21) target = $region25
  $region24: #{decoder_layer.11} parent=0 // pred_region
    %v24 = vld [vmem:[%s0] sm:$0xff]
    %v25 = vld [vmem:[%s0 + $0x8] sm:$0xff]
    %26 = vadd.xlane.f32.xlu0 %v24
    %v27 = vpop.xlane.xlu0 %26
    %28 = vadd.xlane.f32.xlu0 %v25
    %v29 = vpop.xlane.xlu0 %28
    %v30 = vrcp.pop 128.0
    %v31 = vmul.f32 128.0, %v30
    %v32 = vsub.f32 1.0, %v31
    %v33 = vmul.f32 %v30, %v32
    %v34 = vadd.f32 %v30, %v33
    %vm35 = vweird.f32 %v30
    %v36 = vsel %vm35, %v30, %v34
    %v37 = vmul.f32 %v27, %v36
    %v38 = vmul.f32 %v29, %v36
    %v39 = vsub.f32 %v24, %v37
    %v40 = vsub.f32 %v25, %v38
    %v41 = vmul.f32 %v39, %v39
    %v42 = vmul.f32 %v40, %v40
    %43 = vadd.xlane.f32.xlu0 %v41
    %v44 = vpop.xlane.xlu0 %43
    %45 = vadd.xlane.f32.xlu0 %v42
    %v46 = vpop.xlane.xlu0 %45
    %v47 = vrcp.pop 127.0
    %v48 = vmul.f32 127.0, %v47
    %v49 = vsub.f32 1.0, %v48
    %v50 = vmul.f32 %v47, %v49
    %v51 = vadd.f32 %v47, %v50
    %vm52 = vweird.f32 %v47
    %v53 = vsel %vm52, %v47, %v51
    %v54 = vmul.f32 %v44, %v53
    %v55 = vmul.f32 %v46, %v53
    %v56 = vld [vmem:[%s1] sm:$0x1]
    %v58 = vperm.slane %v56, 0
    %v60 = vmul.f32 %v58, %v39
    %v61 = vmul.f32 %v58, %v40
    %v62 = vrsqrt.pop %v54
    %v63 = vmul.f32 %v62, %v54
    %v64 = vmul.f32 %v63, %v62
    %v65 = vmul.f32 0.5, %v64
    %v66 = vsub.f32 1.5, %v65
    %v67 = vmul.f32 %v62, %v66
    %v68 = vmul.f32 %v54, %v67
    %vm69 = vcmp.eq.f32.partialorder %v54, inf
    %v70 = vsel %vm69, %v54, %v68
    %vm71 = vcmp.eq.f32.partialorder %v54, 0.0
    %v72 = vand.u32 %v54, 2147483648
    %v73 = vsel %vm71, %v72, %v70
    %v74 = vrsqrt.pop %v55
    %v75 = vmul.f32 %v74, %v55
    %v76 = vmul.f32 %v75, %v74
    %v77 = vmul.f32 0.5, %v76
    %v78 = vsub.f32 1.5, %v77
    %v79 = vmul.f32 %v74, %v78
    %v80 = vmul.f32 %v55, %v79
    %vm81 = vcmp.eq.f32.partialorder %v55, inf
    %v82 = vsel %vm81, %v55, %v80
    %vm83 = vcmp.eq.f32.partialorder %v55, 0.0
    %v84 = vand.u32 %v55, 2147483648
    %v85 = vsel %vm83, %v84, %v82
    %v86 = vadd.f32 %v73, 1e-06
    %v87 = vadd.f32 %v85, 1e-06
    %v88 = vrcp.pop %v86
    %v89 = vmul.f32 %v86, %v88
    %v90 = vsub.f32 1.0, %v89
    %v91 = vmul.f32 %v88, %v90
    %v92 = vadd.f32 %v88, %v91
    %vm93 = vweird.f32 %v86
    %vm94 = vweird.f32 %v88
    %vm95 = vmor %vm93, %vm94
    %v96 = vsel %vm95, %v88, %v92
    %v97 = vand.u32 2147483647, %v86
    %vm98 = vcmp.eq.f32.partialorder %v97, 8.507059e+37
    %v99 = vand.u32 %v86, 2147483648
    %v100 = vor.u32 1.1754944e-38, %v99
    %v101 = vsel %vm98, %v100, %v96
    %v102 = vmul.f32 %v60, %v101
    %v103 = vrcp.pop %v87
    %v104 = vmul.f32 %v87, %v103
    %v105 = vsub.f32 1.0, %v104
    %v106 = vmul.f32 %v103, %v105
    %v107 = vadd.f32 %v103, %v106
    %vm108 = vweird.f32 %v87
    %vm109 = vweird.f32 %v103
    %vm110 = vmor %vm108, %vm109
    %v111 = vsel %vm110, %v103, %v107
    %v112 = vand.u32 2147483647, %v87
    %vm113 = vcmp.eq.f32.partialorder %v112, 8.507059e+37
    %v114 = vand.u32 %v87, 2147483648
    %v115 = vor.u32 1.1754944e-38, %v114
    %v116 = vsel %vm113, %v115, %v111
    %v117 = vmul.f32 %v61, %v116
    %v118 = vld [vmem:[%s2] sm:$0x1]
    %v120 = vperm.slane %v118, 0
    %v122 = vadd.f32 %v102, %v120
    %v123 = vadd.f32 %v117, %v120
    %124 = vst [vmem:[#allocation2] sm:$0xff] %v122
    %125 = vst [vmem:[#allocation2 + $0x8] sm:$0xff] %v123
  $region25: #{decoder_layer.11} parent=0 // pred_fallthru
    _
  %v126 = vld [vmem:[#allocation2] sm:$0xff]
  %v127 = vld [vmem:[#allocation2 + $0x8] sm:$0xff]
  %v128 = vld [vmem:[%s3] sm:$0xff]
  %v129 = vld [vmem:[%s3 + $0x8] sm:$0xff]
  %v130 = vld [vmem:[%s3 + $0x10] sm:$0xff]
  %v131 = vld [vmem:[%s3 + $0x18] sm:$0xff]
  %v132 = vld [vmem:[%s3 + $0x20] sm:$0xff]
  %v133 = vld [vmem:[%s3 + $0x28] sm:$0xff]
  %v134 = vld [vmem:[%s3 + $0x30] sm:$0xff]
  %v135 = vld [vmem:[%s3 + $0x38] sm:$0xff]
  %v136 = vld [vmem:[%s3 + $0x40] sm:$0xff]
  %v137 = vld [vmem:[%s3 + $0x48] sm:$0xff]
  %v138 = vld [vmem:[%s3 + $0x50] sm:$0xff]
  %v139 = vld [vmem:[%s3 + $0x58] sm:$0xff]
  %v140 = vld [vmem:[%s3 + $0x60] sm:$0xff]
  %v141 = vld [vmem:[%s3 + $0x68] sm:$0xff]
  %v142 = vld [vmem:[%s3 + $0x70] sm:$0xff]
  %v143 = vld [vmem:[%s3 + $0x78] sm:$0xff]
  %v144 = vld [vmem:[%s4] sm:$0x1]
  %v146 = vperm.slane %v144, 0
  %148 = vmatpush.msra.mxu0 %v143
  %149 = vmatpush.msra.mxu0 %v142
  %150 = vmatpush.msra.mxu0 %v141
  %151 = vmatpush.msra.mxu0 %v140
  %152 = vmatpush.msra.mxu0 %v139
  %153 = vmatpush.msra.mxu0 %v138
  %154 = vmatpush.msra.mxu0 %v137
  %155 = vmatpush.msra.mxu0 %v136
  %156 = vmatpush.msra.mxu0 %v135
  %157 = vmatpush.msra.mxu0 %v134
  %158 = vmatpush.msra.mxu0 %v133
  %159 = vmatpush.msra.mxu0 %v132
  %160 = vmatpush.msra.mxu0 %v131
  %161 = vmatpush.msra.mxu0 %v130
  %162 = vmatpush.msra.mxu0 %v129
  %163 = vmatpush.msra.mxu0 %v128
  %164 = vmatmul.f32.gmra.mxu0 %v126
  %v165 = vpop.f32.mrf.mxu0
  %v166 = vadd.f32 %v146, %v165
  %167 = vmatmul.f32.gmra.mxu0 %v127
  %v168 = vpop.f32.mrf.mxu0
  %v169 = vadd.f32 %v146, %v168
  %170 = vdwg.mxu0
  %171 = vst [vmem:[%s5] sm:$0xff] %v166
  %172 = vst [vmem:[%s5 + $0x8] sm:$0xff] %v169
  // Predicated region
  $region26: #{decoder_layer.11} parent=0 // pred_check
    _
  $region27: #{decoder_layer.11} parent=0 // pred_check_branch
    %174 = sbr.rel (0) target = $region29
  $region28: #{decoder_layer.11} parent=0 // pred_region
    _
  $region29: #{decoder_layer.11} parent=0 // pred_fallthru
    _
  // Predicated region
  $region30: #{decoder_layer.11} parent=0 // pred_check
    _
  $region31: #{decoder_layer.11} parent=0 // pred_check_branch
    %176 = sbr.rel (0) target = $region33
  $region32: #{decoder_layer.11} parent=0 // pred_region
    _
  $region33: #{decoder_layer.11} parent=0 // pred_fallthru
    _

// kernel: decoder_layer.10
$region0: #{decoder_layer.10}
  #allocation0 [shape = 'u32[]', space=smem, size = 0x4, offset = 0x4, fixed_abs, tag = 'smem constant byte address 0x4 - core index']
  #allocation1 [shape = 'u32[72,128]{1,0:T(1,128)}', space=vmem, size = 0x9000, scoped, tag = 'internal scratch']
  #allocation2 [shape = 'f32[16,128]{1,0:T(8,128)}', space=vmem, size = 0x2000, scoped, tag = 'scratch operand']
  %s0 = inlined_call_operand.vmem [shape: f32[16,128], index: 0, kind: input, shape index: {}]
  %s1 = inlined_call_operand.vmem [shape: f32[128,128], index: 1, kind: input, shape index: {}]
  %s2 = inlined_call_operand.vmem [shape: f32[1,128], index: 2, kind: input, shape index: {}]
  %s3 = inlined_call_operand.vmem [shape: f32[16,128], index: 3, kind: input, shape index: {}]
  %s4 = inlined_call_operand.vmem [shape: f32[16,128], index: 4, kind: output, shape index: {}]
  %s5 = sld [smem:[#allocation0]]
  $region34: #{decoder_layer.10} parent=0
    _
  %s7 = ssub.s32 1, %s5
  %s8 = scalar_select 0, %s7, %s5
  // Predicated region
  $region2: #{decoder_layer.10} parent=0 // pred_check
    _
  $region3: #{decoder_layer.10} parent=0 // pred_check_branch
    %10 = sbr.rel (0) target = $region5
  $region4: #{decoder_layer.10} parent=0 // pred_region
    _
  $region5: #{decoder_layer.10} parent=0 // pred_fallthru
    _
  // Predicated region
  $region6: #{decoder_layer.10} parent=0 // pred_check
    _
  $region7: #{decoder_layer.10} parent=0 // pred_check_branch
    %12 = sbr.rel (0) target = $region9
  $region8: #{decoder_layer.10} parent=0 // pred_region
    _
  $region9: #{decoder_layer.10} parent=0 // pred_fallthru
    _
  // Predicated region
  $region10: #{decoder_layer.10} parent=0 // pred_check
    _
  $region11: #{decoder_layer.10} parent=0 // pred_check_branch
    %14 = sbr.rel (0) target = $region13
  $region12: #{decoder_layer.10} parent=0 // pred_region
    _
  $region13: #{decoder_layer.10} parent=0 // pred_fallthru
    _
  // Predicated region
  $region14: #{decoder_layer.10} parent=0 // pred_check
    _
  $region15: #{decoder_layer.10} parent=0 // pred_check_branch
    %16 = sbr.rel (0) target = $region17
  $region16: #{decoder_layer.10} parent=0 // pred_region
    _
  $region17: #{decoder_layer.10} parent=0 // pred_fallthru
    _
  %p17 = scmp.eq.s32.totalorder 0, 0
  // Predicated region
  $region18: #{decoder_layer.10} parent=0 // pred_check
    %p18 = pneg %p17
  $region19: #{decoder_layer.10} parent=0 // pred_check_branch
    %20 = sbr.rel (%p18) target = $region21
  $region20: #{decoder_layer.10} parent=0 // pred_region
    %21 = vst [vmem:[#allocation2] sm:$0xff] 0.0
    %22 = vst [vmem:[#allocation2 + $0x8] sm:$0xff] 0.0
  $region21: #{decoder_layer.10} parent=0 // pred_fallthru
    _
  %v23 = vld [vmem:[#allocation2] sm:$0xff]
  %v24 = vld [vmem:[#allocation2 + $0x8] sm:$0xff]
  %v25 = vld [vmem:[%s0] sm:$0xff]
  %v26 = vld [vmem:[%s0 + $0x8] sm:$0xff]
  %v27 = vld [vmem:[%s1] sm:$0xff]
  %v28 = vld [vmem:[%s1 + $0x8] sm:$0xff]
  %v29 = vld [vmem:[%s1 + $0x10] sm:$0xff]
  %v30 = vld [vmem:[%s1 + $0x18] sm:$0xff]
  %v31 = vld [vmem:[%s1 + $0x20] sm:$0xff]
  %v32 = vld [vmem:[%s1 + $0x28] sm:$0xff]
  %v33 = vld [vmem:[%s1 + $0x30] sm:$0xff]
  %v34 = vld [vmem:[%s1 + $0x38] sm:$0xff]
  %v35 = vld [vmem:[%s1 + $0x40] sm:$0xff]
  %v36 = vld [vmem:[%s1 + $0x48] sm:$0xff]
  %v37 = vld [vmem:[%s1 + $0x50] sm:$0xff]
  %v38 = vld [vmem:[%s1 + $0x58] sm:$0xff]
  %v39 = vld [vmem:[%s1 + $0x60] sm:$0xff]
  %v40 = vld [vmem:[%s1 + $0x68] sm:$0xff]
  %v41 = vld [vmem:[%s1 + $0x70] sm:$0xff]
  %v42 = vld [vmem:[%s1 + $0x78] sm:$0xff]
  %43 = vmatpush.msra.mxu0 %v42
  %44 = vmatpush.msra.mxu0 %v41
  %45 = vmatpush.msra.mxu0 %v40
  %46 = vmatpush.msra.mxu0 %v39
  %47 = vmatpush.msra.mxu0 %v38
  %48 = vmatpush.msra.mxu0 %v37
  %49 = vmatpush.msra.mxu0 %v36
  %50 = vmatpush.msra.mxu0 %v35
  %51 = vmatpush.msra.mxu0 %v34
  %52 = vmatpush.msra.mxu0 %v33
  %53 = vmatpush.msra.mxu0 %v32
  %54 = vmatpush.msra.mxu0 %v31
  %55 = vmatpush.msra.mxu0 %v30
  %56 = vmatpush.msra.mxu0 %v29
  %57 = vmatpush.msra.mxu0 %v28
  %58 = vmatpush.msra.mxu0 %v27
  %59 = vmatmul.f32.gmra.mxu0 %v25
  %v60 = vpop.f32.mrf.mxu0
  %v61 = vadd.f32 0.0, %v60
  %62 = vmatmul.f32.gmra.mxu0 %v26
  %v63 = vpop.f32.mrf.mxu0
  %v64 = vadd.f32 0.0, %v63
  %65 = vdwg.mxu0
  %v66 = vadd.f32 %v23, %v61
  %v67 = vadd.f32 %v24, %v64
  %68 = vst [vmem:[#allocation2] sm:$0xff] %v66
  %69 = vst [vmem:[#allocation2 + $0x8] sm:$0xff] %v67
  // Predicated region
  $region22: #{decoder_layer.10} parent=0 // pred_check
    %p70 = pneg %p17
  $region23: #{decoder_layer.10} parent=0 // pred_check_branch
    %72 = sbr.rel (%p70) target = $region25
  $region24: #{decoder_layer.10} parent=0 // pred_region
    %v73 = vld [vmem:[#allocation2] sm:$0xff]
    %v74 = vld [vmem:[#allocation2 + $0x8] sm:$0xff]
    %v75 = vld [vmem:[%s2] sm:$0x1]
    %v77 = vperm.slane %v75, 0
    %v79 = vadd.f32 %v73, %v77
    %v80 = vadd.f32 %v74, %v77
    %v81 = vld [vmem:[%s3] sm:$0xff]
    %v82 = vld [vmem:[%s3 + $0x8] sm:$0xff]
    %v83 = vadd.f32 %v79, %v81
    %v84 = vadd.f32 %v80, %v82
    %85 = vst [vmem:[%s4] sm:$0xff] %v83
    %86 = vst [vmem:[%s4 + $0x8] sm:$0xff] %v84
  $region25: #{decoder_layer.10} parent=0 // pred_fallthru
    _
  // Predicated region
  $region26: #{decoder_layer.10} parent=0 // pred_check
    _
  $region27: #{decoder_layer.10} parent=0 // pred_check_branch
    %88 = sbr.rel (0) target = $region29
  $region28: #{decoder_layer.10} parent=0 // pred_region
    _
  $region29: #{decoder_layer.10} parent=0 // pred_fallthru
    _
  // Predicated region
  $region30: #{decoder_layer.10} parent=0 // pred_check
    _
  $region31: #{decoder_layer.10} parent=0 // pred_check_branch
    %90 = sbr.rel (0) target = $region33
  $region32: #{decoder_layer.10} parent=0 // pred_region
    _
  $region33: #{decoder_layer.10} parent=0 // pred_fallthru
    _

// kernel: decoder_layer.9
$region0: #{decoder_layer.9}
  #allocation0 [shape = 'u32[]', space=smem, size = 0x4, offset = 0x4, fixed_abs, tag = 'smem constant byte address 0x4 - core index']
  #allocation1 [shape = 'u32[72,128]{1,0:T(1,128)}', space=vmem, size = 0x9000, scoped, tag = 'internal scratch']
  %s0 = inlined_call_operand.vmem [shape: f32[2,8,384], index: 0, kind: input, shape index: {}, may-alias: {0,1,2}]
  %s1 = inlined_call_operand.vmem [shape: f32[2,8,384], index: 1, kind: input, shape index: {}, may-alias: {0,1,2}]
  %s2 = inlined_call_operand.vmem [shape: f32[2,8,384], index: 2, kind: input, shape index: {}, may-alias: {0,1,2}]
  %s3 = inlined_call_operand.vmem [shape: f32[2,8,8], index: 3, kind: input, shape index: {}]
  %s4 = inlined_call_operand.vmem [shape: f32[2,8,128], index: 4, kind: output, shape index: {}]
  %s5 = sld [smem:[#allocation0]]
  $region49: #{decoder_layer.9} parent=0
    _
  %s7 = ssub.s32 1, %s5
  %s8 = scalar_select 0, %s7, %s5
  loop: start=0, step=1, limit=4
  $region2: #{decoder_layer.9} parent=0 // loop_pre_header
    _
  $region3: #{decoder_layer.9} parent=0 // loop_header
    %s10 = sphi 0, %s14
    %p11 = scmp.ge.s32.totalorder %s10, 4
    %s17 = sphi 0, %s29
    %s18 = sphi 0, %s25
    %s19 = sphi 0, %s17
    %s20 = sphi 0, %s18
    %s21 = sphi 0, %s19
    %s22 = sphi 0, %s20
    %s34 = sphi 0, %s36
    %s37 = sphi 0, %s34
    %s38 = sphi 0, %s37
    %s54 = sphi 0, %s38
    %s64 = sphi 0, %s66
    %s67 = sphi 0, %s64
    %s68 = sphi 0, %s67
    %s84 = sphi 0, %s68
    %s94 = sphi 0, %s96
    %s97 = sphi 0, %s94
    %s98 = sphi 0, %s97
    %s114 = sphi 0, %s98
    %s120 = sphi 0, %s122
    %s123 = sphi 0, %s120
    %s124 = sphi 0, %s123
    %s140 = sphi 0, %s124
    %s148 = sphi 0, %s150
    %s151 = sphi 0, %s148
    %s152 = sphi 0, %s151
    %s168 = sphi 0, %s152
  $region4: #{decoder_layer.9} parent=0 // loop_header_branch
    %13 = sbr.rel (%p11) target = $region8
  $region5: #{decoder_layer.9} parent=0 // loop_body
    %s15 = ssub.s32 %s10, 1
    %s16 = ssub.s32 %s10, 2
    %s23 = sadd.s32 1, %s18
    %p24 = scmp.ge.s32.totalorder %s23, 1
    %s25 = scalar_select %p24, 0, %s23
    %s26 = sadd.s32 1, %s17
    %s27 = scalar_select %p24, %s26, %s17
    %p28 = scmp.ge.s32.totalorder %s27, 2
    %s29 = scalar_select %p28, 0, %s27
    %s30 = ssub.s32 %s17, %s29
    %s31 = ssub.s32 %s18, %s25
    %s32 = sor.u32 %s30, %s31
    %p33 = scmp.eq.s32.totalorder %s32, 0
    %s35 = sadd.s32 %s34, 1
    %s36 = scalar_select %p33, %s34, %s35
    %p39 = pneg %p33
    %p40 = scmp.eq.s32.totalorder %s10, 1
    %p41 = por %p39, %p40
    %p42 = scmp.ne.s32.totalorder %s34, %s37
    %p43 = scmp.eq.s32.totalorder %s10, 0
    %p44 = por %p42, %p43
    %p45 = scmp.ne.s32.totalorder %s34, %s37
    %p46 = scmp.eq.s32.totalorder %s15, 1
    %p47 = por %p45, %p46
    %p48 = scmp.ne.s32.totalorder %s37, %s38
    %p49 = scmp.eq.s32.totalorder %s15, 0
    %p50 = por %p48, %p49
    %p51 = scmp.ne.s32.totalorder %s37, %s38
    %p52 = scmp.eq.s32.totalorder %s16, 1
    %p53 = por %p51, %p52
    %p55 = scmp.ne.s32.totalorder %s38, %s54
    %p56 = scmp.eq.s32.totalorder %s16, 0
    %p57 = por %p55, %p56
    %s58 = sadd.s32 %s18, 1
    %s59 = sadd.s32 %s25, 1
    %s60 = ssub.s32 %s17, %s29
    %s61 = ssub.s32 %s58, %s59
    %s62 = sor.u32 %s60, %s61
    %p63 = scmp.eq.s32.totalorder %s62, 0
    %s65 = sadd.s32 %s64, 1
    %s66 = scalar_select %p63, %s64, %s65
    %p69 = pneg %p63
    %p70 = scmp.eq.s32.totalorder %s10, 1
    %p71 = por %p69, %p70
    %p72 = scmp.ne.s32.totalorder %s64, %s67
    %p73 = scmp.eq.s32.totalorder %s10, 0
    %p74 = por %p72, %p73
    %p75 = scmp.ne.s32.totalorder %s64, %s67
    %p76 = scmp.eq.s32.totalorder %s15, 1
    %p77 = por %p75, %p76
    %p78 = scmp.ne.s32.totalorder %s67, %s68
    %p79 = scmp.eq.s32.totalorder %s15, 0
    %p80 = por %p78, %p79
    %p81 = scmp.ne.s32.totalorder %s67, %s68
    %p82 = scmp.eq.s32.totalorder %s16, 1
    %p83 = por %p81, %p82
    %p85 = scmp.ne.s32.totalorder %s68, %s84
    %p86 = scmp.eq.s32.totalorder %s16, 0
    %p87 = por %p85, %p86
    %s88 = sadd.s32 %s18, 2
    %s89 = sadd.s32 %s25, 2
    %s90 = ssub.s32 %s17, %s29
    %s91 = ssub.s32 %s88, %s89
    %s92 = sor.u32 %s90, %s91
    %p93 = scmp.eq.s32.totalorder %s92, 0
    %s95 = sadd.s32 %s94, 1
    %s96 = scalar_select %p93, %s94, %s95
    %p99 = pneg %p93
    %p100 = scmp.eq.s32.totalorder %s10, 1
    %p101 = por %p99, %p100
    %p102 = scmp.ne.s32.totalorder %s94, %s97
    %p103 = scmp.eq.s32.totalorder %s10, 0
    %p104 = por %p102, %p103
    %p105 = scmp.ne.s32.totalorder %s94, %s97
    %p106 = scmp.eq.s32.totalorder %s15, 1
    %p107 = por %p105, %p106
    %p108 = scmp.ne.s32.totalorder %s97, %s98
    %p109 = scmp.eq.s32.totalorder %s15, 0
    %p110 = por %p108, %p109
    %p111 = scmp.ne.s32.totalorder %s97, %s98
    %p112 = scmp.eq.s32.totalorder %s16, 1
    %p113 = por %p111, %p112
    %p115 = scmp.ne.s32.totalorder %s98, %s114
    %p116 = scmp.eq.s32.totalorder %s16, 0
    %p117 = por %p115, %p116
    %s118 = ssub.s32 %s17, %s29
    %p119 = scmp.eq.s32.totalorder %s118, 0
    %s121 = sadd.s32 %s120, 1
    %s122 = scalar_select %p119, %s120, %s121
    %p125 = pneg %p119
    %p126 = scmp.eq.s32.totalorder %s10, 1
    %p127 = por %p125, %p126
    %p128 = scmp.ne.s32.totalorder %s120, %s123
    %p129 = scmp.eq.s32.totalorder %s10, 0
    %p130 = por %p128, %p129
    %p131 = scmp.ne.s32.totalorder %s120, %s123
    %p132 = scmp.eq.s32.totalorder %s15, 1
    %p133 = por %p131, %p132
    %p134 = scmp.ne.s32.totalorder %s123, %s124
    %p135 = scmp.eq.s32.totalorder %s15, 0
    %p136 = por %p134, %p135
    %p137 = scmp.ne.s32.totalorder %s123, %s124
    %p138 = scmp.eq.s32.totalorder %s16, 1
    %p139 = por %p137, %p138
    %p141 = scmp.ne.s32.totalorder %s124, %s140
    %p142 = scmp.eq.s32.totalorder %s16, 0
    %p143 = por %p141, %p142
    %s144 = ssub.s32 %s17, %s29
    %s145 = ssub.s32 %s18, %s25
    %s146 = sor.u32 %s144, %s145
    %p147 = scmp.eq.s32.totalorder %s146, 0
    %s149 = sadd.s32 %s148, 1
    %s150 = scalar_select %p147, %s148, %s149
    %p153 = pneg %p147
    %p154 = scmp.eq.s32.totalorder %s10, 1
    %p155 = por %p153, %p154
    %p156 = scmp.ne.s32.totalorder %s148, %s151
    %p157 = scmp.eq.s32.totalorder %s10, 0
    %p158 = por %p156, %p157
    %p159 = scmp.ne.s32.totalorder %s148, %s151
    %p160 = scmp.eq.s32.totalorder %s15, 1
    %p161 = por %p159, %p160
    %p162 = scmp.ne.s32.totalorder %s151, %s152
    %p163 = scmp.eq.s32.totalorder %s15, 0
    %p164 = por %p162, %p163
    %p165 = scmp.ne.s32.totalorder %s151, %s152
    %p166 = scmp.eq.s32.totalorder %s16, 1
    %p167 = por %p165, %p166
    %p169 = scmp.ne.s32.totalorder %s152, %s168
    %p170 = scmp.eq.s32.totalorder %s16, 0
    %p171 = por %p169, %p170
    %p172 = scmp.le.s32.totalorder 1, %s10
    %p173 = scmp.lt.s32.totalorder %s10, 3
    %p174 = pnand %p172, %p173
    %p175 = pneg %p174
    // Predicated region
    $region9: #{decoder_layer.9} parent=5 // pred_check
      _
    $region10: #{decoder_layer.9} parent=5 // pred_check_branch
      %177 = sbr.rel (%p174) target = $region12
    $region11: #{decoder_layer.9} parent=5 // pred_region
      %s178 = ssub.s32 %s10, 1
    $region12: #{decoder_layer.9} parent=5 // pred_fallthru
      _
    %p179 = scmp.lt.s32.totalorder %s10, 2
    // Predicated region
    $region13: #{decoder_layer.9} parent=5 // pred_check
      %p180 = pneg %p179
    $region14: #{decoder_layer.9} parent=5 // pred_check_branch
      %182 = sbr.rel (%p180) target = $region16
    $region15: #{decoder_layer.9} parent=5 // pred_region
      // Predicated region
      $region17: #{decoder_layer.9} parent=15 // pred_check
        %p183 = pneg %p44
      $region18: #{decoder_layer.9} parent=15 // pred_check_branch
        %185 = sbr.rel (%p183) target = $region20
      $region19: #{decoder_layer.9} parent=15 // pred_region
        %p186 = scmp.lt.s32.totalorder %s17, 1
        %s187 = scalar_select %p186, %s17, 1
        %p188 = scmp.lt.s32.totalorder %s18, 2
        %s189 = scalar_select %p188, %s18, 2
        %s190 = smul.addr %s187, 3
        %s191 = sadd.s32 %s189, %s190
        %s192 = smul.addr %s191, 8
        %s193 = scalar_lea.vmem %s0, %s192
      $region20: #{decoder_layer.9} parent=15 // pred_fallthru
        _
      // Predicated region
      $region21: #{decoder_layer.9} parent=15 // pred_check
        %p194 = pneg %p74
      $region22: #{decoder_layer.9} parent=15 // pred_check_branch
        %196 = sbr.rel (%p194) target = $region24
      $region23: #{decoder_layer.9} parent=15 // pred_region
        %s197 = sadd.s32 %s18, 1
        %p198 = scmp.lt.s32.totalorder %s17, 1
        %s199 = scalar_select %p198, %s17, 1
        %p200 = scmp.lt.s32.totalorder %s197, 2
        %s201 = scalar_select %p200, %s197, 2
        %s202 = smul.addr %s199, 3
        %s203 = sadd.s32 %s201, %s202
        %s204 = smul.addr %s203, 8
        %s205 = scalar_lea.vmem %s1, %s204
        %s206 = sadd.s32 %s18, 1
      $region24: #{decoder_layer.9} parent=15 // pred_fallthru
        _
      // Predicated region
      $region25: #{decoder_layer.9} parent=15 // pred_check
        %p207 = pneg %p104
      $region26: #{decoder_layer.9} parent=15 // pred_check_branch
        %209 = sbr.rel (%p207) target = $region28
      $region27: #{decoder_layer.9} parent=15 // pred_region
        %s210 = sadd.s32 %s18, 2
        %p211 = scmp.lt.s32.totalorder %s17, 1
        %s212 = scalar_select %p211, %s17, 1
        %p213 = scmp.lt.s32.totalorder %s210, 2
        %s214 = scalar_select %p213, %s210, 2
        %s215 = smul.addr %s212, 3
        %s216 = sadd.s32 %s214, %s215
        %s217 = smul.addr %s216, 8
        %s218 = scalar_lea.vmem %s2, %s217
        %s219 = sadd.s32 %s18, 2
      $region28: #{decoder_layer.9} parent=15 // pred_fallthru
        _
      // Predicated region
      $region29: #{decoder_layer.9} parent=15 // pred_check
        %p220 = pneg %p130
      $region30: #{decoder_layer.9} parent=15 // pred_check_branch
        %222 = sbr.rel (%p220) target = $region32
      $region31: #{decoder_layer.9} parent=15 // pred_region
        %p223 = scmp.lt.s32.totalorder %s17, 1
        %s224 = scalar_select %p223, %s17, 1
        %s225 = smul.addr %s224, 8
        %s226 = scalar_lea.vmem %s3, %s225
      $region32: #{decoder_layer.9} parent=15 // pred_fallthru
        _
    $region16: #{decoder_layer.9} parent=5 // pred_fallthru
      _
    %p227 = scmp.le.s32.totalorder 1, %s10
    %p228 = scmp.lt.s32.totalorder %s10, 3
    %p229 = pnand %p227, %p228
    %p230 = pneg %p229
    // Predicated region
    $region33: #{decoder_layer.9} parent=5 // pred_check
      _
    $region34: #{decoder_layer.9} parent=5 // pred_check_branch
      %232 = sbr.rel (%p229) target = $region36
    $region35: #{decoder_layer.9} parent=5 // pred_region
      %s233 = ssub.s32 %s10, 1
      %p234 = scmp.lt.s32.totalorder %s19, 1
      %s235 = scalar_select %p234, %s19, 1
      %p236 = scmp.lt.s32.totalorder %s20, 2
      %s237 = scalar_select %p236, %s20, 2
      %s238 = smul.addr %s235, 3
      %s239 = sadd.s32 %s237, %s238
      %s240 = smul.addr %s239, 8
      %s241 = scalar_lea.vmem %s0, %s240
      %p242 = pneg %p50
      %p243 = pneg %p47
      %s244 = sadd.s32 %s20, 1
      %p245 = scmp.lt.s32.totalorder %s19, 1
      %s246 = scalar_select %p245, %s19, 1
      %p247 = scmp.lt.s32.totalorder %s244, 2
      %s248 = scalar_select %p247, %s244, 2
      %s249 = smul.addr %s246, 3
      %s250 = sadd.s32 %s248, %s249
      %s251 = smul.addr %s250, 8
      %s252 = scalar_lea.vmem %s1, %s251
      %p253 = pneg %p80
      %p254 = pneg %p77
      %s255 = sadd.s32 %s20, 2
      %p256 = scmp.lt.s32.totalorder %s19, 1
      %s257 = scalar_select %p256, %s19, 1
      %p258 = scmp.lt.s32.totalorder %s255, 2
      %s259 = scalar_select %p258, %s255, 2
      %s260 = smul.addr %s257, 3
      %s261 = sadd.s32 %s259, %s260
      %s262 = smul.addr %s261, 8
      %s263 = scalar_lea.vmem %s2, %s262
      %p264 = pneg %p110
      %p265 = pneg %p107
      %p266 = scmp.lt.s32.totalorder %s19, 1
      %s267 = scalar_select %p266, %s19, 1
      %s268 = smul.addr %s267, 8
      %s269 = scalar_lea.vmem %s3, %s268
      %p270 = pneg %p136
      %p271 = pneg %p133
      %p272 = pneg %p164
      %p273 = pneg %p161
      %p274 = scmp.lt.s32.totalorder %s19, 1
      %s275 = scalar_select %p274, %s19, 1
      %p276 = scmp.lt.s32.totalorder %s20, 0
      %s277 = scalar_select %p276, %s20, 0
      %s278 = sadd.s32 %s277, %s275
      %s279 = smul.addr %s278, 8
      %s280 = scalar_lea.vmem %s4, %s279
      %p281 = scmp.lt.s32.totalorder %s19, 1
      %s282 = scalar_select %p281, %s19, 1
      %p283 = scmp.lt.s32.totalorder %s20, 2
      %s284 = scalar_select %p283, %s20, 2
      %s285 = smul.addr %s282, 3
      %s286 = sadd.s32 %s284, %s285
      %s287 = smul.addr %s286, 8
      %s288 = scalar_lea.vmem %s0, %s287
      %s289 = sadd.s32 %s20, 1
      %p290 = scmp.lt.s32.totalorder %s19, 1
      %s291 = scalar_select %p290, %s19, 1
      %p292 = scmp.lt.s32.totalorder %s289, 2
      %s293 = scalar_select %p292, %s289, 2
      %s294 = smul.addr %s291, 3
      %s295 = sadd.s32 %s293, %s294
      %s296 = smul.addr %s295, 8
      %s297 = scalar_lea.vmem %s1, %s296
      %s298 = sadd.s32 %s20, 1
      %s299 = sadd.s32 %s20, 2
      %p300 = scmp.lt.s32.totalorder %s19, 1
      %s301 = scalar_select %p300, %s19, 1
      %p302 = scmp.lt.s32.totalorder %s299, 2
      %s303 = scalar_select %p302, %s299, 2
      %s304 = smul.addr %s301, 3
      %s305 = sadd.s32 %s303, %s304
      %s306 = smul.addr %s305, 8
      %s307 = scalar_lea.vmem %s2, %s306
      %s308 = sadd.s32 %s20, 2
      %p309 = scmp.lt.s32.totalorder %s19, 1
      %s310 = scalar_select %p309, %s19, 1
      %s311 = smul.addr %s310, 8
      %s312 = scalar_lea.vmem %s3, %s311
      %p313 = scmp.lt.s32.totalorder %s19, 1
      %s314 = scalar_select %p313, %s19, 1
      %p315 = scmp.lt.s32.totalorder %s20, 0
      %s316 = scalar_select %p315, %s20, 0
      %s317 = sadd.s32 %s316, %s314
      %s318 = smul.addr %s317, 8
      %s319 = scalar_lea.vmem %s4, %s318
      %v320 = vld [vmem:[%s288] sm:$0xff]
      %v321 = vld [vmem:[%s297] sm:$0xff]
      %v322 = vld [vmem:[%s307] sm:$0xff]
      %v323 = vld [vmem:[%s312] sm:$0xff]
      %v324 = vmul.f32 %v320, 0.17677669
      %vm325 = vcmask 261120
      %v327 = vsel %vm325, %v324, 0
      %v330 = vsel %vm325, %v321, 0
      %332 = vmatpush.xpose.msra.mxu0 0.0
      %333 = vmatpush.xpose.msra.mxu0 0.0
      %334 = vmatpush.xpose.msra.mxu0 0.0
      %335 = vmatpush.xpose.msra.mxu0 0.0
      %336 = vmatpush.xpose.msra.mxu0 0.0
      %337 = vmatpush.xpose.msra.mxu0 0.0
      %338 = vmatpush.xpose.msra.mxu0 0.0
      %339 = vmatpush.xpose.msra.mxu0 0.0
      %340 = vmatpush.xpose.msra.mxu0 0.0
      %341 = vmatpush.xpose.msra.mxu0 0.0
      %342 = vmatpush.xpose.msra.mxu0 0.0
      %343 = vmatpush.xpose.msra.mxu0 0.0
      %344 = vmatpush.xpose.msra.mxu0 0.0
      %345 = vmatpush.xpose.msra.mxu0 0.0
      %346 = vmatpush.xpose.msra.mxu0 0.0
      %347 = vmatpush.xpose.msra.mxu0 %v330
      %348 = vmatmul.f32.gmra.mxu0 %v327
      %v349 = vpop.f32.mrf.mxu0
      %v350 = vadd.f32 0.0, %v349
      %351 = vdwg.mxu0
      %vm352 = vcmp.ne.f32.partialorder %v323, 0.0
      %v353 = vsel %vm352, %v350, -1e+09
      %vm354 = vcmask 64512
      %v355 = vsel %vm354, %v353, -inf
      %356 = vmax.xlane.f32.xlu0 %v355
      %v357 = vpop.xlane.xlu0 %356
      %v358 = vsub.f32 %v353, %v357
      %v359 = vmul.f32 %v358, 1.442695
      %v360 = vpow.pop %v359
      %v361 = vsel %vm354, %v360, 0.0
      %362 = vadd.xlane.f32.xlu0 %v361
      %v363 = vpop.xlane.xlu0 %362
      %v365 = vsel %vm354, %v360, 0
      %367 = vmatpush.msra.mxu0 0.0
      %368 = vmatpush.msra.mxu0 0.0
      %369 = vmatpush.msra.mxu0 0.0
      %370 = vmatpush.msra.mxu0 0.0
      %371 = vmatpush.msra.mxu0 0.0
      %372 = vmatpush.msra.mxu0 0.0
      %373 = vmatpush.msra.mxu0 0.0
      %374 = vmatpush.msra.mxu0 0.0
      %375 = vmatpush.msra.mxu0 0.0
      %376 = vmatpush.msra.mxu0 0.0
      %377 = vmatpush.msra.mxu0 0.0
      %378 = vmatpush.msra.mxu0 0.0
      %379 = vmatpush.msra.mxu0 0.0
      %380 = vmatpush.msra.mxu0 0.0
      %381 = vmatpush.msra.mxu0 0.0
      %382 = vmatpush.msra.mxu0 %v322
      %383 = vmatmul.f32.gmra.mxu0 %v365
      %v384 = vpop.f32.mrf.mxu0
      %v385 = vadd.f32 0.0, %v384
      %386 = vdwg.mxu0
      %v387 = vrcp.pop %v363
      %v388 = vmul.f32 %v363, %v387
      %v389 = vsub.f32 1.0, %v388
      %v390 = vmul.f32 %v387, %v389
      %v391 = vadd.f32 %v387, %v390
      %vm392 = vweird.f32 %v363
      %vm393 = vweird.f32 %v387
      %vm394 = vmor %vm392, %vm393
      %v395 = vsel %vm394, %v387, %v391
      %v396 = vand.u32 2147483647, %v363
      %vm397 = vcmp.eq.f32.partialorder %v396, 8.507059e+37
      %v398 = vand.u32 %v363, 2147483648
      %v399 = vor.u32 1.1754944e-38, %v398
      %v400 = vsel %vm397, %v399, %v395
      %v401 = vmul.f32 %v385, %v400
      %402 = vrot.lane.b32.xlu0 %v324, 96
      %v403 = vpop.permute.xlu0 %402
      %404 = vrot.lane.b32.xlu0 %v321, 96
      %v405 = vpop.permute.xlu0 %404
      %v406 = vsel %vm325, %v403, 0
      %v408 = vsel %vm325, %v405, 0
      %410 = vmatpush.xpose.msra.mxu0 0.0
      %411 = vmatpush.xpose.msra.mxu0 0.0
      %412 = vmatpush.xpose.msra.mxu0 0.0
      %413 = vmatpush.xpose.msra.mxu0 0.0
      %414 = vmatpush.xpose.msra.mxu0 0.0
      %415 = vmatpush.xpose.msra.mxu0 0.0
      %416 = vmatpush.xpose.msra.mxu0 0.0
      %417 = vmatpush.xpose.msra.mxu0 0.0
      %418 = vmatpush.xpose.msra.mxu0 0.0
      %419 = vmatpush.xpose.msra.mxu0 0.0
      %420 = vmatpush.xpose.msra.mxu0 0.0
      %421 = vmatpush.xpose.msra.mxu0 0.0
      %422 = vmatpush.xpose.msra.mxu0 0.0
      %423 = vmatpush.xpose.msra.mxu0 0.0
      %424 = vmatpush.xpose.msra.mxu0 0.0
      %425 = vmatpush.xpose.msra.mxu0 %v408
      %426 = vmatmul.f32.gmra.mxu0 %v406
      %v427 = vpop.f32.mrf.mxu0
      %v428 = vadd.f32 0.0, %v427
      %429 = vdwg.mxu0
      %v430 = vsel %vm352, %v428, -1e+09
      %v431 = vsel %vm354, %v430, -inf
      %432 = vmax.xlane.f32.xlu0 %v431
      %v433 = vpop.xlane.xlu0 %432
      %v434 = vsub.f32 %v430, %v433
      %v435 = vmul.f32 %v434, 1.442695
      %v436 = vpow.pop %v435
      %v437 = vsel %vm354, %v436, 0.0
      %438 = vadd.xlane.f32.xlu0 %v437
      %v439 = vpop.xlane.xlu0 %438
      %441 = vrot.lane.b32.xlu0 %v322, 96
      %v442 = vpop.permute.xlu0 %441
      %v445 = vsel %vm354, %v436, 0
      %447 = vmatpush.msra.mxu0 0.0
      %448 = vmatpush.msra.mxu0 0.0
      %449 = vmatpush.msra.mxu0 0.0
      %450 = vmatpush.msra.mxu0 0.0
      %451 = vmatpush.msra.mxu0 0.0
      %452 = vmatpush.msra.mxu0 0.0
      %453 = vmatpush.msra.mxu0 0.0
      %454 = vmatpush.msra.mxu0 0.0
      %455 = vmatpush.msra.mxu0 0.0
      %456 = vmatpush.msra.mxu0 0.0
      %457 = vmatpush.msra.mxu0 0.0
      %458 = vmatpush.msra.mxu0 0.0
      %459 = vmatpush.msra.mxu0 0.0
      %460 = vmatpush.msra.mxu0 0.0
      %461 = vmatpush.msra.mxu0 0.0
      %462 = vmatpush.msra.mxu0 %v442
      %463 = vmatmul.f32.gmra.mxu0 %v445
      %v464 = vpop.f32.mrf.mxu0
      %v465 = vadd.f32 0.0, %v464
      %466 = vdwg.mxu0
      %v467 = vrcp.pop %v439
      %v468 = vmul.f32 %v439, %v467
      %v469 = vsub.f32 1.0, %v468
      %v470 = vmul.f32 %v467, %v469
      %v471 = vadd.f32 %v467, %v470
      %vm472 = vweird.f32 %v439
      %vm473 = vweird.f32 %v467
      %vm474 = vmor %vm472, %vm473
      %v475 = vsel %vm474, %v467, %v471
      %v476 = vand.u32 2147483647, %v439
      %vm477 = vcmp.eq.f32.partialorder %v476, 8.507059e+37
      %v478 = vand.u32 %v439, 2147483648
      %v479 = vor.u32 1.1754944e-38, %v478
      %v480 = vsel %vm477, %v479, %v475
      %v481 = vmul.f32 %v465, %v480
      %482 = vrot.lane.b32.xlu0 %v324, 64
      %v483 = vpop.permute.xlu0 %482
      %484 = vrot.lane.b32.xlu0 %v321, 64
      %v485 = vpop.permute.xlu0 %484
      %v486 = vsel %vm325, %v483, 0
      %v488 = vsel %vm325, %v485, 0
      %490 = vmatpush.xpose.msra.mxu0 0.0
      %491 = vmatpush.xpose.msra.mxu0 0.0
      %492 = vmatpush.xpose.msra.mxu0 0.0
      %493 = vmatpush.xpose.msra.mxu0 0.0
      %494 = vmatpush.xpose.msra.mxu0 0.0
      %495 = vmatpush.xpose.msra.mxu0 0.0
      %496 = vmatpush.xpose.msra.mxu0 0.0
      %497 = vmatpush.xpose.msra.mxu0 0.0
      %498 = vmatpush.xpose.msra.mxu0 0.0
      %499 = vmatpush.xpose.msra.mxu0 0.0
      %500 = vmatpush.xpose.msra.mxu0 0.0
      %501 = vmatpush.xpose.msra.mxu0 0.0
      %502 = vmatpush.xpose.msra.mxu0 0.0
      %503 = vmatpush.xpose.msra.mxu0 0.0
      %504 = vmatpush.xpose.msra.mxu0 0.0
      %505 = vmatpush.xpose.msra.mxu0 %v488
      %506 = vmatmul.f32.gmra.mxu0 %v486
      %v507 = vpop.f32.mrf.mxu0
      %v508 = vadd.f32 0.0, %v507
      %509 = vdwg.mxu0
      %v510 = vsel %vm352, %v508, -1e+09
      %v511 = vsel %vm354, %v510, -inf
      %512 = vmax.xlane.f32.xlu0 %v511
      %v513 = vpop.xlane.xlu0 %512
      %v514 = vsub.f32 %v510, %v513
      %v515 = vmul.f32 %v514, 1.442695
      %v516 = vpow.pop %v515
      %v517 = vsel %vm354, %v516, 0.0
      %518 = vadd.xlane.f32.xlu0 %v517
      %v519 = vpop.xlane.xlu0 %518
      %520 = vrot.lane.b32.xlu0 %v322, 64
      %v521 = vpop.permute.xlu0 %520
      %v524 = vsel %vm354, %v516, 0
      %526 = vmatpush.msra.mxu0 0.0
      %527 = vmatpush.msra.mxu0 0.0
      %528 = vmatpush.msra.mxu0 0.0
      %529 = vmatpush.msra.mxu0 0.0
      %530 = vmatpush.msra.mxu0 0.0
      %531 = vmatpush.msra.mxu0 0.0
      %532 = vmatpush.msra.mxu0 0.0
      %533 = vmatpush.msra.mxu0 0.0
      %534 = vmatpush.msra.mxu0 0.0
      %535 = vmatpush.msra.mxu0 0.0
      %536 = vmatpush.msra.mxu0 0.0
      %537 = vmatpush.msra.mxu0 0.0
      %538 = vmatpush.msra.mxu0 0.0
      %539 = vmatpush.msra.mxu0 0.0
      %540 = vmatpush.msra.mxu0 0.0
      %541 = vmatpush.msra.mxu0 %v521
      %542 = vmatmul.f32.gmra.mxu0 %v524
      %v543 = vpop.f32.mrf.mxu0
      %v544 = vadd.f32 0.0, %v543
      %545 = vdwg.mxu0
      %v546 = vrcp.pop %v519
      %v547 = vmul.f32 %v519, %v546
      %v548 = vsub.f32 1.0, %v547
      %v549 = vmul.f32 %v546, %v548
      %v550 = vadd.f32 %v546, %v549
      %vm551 = vweird.f32 %v519
      %vm552 = vweird.f32 %v546
      %vm553 = vmor %vm551, %vm552
      %v554 = vsel %vm553, %v546, %v550
      %v555 = vand.u32 2147483647, %v519
      %vm556 = vcmp.eq.f32.partialorder %v555, 8.507059e+37
      %v557 = vand.u32 %v519, 2147483648
      %v558 = vor.u32 1.1754944e-38, %v557
      %v559 = vsel %vm556, %v558, %v554
      %v560 = vmul.f32 %v544, %v559
      %561 = vrot.lane.b32.xlu0 %v324, 32
      %v562 = vpop.permute.xlu0 %561
      %563 = vrot.lane.b32.xlu0 %v321, 32
      %v564 = vpop.permute.xlu0 %563
      %v565 = vsel %vm325, %v562, 0
      %v567 = vsel %vm325, %v564, 0
      %569 = vmatpush.xpose.msra.mxu0 0.0
      %570 = vmatpush.xpose.msra.mxu0 0.0
      %571 = vmatpush.xpose.msra.mxu0 0.0
      %572 = vmatpush.xpose.msra.mxu0 0.0
      %573 = vmatpush.xpose.msra.mxu0 0.0
      %574 = vmatpush.xpose.msra.mxu0 0.0
      %575 = vmatpush.xpose.msra.mxu0 0.0
      %576 = vmatpush.xpose.msra.mxu0 0.0
      %577 = vmatpush.xpose.msra.mxu0 0.0
      %578 = vmatpush.xpose.msra.mxu0 0.0
      %579 = vmatpush.xpose.msra.mxu0 0.0
      %580 = vmatpush.xpose.msra.mxu0 0.0
      %581 = vmatpush.xpose.msra.mxu0 0.0
      %582 = vmatpush.xpose.msra.mxu0 0.0
      %583 = vmatpush.xpose.msra.mxu0 0.0
      %584 = vmatpush.xpose.msra.mxu0 %v567
      %585 = vmatmul.f32.gmra.mxu0 %v565
      %v586 = vpop.f32.mrf.mxu0
      %v587 = vadd.f32 0.0, %v586
      %588 = vdwg.mxu0
      %v589 = vsel %vm352, %v587, -1e+09
      %v590 = vsel %vm354, %v589, -inf
      %591 = vmax.xlane.f32.xlu0 %v590
      %v592 = vpop.xlane.xlu0 %591
      %v593 = vsub.f32 %v589, %v592
      %v594 = vmul.f32 %v593, 1.442695
      %v595 = vpow.pop %v594
      %v596 = vsel %vm354, %v595, 0.0
      %597 = vadd.xlane.f32.xlu0 %v596
      %v598 = vpop.xlane.xlu0 %597
      %599 = vrot.lane.b32.xlu0 %v322, 32
      %v600 = vpop.permute.xlu0 %599
      %v603 = vsel %vm354, %v595, 0
      %605 = vmatpush.msra.mxu0 0.0
      %606 = vmatpush.msra.mxu0 0.0
      %607 = vmatpush.msra.mxu0 0.0
      %608 = vmatpush.msra.mxu0 0.0
      %609 = vmatpush.msra.mxu0 0.0
      %610 = vmatpush.msra.mxu0 0.0
      %611 = vmatpush.msra.mxu0 0.0
      %612 = vmatpush.msra.mxu0 0.0
      %613 = vmatpush.msra.mxu0 0.0
      %614 = vmatpush.msra.mxu0 0.0
      %615 = vmatpush.msra.mxu0 0.0
      %616 = vmatpush.msra.mxu0 0.0
      %617 = vmatpush.msra.mxu0 0.0
      %618 = vmatpush.msra.mxu0 0.0
      %619 = vmatpush.msra.mxu0 0.0
      %620 = vmatpush.msra.mxu0 %v600
      %621 = vmatmul.f32.gmra.mxu0 %v603
      %v622 = vpop.f32.mrf.mxu0
      %v623 = vadd.f32 0.0, %v622
      %624 = vdwg.mxu0
      %v625 = vrcp.pop %v598
      %v626 = vmul.f32 %v598, %v625
      %v627 = vsub.f32 1.0, %v626
      %v628 = vmul.f32 %v625, %v627
      %v629 = vadd.f32 %v625, %v628
      %vm630 = vweird.f32 %v598
      %vm631 = vweird.f32 %v625
      %vm632 = vmor %vm630, %vm631
      %v633 = vsel %vm632, %v625, %v629
      %v634 = vand.u32 2147483647, %v598
      %vm635 = vcmp.eq.f32.partialorder %v634, 8.507059e+37
      %v636 = vand.u32 %v598, 2147483648
      %v637 = vor.u32 1.1754944e-38, %v636
      %v638 = vsel %vm635, %v637, %v633
      %v639 = vmul.f32 %v623, %v638
      %641 = vrot.lane.b32.xlu0 %v481, 32
      %v642 = vpop.permute.xlu0 %641
      %645 = vrot.lane.b32.xlu0 %v560, 64
      %v646 = vpop.permute.xlu0 %645
      %649 = vrot.lane.b32.xlu0 %v639, 96
      %v650 = vpop.permute.xlu0 %649
      %v652 = vsel %vm325, %v401, %v642
      %vm653 = vcmask 523264
      %v654 = vsel %vm653, %v652, %v646
      %vm655 = vcmask 785408
      %v656 = vsel %vm655, %v654, %v650
      %657 = vst [vmem:[%s319] sm:$0xff] %v656
      %p658 = scmp.lt.s32.totalorder %s19, 1
      %s659 = scalar_select %p658, %s19, 1
      %p660 = scmp.lt.s32.totalorder %s20, 0
      %s661 = scalar_select %p660, %s20, 0
      %s662 = sadd.s32 %s661, %s659
      %s663 = smul.addr %s662, 8
      %s664 = scalar_lea.vmem %s4, %s663
      // Predicated region
      $region37: #{decoder_layer.9} parent=35 // pred_check
        %p665 = pneg %p161
      $region38: #{decoder_layer.9} parent=35 // pred_check_branch
        %667 = sbr.rel (%p665) target = $region40
      $region39: #{decoder_layer.9} parent=35 // pred_region
        _
      $region40: #{decoder_layer.9} parent=35 // pred_fallthru
        _
    $region36: #{decoder_layer.9} parent=5 // pred_fallthru
      _
    %p668 = scmp.le.s32.totalorder 2, %s10
    // Predicated region
    $region41: #{decoder_layer.9} parent=5 // pred_check
      %p669 = pneg %p668
    $region42: #{decoder_layer.9} parent=5 // pred_check_branch
      %671 = sbr.rel (%p669) target = $region44
    $region43: #{decoder_layer.9} parent=5 // pred_region
      %s672 = ssub.s32 %s10, 2
      // Predicated region
      $region45: #{decoder_layer.9} parent=43 // pred_check
        %p673 = pneg %p167
      $region46: #{decoder_layer.9} parent=43 // pred_check_branch
        %675 = sbr.rel (%p673) target = $region48
      $region47: #{decoder_layer.9} parent=43 // pred_region
        %p676 = scmp.lt.s32.totalorder %s21, 1
        %s677 = scalar_select %p676, %s21, 1
        %p678 = scmp.lt.s32.totalorder %s22, 0
        %s679 = scalar_select %p678, %s22, 0
        %s680 = sadd.s32 %s679, %s677
        %s681 = smul.addr %s680, 8
        %s682 = scalar_lea.vmem %s4, %s681
      $region48: #{decoder_layer.9} parent=43 // pred_fallthru
        _
    $region44: #{decoder_layer.9} parent=5 // pred_fallthru
      _
  $region6: #{decoder_layer.9} parent=0 // loop_footer
    %s14 = sadd.s32 1, %s10
  $region7: #{decoder_layer.9} parent=0 // loop_footer_branch
    %9 = sbr.rel target = $region3
  $region8: #{decoder_layer.9} parent=0 // loop_exit
    _

// kernel: decoder_layer.12
$region0: #{decoder_layer.12}
  #allocation0 [shape = 'u32[]', space=smem, size = 0x4, offset = 0x4, fixed_abs, tag = 'smem constant byte address 0x4 - core index']
  #allocation1 [shape = 'u32[72,128]{1,0:T(1,128)}', space=vmem, size = 0x9000, scoped, tag = 'internal scratch']
  #allocation2 [shape = 'f32[32,256]{1,0:T(8,128)}', space=vmem, size = 0x8000, scoped, tag = 'scratch operand']
  %s0 = inlined_call_operand.vmem [shape: f32[32,128], index: 0, kind: input, shape index: {}]
  %s1 = inlined_call_operand.vmem [shape: f32[128,256], index: 1, kind: input, shape index: {}]
  %s2 = inlined_call_operand.vmem [shape: f32[1,256], index: 2, kind: input, shape index: {}]
  %s3 = inlined_call_operand.vmem [shape: f32[32,256], index: 3, kind: output, shape index: {}]
  %s4 = sld [smem:[#allocation0]]
  $region30: #{decoder_layer.12} parent=0
    _
  %s6 = ssub.s32 1, %s4
  %s7 = scalar_select 0, %s6, %s4
  // Predicated region
  $region2: #{decoder_layer.12} parent=0 // pred_check
    _
  $region3: #{decoder_layer.12} parent=0 // pred_check_branch
    %9 = sbr.rel (0) target = $region5
  $region4: #{decoder_layer.12} parent=0 // pred_region
    _
  $region5: #{decoder_layer.12} parent=0 // pred_fallthru
    _
  // Predicated region
  $region6: #{decoder_layer.12} parent=0 // pred_check
    _
  $region7: #{decoder_layer.12} parent=0 // pred_check_branch
    %11 = sbr.rel (0) target = $region9
  $region8: #{decoder_layer.12} parent=0 // pred_region
    _
  $region9: #{decoder_layer.12} parent=0 // pred_fallthru
    _
  // Predicated region
  $region10: #{decoder_layer.12} parent=0 // pred_check
    _
  $region11: #{decoder_layer.12} parent=0 // pred_check_branch
    %13 = sbr.rel (0) target = $region13
  $region12: #{decoder_layer.12} parent=0 // pred_region
    _
  $region13: #{decoder_layer.12} parent=0 // pred_fallthru
    _
  %p14 = scmp.eq.s32.totalorder 0, 0
  // Predicated region
  $region14: #{decoder_layer.12} parent=0 // pred_check
    %p15 = pneg %p14
  $region15: #{decoder_layer.12} parent=0 // pred_check_branch
    %17 = sbr.rel (%p15) target = $region17
  $region16: #{decoder_layer.12} parent=0 // pred_region
    %18 = vst [vmem:[#allocation2] sm:$0xff] 0.0
    %19 = vst [vmem:[#allocation2 + $0x8] sm:$0xff] 0.0
    %20 = vst [vmem:[#allocation2 + $0x10] sm:$0xff] 0.0
    %21 = vst [vmem:[#allocation2 + $0x18] sm:$0xff] 0.0
    %22 = vst [vmem:[#allocation2 + $0x20] sm:$0xff] 0.0
    %23 = vst [vmem:[#allocation2 + $0x28] sm:$0xff] 0.0
    %24 = vst [vmem:[#allocation2 + $0x30] sm:$0xff] 0.0
    %25 = vst [vmem:[#allocation2 + $0x38] sm:$0xff] 0.0
  $region17: #{decoder_layer.12} parent=0 // pred_fallthru
    _
  %v26 = vld [vmem:[#allocation2] sm:$0xff]
  %v27 = vld [vmem:[#allocation2 + $0x8] sm:$0xff]
  %v28 = vld [vmem:[#allocation2 + $0x10] sm:$0xff]
  %v29 = vld [vmem:[#allocation2 + $0x18] sm:$0xff]
  %v30 = vld [vmem:[#allocation2 + $0x20] sm:$0xff]
  %v31 = vld [vmem:[#allocation2 + $0x28] sm:$0xff]
  %v32 = vld [vmem:[#allocation2 + $0x30] sm:$0xff]
  %v33 = vld [vmem:[#allocation2 + $0x38] sm:$0xff]
  %v34 = vld [vmem:[%s0] sm:$0xff]
  %v35 = vld [vmem:[%s0 + $0x8] sm:$0xff]
  %v36 = vld [vmem:[%s0 + $0x10] sm:$0xff]
  %v37 = vld [vmem:[%s0 + $0x18] sm:$0xff]
  %v38 = vld [vmem:[%s1] sm:$0xff]
  %v39 = vld [vmem:[%s1 + $0x8] sm:$0xff]
  %v40 = vld [vmem:[%s1 + $0x10] sm:$0xff]
  %v41 = vld [vmem:[%s1 + $0x18] sm:$0xff]
  %v42 = vld [vmem:[%s1 + $0x20] sm:$0xff]
  %v43 = vld [vmem:[%s1 + $0x28] sm:$0xff]
  %v44 = vld [vmem:[%s1 + $0x30] sm:$0xff]
  %v45 = vld [vmem:[%s1 + $0x38] sm:$0xff]
  %v46 = vld [vmem:[%s1 + $0x40] sm:$0xff]
  %v47 = vld [vmem:[%s1 + $0x48] sm:$0xff]
  %v48 = vld [vmem:[%s1 + $0x50] sm:$0xff]
  %v49 = vld [vmem:[%s1 + $0x58] sm:$0xff]
  %v50 = vld [vmem:[%s1 + $0x60] sm:$0xff]
  %v51 = vld [vmem:[%s1 + $0x68] sm:$0xff]
  %v52 = vld [vmem:[%s1 + $0x70] sm:$0xff]
  %v53 = vld [vmem:[%s1 + $0x78] sm:$0xff]
  %v54 = vld [vmem:[%s1 + $0x80] sm:$0xff]
  %v55 = vld [vmem:[%s1 + $0x88] sm:$0xff]
  %v56 = vld [vmem:[%s1 + $0x90] sm:$0xff]
  %v57 = vld [vmem:[%s1 + $0x98] sm:$0xff]
  %v58 = vld [vmem:[%s1 + $0xa0] sm:$0xff]
  %v59 = vld [vmem:[%s1 + $0xa8] sm:$0xff]
  %v60 = vld [vmem:[%s1 + $0xb0] sm:$0xff]
  %v61 = vld [vmem:[%s1 + $0xb8] sm:$0xff]
  %v62 = vld [vmem:[%s1 + $0xc0] sm:$0xff]
  %v63 = vld [vmem:[%s1 + $0xc8] sm:$0xff]
  %v64 = vld [vmem:[%s1 + $0xd0] sm:$0xff]
  %v65 = vld [vmem:[%s1 + $0xd8] sm:$0xff]
  %v66 = vld [vmem:[%s1 + $0xe0] sm:$0xff]
  %v67 = vld [vmem:[%s1 + $0xe8] sm:$0xff]
  %v68 = vld [vmem:[%s1 + $0xf0] sm:$0xff]
  %v69 = vld [vmem:[%s1 + $0xf8] sm:$0xff]
  %70 = vmatpush.msra.mxu0 %v68
  %71 = vmatpush.msra.mxu0 %v66
  %72 = vmatpush.msra.mxu0 %v64
  %73 = vmatpush.msra.mxu0 %v62
  %74 = vmatpush.msra.mxu0 %v60
  %75 = vmatpush.msra.mxu0 %v58
  %76 = vmatpush.msra.mxu0 %v56
  %77 = vmatpush.msra.mxu0 %v54
  %78 = vmatpush.msra.mxu0 %v52
  %79 = vmatpush.msra.mxu0 %v50
  %80 = vmatpush.msra.mxu0 %v48
  %81 = vmatpush.msra.mxu0 %v46
  %82 = vmatpush.msra.mxu0 %v44
  %83 = vmatpush.msra.mxu0 %v42
  %84 = vmatpush.msra.mxu0 %v40
  %85 = vmatpush.msra.mxu0 %v38
  %86 = vmatmul.f32.gmra.mxu0 %v34
  %v87 = vpop.f32.mrf.mxu0
  %v88 = vadd.f32 0.0, %v87
  %89 = vmatmul.f32.gmra.mxu0 %v35
  %v90 = vpop.f32.mrf.mxu0
  %v91 = vadd.f32 0.0, %v90
  %92 = vmatmul.f32.gmra.mxu0 %v36
  %v93 = vpop.f32.mrf.mxu0
  %v94 = vadd.f32 0.0, %v93
  %95 = vmatmul.f32.gmra.mxu0 %v37
  %v96 = vpop.f32.mrf.mxu0
  %v97 = vadd.f32 0.0, %v96
  %98 = vdwg.mxu0
  %99 = vmatpush.msra.mxu0 %v69
  %100 = vmatpush.msra.mxu0 %v67
  %101 = vmatpush.msra.mxu0 %v65
  %102 = vmatpush.msra.mxu0 %v63
  %103 = vmatpush.msra.mxu0 %v61
  %104 = vmatpush.msra.mxu0 %v59
  %105 = vmatpush.msra.mxu0 %v57
  %106 = vmatpush.msra.mxu0 %v55
  %107 = vmatpush.msra.mxu0 %v53
  %108 = vmatpush.msra.mxu0 %v51
  %109 = vmatpush.msra.mxu0 %v49
  %110 = vmatpush.msra.mxu0 %v47
  %111 = vmatpush.msra.mxu0 %v45
  %112 = vmatpush.msra.mxu0 %v43
  %113 = vmatpush.msra.mxu0 %v41
  %114 = vmatpush.msra.mxu0 %v39
  %115 = vmatmul.f32.gmra.mxu0 %v34
  %v116 = vpop.f32.mrf.mxu0
  %v117 = vadd.f32 0.0, %v116
  %118 = vmatmul.f32.gmra.mxu0 %v35
  %v119 = vpop.f32.mrf.mxu0
  %v120 = vadd.f32 0.0, %v119
  %121 = vmatmul.f32.gmra.mxu0 %v36
  %v122 = vpop.f32.mrf.mxu0
  %v123 = vadd.f32 0.0, %v122
  %124 = vmatmul.f32.gmra.mxu0 %v37
  %v125 = vpop.f32.mrf.mxu0
  %v126 = vadd.f32 0.0, %v125
  %127 = vdwg.mxu0
  %v128 = vadd.f32 %v26, %v88
  %v129 = vadd.f32 %v27, %v117
  %v130 = vadd.f32 %v28, %v91
  %v131 = vadd.f32 %v29, %v120
  %v132 = vadd.f32 %v30, %v94
  %v133 = vadd.f32 %v31, %v123
  %v134 = vadd.f32 %v32, %v97
  %v135 = vadd.f32 %v33, %v126
  %136 = vst [vmem:[#allocation2] sm:$0xff] %v128
  %137 = vst [vmem:[#allocation2 + $0x8] sm:$0xff] %v129
  %138 = vst [vmem:[#allocation2 + $0x10] sm:$0xff] %v130
  %139 = vst [vmem:[#allocation2 + $0x18] sm:$0xff] %v131
  %140 = vst [vmem:[#allocation2 + $0x20] sm:$0xff] %v132
  %141 = vst [vmem:[#allocation2 + $0x28] sm:$0xff] %v133
  %142 = vst [vmem:[#allocation2 + $0x30] sm:$0xff] %v134
  %143 = vst [vmem:[#allocation2 + $0x38] sm:$0xff] %v135
  // Predicated region
  $region18: #{decoder_layer.12} parent=0 // pred_check
    %p144 = pneg %p14
  $region19: #{decoder_layer.12} parent=0 // pred_check_branch
    %146 = sbr.rel (%p144) target = $region21
  $region20: #{decoder_layer.12} parent=0 // pred_region
    %v147 = vld [vmem:[#allocation2] sm:$0xff]
    %v148 = vld [vmem:[#allocation2 + $0x8] sm:$0xff]
    %v149 = vld [vmem:[#allocation2 + $0x10] sm:$0xff]
    %v150 = vld [vmem:[#allocation2 + $0x18] sm:$0xff]
    %v151 = vld [vmem:[#allocation2 + $0x20] sm:$0xff]
    %v152 = vld [vmem:[#allocation2 + $0x28] sm:$0xff]
    %v153 = vld [vmem:[#allocation2 + $0x30] sm:$0xff]
    %v154 = vld [vmem:[#allocation2 + $0x38] sm:$0xff]
    %v155 = vld [vmem:[%s2] sm:$0x3]
    %v157 = vperm.slane %v155, 0
    %v158 = vperm.slane %v155, 1
    %v161 = vadd.f32 %v147, %v157
    %v162 = vadd.f32 %v148, %v158
    %v163 = vadd.f32 %v149, %v157
    %v164 = vadd.f32 %v150, %v158
    %v165 = vadd.f32 %v151, %v157
    %v166 = vadd.f32 %v152, %v158
    %v167 = vadd.f32 %v153, %v157
    %v168 = vadd.f32 %v154, %v158
    %169 = vst [vmem:[%s3] sm:$0xff] %v161
    %170 = vst [vmem:[%s3 + $0x8] sm:$0xff] %v162
    %171 = vst [vmem:[%s3 + $0x10] sm:$0xff] %v163
    %172 = vst [vmem:[%s3 + $0x18] sm:$0xff] %v164
    %173 = vst [vmem:[%s3 + $0x20] sm:$0xff] %v165
    %174 = vst [vmem:[%s3 + $0x28] sm:$0xff] %v166
    %175 = vst [vmem:[%s3 + $0x30] sm:$0xff] %v167
    %176 = vst [vmem:[%s3 + $0x38] sm:$0xff] %v168
  $region21: #{decoder_layer.12} parent=0 // pred_fallthru
    _
  // Predicated region
  $region22: #{decoder_layer.12} parent=0 // pred_check
    _
  $region23: #{decoder_layer.12} parent=0 // pred_check_branch
    %178 = sbr.rel (0) target = $region25
  $region24: #{decoder_layer.12} parent=0 // pred_region
    _
  $region25: #{decoder_layer.12} parent=0 // pred_fallthru
    _
  // Predicated region
  $region26: #{decoder_layer.12} parent=0 // pred_check
    _
  $region27: #{decoder_layer.12} parent=0 // pred_check_branch
    %180 = sbr.rel (0) target = $region29
  $region28: #{decoder_layer.12} parent=0 // pred_region
    _
  $region29: #{decoder_layer.12} parent=0 // pred_fallthru
    _

// kernel: decoder_layer.15
$region0: #{decoder_layer.15}
  #allocation0 [shape = 'u32[]', space=smem, size = 0x4, offset = 0x4, fixed_abs, tag = 'smem constant byte address 0x4 - core index']
  #allocation1 [shape = 'u32[72,128]{1,0:T(1,128)}', space=vmem, size = 0x9000, scoped, tag = 'internal scratch']
  #allocation2 [shape = 'f32[16,128]{1,0:T(8,128)}', space=vmem, size = 0x2000, scoped, tag = 'scratch operand']
  #allocation3 [shape = 'f32[16,128]{1,0:T(8,128)}', space=vmem, size = 0x2000, scoped, tag = 'scratch operand']
  %s0 = inlined_call_operand.vmem [shape: f32[16,128], index: 0, kind: input, shape index: {}]
  %s1 = inlined_call_operand.vmem [shape: f32[1,128], index: 1, kind: input, shape index: {}]
  %s2 = inlined_call_operand.vmem [shape: f32[1,128], index: 2, kind: input, shape index: {}]
  %s3 = inlined_call_operand.vmem [shape: f32[128,256], index: 3, kind: input, shape index: {}]
  %s4 = inlined_call_operand.vmem [shape: f32[1,256], index: 4, kind: input, shape index: {}]
  %s5 = inlined_call_operand.vmem [shape: f32[256,128], index: 5, kind: input, shape index: {}]
  %s6 = inlined_call_operand.vmem [shape: f32[1,128], index: 6, kind: input, shape index: {}]
  %s7 = inlined_call_operand.hbm [shape: f32[16,128], index: 7, kind: output, shape index: {}]
  %s8 = sld [smem:[#allocation0]]
  $region107: #{decoder_layer.15} parent=0
    _
  %s10 = ssub.s32 1, %s8
  %s11 = scalar_select 0, %s10, %s8
  $region1: #{decoder_layer.15} parent=0
    #allocation4 [shape = 'u8[131072]{0}', space=vmem, size = 0x20000, scoped, tag = 'input window, operand 3']
    #allocation5 [shape = 'u8[8192]{0}', space=vmem, size = 0x2000, scoped, tag = 'output window, operand 0, single buffered']
    #allocation6 [shape = 's32[2]{0}', space=sflag, size = 0x8, scoped, tag = 'scoped memory for decoder_layer.15']
    %12 = vsyncpa [#allocation6], 0
    loop: start=0, step=1, limit=4
    $region2: #{decoder_layer.15} parent=1 // loop_pre_header
      _
    $region3: #{decoder_layer.15} parent=1 // loop_header
      %s14 = sphi 0, %s18
      %p15 = scmp.ge.s32.totalorder %s14, 4
      %s21 = sphi 0, %s33
      %s22 = sphi 0, %s29
      %s23 = sphi 0, %s21
      %s24 = sphi 0, %s22
      %s25 = sphi 0, %s23
      %s26 = sphi 0, %s24
      %s36 = sphi 0, %s38
      %s39 = sphi 0, %s36
      %s40 = sphi 0, %s39
      %s56 = sphi 0, %s40
      %s60 = sphi 0, %s60
      %s62 = sphi 0, %s60
      %s63 = sphi 0, %s62
      %s77 = sphi 0, %s63
      %s81 = sphi 0, %s81
      %s83 = sphi 0, %s81
      %s84 = sphi 0, %s83
      %s98 = sphi 0, %s84
      %s104 = sphi 0, %s106
      %s107 = sphi 0, %s104
      %s108 = sphi 0, %s107
      %s124 = sphi 0, %s108
      %s130 = sphi 0, %s132
      %s133 = sphi 0, %s130
      %s134 = sphi 0, %s133
      %s150 = sphi 0, %s134
      %s156 = sphi 0, %s158
      %s159 = sphi 0, %s156
      %s160 = sphi 0, %s159
      %s176 = sphi 0, %s160
      %s180 = sphi 0, %s180
      %s182 = sphi 0, %s180
      %s183 = sphi 0, %s182
      %s197 = sphi 0, %s183
      %s203 = sphi 0, %s205
      %s206 = sphi 0, %s203
      %s207 = sphi 0, %s206
      %s223 = sphi 0, %s207
    $region4: #{decoder_layer.15} parent=1 // loop_header_branch
      %17 = sbr.rel (%p15) target = $region8
    $region5: #{decoder_layer.15} parent=1 // loop_body
      %s19 = ssub.s32 %s14, 1
      %s20 = ssub.s32 %s14, 2
      %s27 = sadd.s32 1, %s22
      %p28 = scmp.ge.s32.totalorder %s27, 2
      %s29 = scalar_select %p28, 0, %s27
      %s30 = sadd.s32 1, %s21
      %s31 = scalar_select %p28, %s30, %s21
      %p32 = scmp.ge.s32.totalorder %s31, 1
      %s33 = scalar_select %p32, 0, %s31
      %s34 = ssub.s32 %s21, %s33
      %p35 = scmp.eq.s32.totalorder %s34, 0
      %s37 = sadd.s32 %s36, 1
      %s38 = scalar_select %p35, %s36, %s37
      %p41 = pneg %p35
      %p42 = scmp.eq.s32.totalorder %s14, 1
      %p43 = por %p41, %p42
      %p44 = scmp.ne.s32.totalorder %s36, %s39
      %p45 = scmp.eq.s32.totalorder %s14, 0
      %p46 = por %p44, %p45
      %p47 = scmp.ne.s32.totalorder %s36, %s39
      %p48 = scmp.eq.s32.totalorder %s19, 1
      %p49 = por %p47, %p48
      %p50 = scmp.ne.s32.totalorder %s39, %s40
      %p51 = scmp.eq.s32.totalorder %s19, 0
      %p52 = por %p50, %p51
      %p53 = scmp.ne.s32.totalorder %s39, %s40
      %p54 = scmp.eq.s32.totalorder %s20, 1
      %p55 = por %p53, %p54
      %p57 = scmp.ne.s32.totalorder %s40, %s56
      %p58 = scmp.eq.s32.totalorder %s20, 0
      %p59 = por %p57, %p58
      %s61 = sadd.s32 %s60, 1
      %p64 = scmp.eq.s32.totalorder %s14, 1
      %p65 = scmp.ne.s32.totalorder %s60, %s62
      %p66 = scmp.eq.s32.totalorder %s14, 0
      %p67 = por %p65, %p66
      %p68 = scmp.ne.s32.totalorder %s60, %s62
      %p69 = scmp.eq.s32.totalorder %s19, 1
      %p70 = por %p68, %p69
      %p71 = scmp.ne.s32.totalorder %s62, %s63
      %p72 = scmp.eq.s32.totalorder %s19, 0
      %p73 = por %p71, %p72
      %p74 = scmp.ne.s32.totalorder %s62, %s63
      %p75 = scmp.eq.s32.totalorder %s20, 1
      %p76 = por %p74, %p75
      %p78 = scmp.ne.s32.totalorder %s63, %s77
      %p79 = scmp.eq.s32.totalorder %s20, 0
      %p80 = por %p78, %p79
      %s82 = sadd.s32 %s81, 1
      %p85 = scmp.eq.s32.totalorder %s14, 1
      %p86 = scmp.ne.s32.totalorder %s81, %s83
      %p87 = scmp.eq.s32.totalorder %s14, 0
      %p88 = por %p86, %p87
      %p89 = scmp.ne.s32.totalorder %s81, %s83
      %p90 = scmp.eq.s32.totalorder %s19, 1
      %p91 = por %p89, %p90
      %p92 = scmp.ne.s32.totalorder %s83, %s84
      %p93 = scmp.eq.s32.totalorder %s19, 0
      %p94 = por %p92, %p93
      %p95 = scmp.ne.s32.totalorder %s83, %s84
      %p96 = scmp.eq.s32.totalorder %s20, 1
      %p97 = por %p95, %p96
      %p99 = scmp.ne.s32.totalorder %s84, %s98
      %p100 = scmp.eq.s32.totalorder %s20, 0
      %p101 = por %p99, %p100
      %s102 = ssub.s32 %s22, %s29
      %p103 = scmp.eq.s32.totalorder %s102, 0
      %s105 = sadd.s32 %s104, 1
      %s106 = scalar_select %p103, %s104, %s105
      %p109 = pneg %p103
      %p110 = scmp.eq.s32.totalorder %s14, 1
      %p111 = por %p109, %p110
      %p112 = scmp.ne.s32.totalorder %s104, %s107
      %p113 = scmp.eq.s32.totalorder %s14, 0
      %p114 = por %p112, %p113
      %p115 = scmp.ne.s32.totalorder %s104, %s107
      %p116 = scmp.eq.s32.totalorder %s19, 1
      %p117 = por %p115, %p116
      %p118 = scmp.ne.s32.totalorder %s107, %s108
      %p119 = scmp.eq.s32.totalorder %s19, 0
      %p120 = por %p118, %p119
      %p121 = scmp.ne.s32.totalorder %s107, %s108
      %p122 = scmp.eq.s32.totalorder %s20, 1
      %p123 = por %p121, %p122
      %p125 = scmp.ne.s32.totalorder %s108, %s124
      %p126 = scmp.eq.s32.totalorder %s20, 0
      %p127 = por %p125, %p126
      %s128 = ssub.s32 %s22, %s29
      %p129 = scmp.eq.s32.totalorder %s128, 0
      %s131 = sadd.s32 %s130, 1
      %s132 = scalar_select %p129, %s130, %s131
      %p135 = pneg %p129
      %p136 = scmp.eq.s32.totalorder %s14, 1
      %p137 = por %p135, %p136
      %p138 = scmp.ne.s32.totalorder %s130, %s133
      %p139 = scmp.eq.s32.totalorder %s14, 0
      %p140 = por %p138, %p139
      %p141 = scmp.ne.s32.totalorder %s130, %s133
      %p142 = scmp.eq.s32.totalorder %s19, 1
      %p143 = por %p141, %p142
      %p144 = scmp.ne.s32.totalorder %s133, %s134
      %p145 = scmp.eq.s32.totalorder %s19, 0
      %p146 = por %p144, %p145
      %p147 = scmp.ne.s32.totalorder %s133, %s134
      %p148 = scmp.eq.s32.totalorder %s20, 1
      %p149 = por %p147, %p148
      %p151 = scmp.ne.s32.totalorder %s134, %s150
      %p152 = scmp.eq.s32.totalorder %s20, 0
      %p153 = por %p151, %p152
      %s154 = ssub.s32 %s22, %s29
      %p155 = scmp.eq.s32.totalorder %s154, 0
      %s157 = sadd.s32 %s156, 1
      %s158 = scalar_select %p155, %s156, %s157
      %p161 = pneg %p155
      %p162 = scmp.eq.s32.totalorder %s14, 1
      %p163 = por %p161, %p162
      %p164 = scmp.ne.s32.totalorder %s156, %s159
      %p165 = scmp.eq.s32.totalorder %s14, 0
      %p166 = por %p164, %p165
      %p167 = scmp.ne.s32.totalorder %s156, %s159
      %p168 = scmp.eq.s32.totalorder %s19, 1
      %p169 = por %p167, %p168
      %p170 = scmp.ne.s32.totalorder %s159, %s160
      %p171 = scmp.eq.s32.totalorder %s19, 0
      %p172 = por %p170, %p171
      %p173 = scmp.ne.s32.totalorder %s159, %s160
      %p174 = scmp.eq.s32.totalorder %s20, 1
      %p175 = por %p173, %p174
      %p177 = scmp.ne.s32.totalorder %s160, %s176
      %p178 = scmp.eq.s32.totalorder %s20, 0
      %p179 = por %p177, %p178
      %s181 = sadd.s32 %s180, 1
      %p184 = scmp.eq.s32.totalorder %s14, 1
      %p185 = scmp.ne.s32.totalorder %s180, %s182
      %p186 = scmp.eq.s32.totalorder %s14, 0
      %p187 = por %p185, %p186
      %p188 = scmp.ne.s32.totalorder %s180, %s182
      %p189 = scmp.eq.s32.totalorder %s19, 1
      %p190 = por %p188, %p189
      %p191 = scmp.ne.s32.totalorder %s182, %s183
      %p192 = scmp.eq.s32.totalorder %s19, 0
      %p193 = por %p191, %p192
      %p194 = scmp.ne.s32.totalorder %s182, %s183
      %p195 = scmp.eq.s32.totalorder %s20, 1
      %p196 = por %p194, %p195
      %p198 = scmp.ne.s32.totalorder %s183, %s197
      %p199 = scmp.eq.s32.totalorder %s20, 0
      %p200 = por %p198, %p199
      %s201 = ssub.s32 %s21, %s33
      %p202 = scmp.eq.s32.totalorder %s201, 0
      %s204 = sadd.s32 %s203, 1
      %s205 = scalar_select %p202, %s203, %s204
      %p208 = pneg %p202
      %p209 = scmp.eq.s32.totalorder %s14, 1
      %p210 = por %p208, %p209
      %p211 = scmp.ne.s32.totalorder %s203, %s206
      %p212 = scmp.eq.s32.totalorder %s14, 0
      %p213 = por %p211, %p212
      %p214 = scmp.ne.s32.totalorder %s203, %s206
      %p215 = scmp.eq.s32.totalorder %s19, 1
      %p216 = por %p214, %p215
      %p217 = scmp.ne.s32.totalorder %s206, %s207
      %p218 = scmp.eq.s32.totalorder %s19, 0
      %p219 = por %p217, %p218
      %p220 = scmp.ne.s32.totalorder %s206, %s207
      %p221 = scmp.eq.s32.totalorder %s20, 1
      %p222 = por %p220, %p221
      %p224 = scmp.ne.s32.totalorder %s207, %s223
      %p225 = scmp.eq.s32.totalorder %s20, 0
      %p226 = por %p224, %p225
      %p227 = scmp.le.s32.totalorder 1, %s14
      %p228 = scmp.lt.s32.totalorder %s14, 3
      %p229 = pnand %p227, %p228
      %p230 = pneg %p229
      // Predicated region
      $region9: #{decoder_layer.15} parent=5 // pred_check
        _
      $region10: #{decoder_layer.15} parent=5 // pred_check_branch
        %232 = sbr.rel (%p229) target = $region12
      $region11: #{decoder_layer.15} parent=5 // pred_region
        %s233 = ssub.s32 %s14, 1
        // Predicated region
        $region13: #{decoder_layer.15} parent=11 // pred_check
          %p234 = pneg %p52
        $region14: #{decoder_layer.15} parent=11 // pred_check_branch
          %236 = sbr.rel (%p234) target = $region16
        $region15: #{decoder_layer.15} parent=11 // pred_region
          %s237 = smul.u32 2, %s23
          %p238 = scmp.lt.s32.totalorder %s237, 1
          %s239 = scalar_select %p238, %s237, 1
          %s240 = smul.addr %s239, 8
          %s241 = scalar_lea.vmem %s0, %s240
          %s242 = smul.u32 2, %s23
        $region16: #{decoder_layer.15} parent=11 // pred_fallthru
          _
        // Predicated region
        $region17: #{decoder_layer.15} parent=11 // pred_check
          %p243 = pneg %p73
        $region18: #{decoder_layer.15} parent=11 // pred_check_branch
          %245 = sbr.rel (%p243) target = $region20
        $region19: #{decoder_layer.15} parent=11 // pred_region
          _
        $region20: #{decoder_layer.15} parent=11 // pred_fallthru
          _
        // Predicated region
        $region21: #{decoder_layer.15} parent=11 // pred_check
          %p246 = pneg %p94
        $region22: #{decoder_layer.15} parent=11 // pred_check_branch
          %248 = sbr.rel (%p246) target = $region24
        $region23: #{decoder_layer.15} parent=11 // pred_region
          _
        $region24: #{decoder_layer.15} parent=11 // pred_fallthru
          _
        // Predicated region
        $region25: #{decoder_layer.15} parent=11 // pred_check
          %p249 = pneg %p193
        $region26: #{decoder_layer.15} parent=11 // pred_check_branch
          %251 = sbr.rel (%p249) target = $region28
        $region27: #{decoder_layer.15} parent=11 // pred_region
          _
        $region28: #{decoder_layer.15} parent=11 // pred_fallthru
          _
      $region12: #{decoder_layer.15} parent=5 // pred_fallthru
        _
      %p252 = scmp.lt.s32.totalorder %s14, 2
      // Predicated region
      $region29: #{decoder_layer.15} parent=5 // pred_check
        %p253 = pneg %p252
      $region30: #{decoder_layer.15} parent=5 // pred_check_branch
        %255 = sbr.rel (%p253) target = $region32
      $region31: #{decoder_layer.15} parent=5 // pred_region
        // Predicated region
        $region33: #{decoder_layer.15} parent=31 // pred_check
          %p256 = pneg %p114
        $region34: #{decoder_layer.15} parent=31 // pred_check_branch
          %258 = sbr.rel (%p256) target = $region36
        $region35: #{decoder_layer.15} parent=31 // pred_region
          %s259 = sand.u32 %s104, 1
          %s260 = sand.u32 %s104, 1
          %s261 = smul.addr %s260, 128
          %s262 = scalar_lea.vmem [#allocation4], %s261
          %s263 = smul.addr %s22, 8
          %s264 = scalar_lea.vmem %s3, %s263
          // Predicated region
          $region37: #{decoder_layer.15} parent=35 // pred_check
            _
          $region38: #{decoder_layer.15} parent=35 // pred_check_branch
            %266 = sbr.rel (0) target = $region40
          $region39: #{decoder_layer.15} parent=35 // pred_region
            // Predicated region
            $region41: #{decoder_layer.15} parent=39 // pred_check
              _
            $region42: #{decoder_layer.15} parent=39 // pred_check_branch
              %268 = sbr.rel (0) target = $region44
            $region43: #{decoder_layer.15} parent=39 // pred_region
              // Predicated region
              $region56: #{decoder_layer.15} parent=43 // pred_check
                _
              $region57: #{decoder_layer.15} parent=43 // pred_check_branch
                %314 = sbr.rel (0) target = $region59
              $region58: #{decoder_layer.15} parent=43 // pred_region
                loop: start=0, step=1, limit=1
                $region60: #{decoder_layer.15} parent=58 // loop_pre_header
                  _
                $region61: #{decoder_layer.15} parent=58 // loop_header
                  %s316 = sphi 0, %s320
                  %p317 = scmp.ge.s32.totalorder %s316, 1
                  %s321 = sphi %s264, %s264
                  %s322 = sphi %s262, %s262
                $region62: #{decoder_layer.15} parent=58 // loop_header_branch
                  %319 = sbr.rel (%p317) target = $region66
                $region63: #{decoder_layer.15} parent=58 // loop_body
                  %v323 = vld [vmem:[%s321] sm:$0xff]
                  %324 = vst [vmem:[%s322] sm:$0xff] %v323
                  %v325 = vld [vmem:[%s321 + $0x10] sm:$0xff]
                  %326 = vst [vmem:[%s322 + $0x8] sm:$0xff] %v325
                  %v327 = vld [vmem:[%s321 + $0x20] sm:$0xff]
                  %328 = vst [vmem:[%s322 + $0x10] sm:$0xff] %v327
                  %v329 = vld [vmem:[%s321 + $0x30] sm:$0xff]
                  %330 = vst [vmem:[%s322 + $0x18] sm:$0xff] %v329
                  %v331 = vld [vmem:[%s321 + $0x40] sm:$0xff]
                  %332 = vst [vmem:[%s322 + $0x20] sm:$0xff] %v331
                  %v333 = vld [vmem:[%s321 + $0x50] sm:$0xff]
                  %334 = vst [vmem:[%s322 + $0x28] sm:$0xff] %v333
                  %v335 = vld [vmem:[%s321 + $0x60] sm:$0xff]
                  %336 = vst [vmem:[%s322 + $0x30] sm:$0xff] %v335
                  %v337 = vld [vmem:[%s321 + $0x70] sm:$0xff]
                  %338 = vst [vmem:[%s322 + $0x38] sm:$0xff] %v337
                  %v339 = vld [vmem:[%s321 + $0x80] sm:$0xff]
                  %340 = vst [vmem:[%s322 + $0x40] sm:$0xff] %v339
                  %v341 = vld [vmem:[%s321 + $0x90] sm:$0xff]
                  %342 = vst [vmem:[%s322 + $0x48] sm:$0xff] %v341
                  %v343 = vld [vmem:[%s321 + $0xa0] sm:$0xff]
                  %344 = vst [vmem:[%s322 + $0x50] sm:$0xff] %v343
                  %v345 = vld [vmem:[%s321 + $0xb0] sm:$0xff]
                  %346 = vst [vmem:[%s322 + $0x58] sm:$0xff] %v345
                  %v347 = vld [vmem:[%s321 + $0xc0] sm:$0xff]
                  %348 = vst [vmem:[%s322 + $0x60] sm:$0xff] %v347
                  %v349 = vld [vmem:[%s321 + $0xd0] sm:$0xff]
                  %350 = vst [vmem:[%s322 + $0x68] sm:$0xff] %v349
                  %v351 = vld [vmem:[%s321 + $0xe0] sm:$0xff]
                  %352 = vst [vmem:[%s322 + $0x70] sm:$0xff] %v351
                  %v353 = vld [vmem:[%s321 + $0xf0] sm:$0xff]
                  %354 = vst [vmem:[%s322 + $0x78] sm:$0xff] %v353
                $region64: #{decoder_layer.15} parent=58 // loop_footer
                  %s320 = sadd.s32 1, %s316
                $region65: #{decoder_layer.15} parent=58 // loop_footer_branch
                  %315 = sbr.rel target = $region61
                $region66: #{decoder_layer.15} parent=58 // loop_exit
                  _
              $region59: #{decoder_layer.15} parent=43 // pred_fallthru
                _
              // Predicated region
              $region67: #{decoder_layer.15} parent=43 // pred_check
                _
              $region68: #{decoder_layer.15} parent=43 // pred_check_branch
                %356 = sbr.rel target = $region70
              $region69: #{decoder_layer.15} parent=43 // pred_region
                _
              $region70: #{decoder_layer.15} parent=43 // pred_fallthru
                _
            $region44: #{decoder_layer.15} parent=39 // pred_fallthru
              _
            // Predicated region
            $region45: #{decoder_layer.15} parent=39 // pred_check
              _
            $region46: #{decoder_layer.15} parent=39 // pred_check_branch
              %270 = sbr.rel target = $region48
            $region47: #{decoder_layer.15} parent=39 // pred_region
              %s272 = ssub.s32 256, 1
              loop: start=0, step=1, limit=1
              $region49: #{decoder_layer.15} parent=47 // loop_pre_header
                _
              $region50: #{decoder_layer.15} parent=47 // loop_header
                %s274 = sphi 0, %s278
                %p275 = scmp.ge.s32.totalorder %s274, 1
                %s279 = sphi %s264, %s264
                %s280 = sphi %s262, %s262
              $region51: #{decoder_layer.15} parent=47 // loop_header_branch
                %277 = sbr.rel (%p275) target = $region55
              $region52: #{decoder_layer.15} parent=47 // loop_body
                %v281 = vld [vmem:[%s279] sm:%s272]
                %282 = vst [vmem:[%s280] sm:%s272] %v281
                %v283 = vld [vmem:[%s279 + $0x10] sm:%s272]
                %284 = vst [vmem:[%s280 + $0x8] sm:%s272] %v283
                %v285 = vld [vmem:[%s279 + $0x20] sm:%s272]
                %286 = vst [vmem:[%s280 + $0x10] sm:%s272] %v285
                %v287 = vld [vmem:[%s279 + $0x30] sm:%s272]
                %288 = vst [vmem:[%s280 + $0x18] sm:%s272] %v287
                %v289 = vld [vmem:[%s279 + $0x40] sm:%s272]
                %290 = vst [vmem:[%s280 + $0x20] sm:%s272] %v289
                %v291 = vld [vmem:[%s279 + $0x50] sm:%s272]
                %292 = vst [vmem:[%s280 + $0x28] sm:%s272] %v291
                %v293 = vld [vmem:[%s279 + $0x60] sm:%s272]
                %294 = vst [vmem:[%s280 + $0x30] sm:%s272] %v293
                %v295 = vld [vmem:[%s279 + $0x70] sm:%s272]
                %296 = vst [vmem:[%s280 + $0x38] sm:%s272] %v295
                %v297 = vld [vmem:[%s279 + $0x80] sm:%s272]
                %298 = vst [vmem:[%s280 + $0x40] sm:%s272] %v297
                %v299 = vld [vmem:[%s279 + $0x90] sm:%s272]
                %300 = vst [vmem:[%s280 + $0x48] sm:%s272] %v299
                %v301 = vld [vmem:[%s279 + $0xa0] sm:%s272]
                %302 = vst [vmem:[%s280 + $0x50] sm:%s272] %v301
                %v303 = vld [vmem:[%s279 + $0xb0] sm:%s272]
                %304 = vst [vmem:[%s280 + $0x58] sm:%s272] %v303
                %v305 = vld [vmem:[%s279 + $0xc0] sm:%s272]
                %306 = vst [vmem:[%s280 + $0x60] sm:%s272] %v305
                %v307 = vld [vmem:[%s279 + $0xd0] sm:%s272]
                %308 = vst [vmem:[%s280 + $0x68] sm:%s272] %v307
                %v309 = vld [vmem:[%s279 + $0xe0] sm:%s272]
                %310 = vst [vmem:[%s280 + $0x70] sm:%s272] %v309
                %v311 = vld [vmem:[%s279 + $0xf0] sm:%s272]
                %312 = vst [vmem:[%s280 + $0x78] sm:%s272] %v311
              $region53: #{decoder_layer.15} parent=47 // loop_footer
                %s278 = sadd.s32 1, %s274
              $region54: #{decoder_layer.15} parent=47 // loop_footer_branch
                %273 = sbr.rel target = $region50
              $region55: #{decoder_layer.15} parent=47 // loop_exit
                _
            $region48: #{decoder_layer.15} parent=39 // pred_fallthru
              _
          $region40: #{decoder_layer.15} parent=35 // pred_fallthru
            _
          %357 = vnop
        $region36: #{decoder_layer.15} parent=31 // pred_fallthru
          _
        // Predicated region
        $region71: #{decoder_layer.15} parent=31 // pred_check
          %p358 = pneg %p140
        $region72: #{decoder_layer.15} parent=31 // pred_check_branch
          %360 = sbr.rel (%p358) target = $region74
        $region73: #{decoder_layer.15} parent=31 // pred_region
          %p361 = scmp.lt.s32.totalorder %s22, 1
          %s362 = scalar_select %p361, %s22, 1
          %s363 = scalar_lea.vmem %s4, %s362
        $region74: #{decoder_layer.15} parent=31 // pred_fallthru
          _
        // Predicated region
        $region75: #{decoder_layer.15} parent=31 // pred_check
          %p364 = pneg %p166
        $region76: #{decoder_layer.15} parent=31 // pred_check_branch
          %366 = sbr.rel (%p364) target = $region78
        $region77: #{decoder_layer.15} parent=31 // pred_region
          %s367 = smul.u32 16, %s22
          %p368 = scmp.lt.s32.totalorder %s367, 31
          %s369 = scalar_select %p368, %s367, 31
          %s370 = smul.addr %s369, 8
          %s371 = scalar_lea.vmem %s5, %s370
          %s372 = smul.u32 16, %s22
        $region78: #{decoder_layer.15} parent=31 // pred_fallthru
          _
      $region32: #{decoder_layer.15} parent=5 // pred_fallthru
        _
      %p373 = scmp.le.s32.totalorder 1, %s14
      %p374 = scmp.lt.s32.totalorder %s14, 3
      %p375 = pnand %p373, %p374
      %p376 = pneg %p375
      // Predicated region
      $region79: #{decoder_layer.15} parent=5 // pred_check
        _
      $region80: #{decoder_layer.15} parent=5 // pred_check_branch
        %378 = sbr.rel (%p375) target = $region82
      $region81: #{decoder_layer.15} parent=5 // pred_region
        %s379 = ssub.s32 %s14, 1
        %s380 = sand.u32 %s107, 1
        %s381 = sand.u32 %s107, 1
        %s382 = smul.addr %s381, 128
        %s383 = scalar_lea.vmem [#allocation4], %s382
        // Predicated region
        $region83: #{decoder_layer.15} parent=81 // pred_check
          %p384 = pneg %p120
        $region84: #{decoder_layer.15} parent=81 // pred_check_branch
          %386 = sbr.rel (%p384) target = $region86
        $region85: #{decoder_layer.15} parent=81 // pred_region
          _
        $region86: #{decoder_layer.15} parent=81 // pred_fallthru
          _
        %s387 = smul.u32 2, %s23
        %p388 = scmp.lt.s32.totalorder %s387, 1
        %s389 = scalar_select %p388, %s387, 1
        %s390 = smul.addr %s389, 8
        %s391 = scalar_lea.vmem %s0, %s390
        %p392 = pneg %p52
        %p393 = pneg %p49
        %p394 = pneg %p73
        %p395 = pneg %p70
        %p396 = pneg %p94
        %p397 = pneg %p91
        %s398 = sand.u32 %s107, 1
        %s399 = sand.u32 %s107, 1
        %s400 = smul.addr %s399, 128
        %s401 = scalar_lea.vmem [#allocation4], %s400
        %p402 = pneg %p120
        %p403 = pneg %p117
        %p404 = scmp.lt.s32.totalorder %s24, 1
        %s405 = scalar_select %p404, %s24, 1
        %s406 = scalar_lea.vmem %s4, %s405
        %p407 = pneg %p146
        %p408 = pneg %p143
        %s409 = smul.u32 16, %s24
        %p410 = scmp.lt.s32.totalorder %s409, 31
        %s411 = scalar_select %p410, %s409, 31
        %s412 = smul.addr %s411, 8
        %s413 = scalar_lea.vmem %s5, %s412
        %p414 = pneg %p172
        %p415 = pneg %p169
        %p416 = pneg %p193
        %p417 = pneg %p190
        %p418 = pneg %p219
        %p419 = pneg %p216
        %s420 = smul.u32 2, %s23
        %p421 = scmp.lt.s32.totalorder %s420, 1
        %s422 = scalar_select %p421, %s420, 1
        %s423 = smul.addr %s422, 8
        %s424 = scalar_lea.vmem %s0, %s423
        %s425 = smul.u32 2, %s23
        %p426 = scmp.lt.s32.totalorder %s24, 1
        %s427 = scalar_select %p426, %s24, 1
        %s428 = scalar_lea.vmem %s4, %s427
        %s429 = smul.u32 16, %s24
        %p430 = scmp.lt.s32.totalorder %s429, 31
        %s431 = scalar_select %p430, %s429, 31
        %s432 = smul.addr %s431, 8
        %s433 = scalar_lea.vmem %s5, %s432
        %s434 = smul.u32 16, %s24
        %s435 = smul.u32 2, %s23
        %p436 = scmp.eq.s32.totalorder %s24, 0
        // Predicated region
        $region87: #{decoder_layer.15} parent=81 // pred_check
          %p437 = pneg %p436
        $region88: #{decoder_layer.15} parent=81 // pred_check_branch
          %439 = sbr.rel (%p437) target = $region90
        $region89: #{decoder_layer.15} parent=81 // pred_region
          %v440 = vld [vmem:[%s424] sm:$0xff]
          %v441 = vld [vmem:[%s424 + $0x8] sm:$0xff]
          %442 = vadd.xlane.f32.xlu0 %v440
          %v443 = vpop.xlane.xlu0 %442
          %444 = vadd.xlane.f32.xlu0 %v441
          %v445 = vpop.xlane.xlu0 %444
          %v446 = vrcp.pop 128.0
          %v447 = vmul.f32 128.0, %v446
          %v448 = vsub.f32 1.0, %v447
          %v449 = vmul.f32 %v446, %v448
          %v450 = vadd.f32 %v446, %v449
          %vm451 = vweird.f32 %v446
          %v452 = vsel %vm451, %v446, %v450
          %v453 = vmul.f32 %v443, %v452
          %v454 = vmul.f32 %v445, %v452
          %v455 = vsub.f32 %v440, %v453
          %v456 = vsub.f32 %v441, %v454
          %v457 = vmul.f32 %v455, %v455
          %v458 = vmul.f32 %v456, %v456
          %459 = vadd.xlane.f32.xlu0 %v457
          %v460 = vpop.xlane.xlu0 %459
          %461 = vadd.xlane.f32.xlu0 %v458
          %v462 = vpop.xlane.xlu0 %461
          %v463 = vrcp.pop 127.0
          %v464 = vmul.f32 127.0, %v463
          %v465 = vsub.f32 1.0, %v464
          %v466 = vmul.f32 %v463, %v465
          %v467 = vadd.f32 %v463, %v466
          %vm468 = vweird.f32 %v463
          %v469 = vsel %vm468, %v463, %v467
          %v470 = vmul.f32 %v460, %v469
          %v471 = vmul.f32 %v462, %v469
          %v472 = vld [vmem:[%s1] sm:$0x1]
          %v474 = vperm.slane %v472, 0
          %v476 = vmul.f32 %v474, %v455
          %v477 = vmul.f32 %v474, %v456
          %v478 = vrsqrt.pop %v470
          %v479 = vmul.f32 %v478, %v470
          %v480 = vmul.f32 %v479, %v478
          %v481 = vmul.f32 0.5, %v480
          %v482 = vsub.f32 1.5, %v481
          %v483 = vmul.f32 %v478, %v482
          %v484 = vmul.f32 %v470, %v483
          %vm485 = vcmp.eq.f32.partialorder %v470, inf
          %v486 = vsel %vm485, %v470, %v484
          %vm487 = vcmp.eq.f32.partialorder %v470, 0.0
          %v488 = vand.u32 %v470, 2147483648
          %v489 = vsel %vm487, %v488, %v486
          %v490 = vrsqrt.pop %v471
          %v491 = vmul.f32 %v490, %v471
          %v492 = vmul.f32 %v491, %v490
          %v493 = vmul.f32 0.5, %v492
          %v494 = vsub.f32 1.5, %v493
          %v495 = vmul.f32 %v490, %v494
          %v496 = vmul.f32 %v471, %v495
          %vm497 = vcmp.eq.f32.partialorder %v471, inf
          %v498 = vsel %vm497, %v471, %v496
          %vm499 = vcmp.eq.f32.partialorder %v471, 0.0
          %v500 = vand.u32 %v471, 2147483648
          %v501 = vsel %vm499, %v500, %v498
          %v502 = vadd.f32 %v489, 1e-06
          %v503 = vadd.f32 %v501, 1e-06
          %v504 = vrcp.pop %v502
          %v505 = vmul.f32 %v502, %v504
          %v506 = vsub.f32 1.0, %v505
          %v507 = vmul.f32 %v504, %v506
          %v508 = vadd.f32 %v504, %v507
          %vm509 = vweird.f32 %v502
          %vm510 = vweird.f32 %v504
          %vm511 = vmor %vm509, %vm510
          %v512 = vsel %vm511, %v504, %v508
          %v513 = vand.u32 2147483647, %v502
          %vm514 = vcmp.eq.f32.partialorder %v513, 8.507059e+37
          %v515 = vand.u32 %v502, 2147483648
          %v516 = vor.u32 1.1754944e-38, %v515
          %v517 = vsel %vm514, %v516, %v512
          %v518 = vmul.f32 %v476, %v517
          %v519 = vrcp.pop %v503
          %v520 = vmul.f32 %v503, %v519
          %v521 = vsub.f32 1.0, %v520
          %v522 = vmul.f32 %v519, %v521
          %v523 = vadd.f32 %v519, %v522
          %vm524 = vweird.f32 %v503
          %vm525 = vweird.f32 %v519
          %vm526 = vmor %vm524, %vm525
          %v527 = vsel %vm526, %v519, %v523
          %v528 = vand.u32 2147483647, %v503
          %vm529 = vcmp.eq.f32.partialorder %v528, 8.507059e+37
          %v530 = vand.u32 %v503, 2147483648
          %v531 = vor.u32 1.1754944e-38, %v530
          %v532 = vsel %vm529, %v531, %v527
          %v533 = vmul.f32 %v477, %v532
          %v534 = vld [vmem:[%s2] sm:$0x1]
          %v536 = vperm.slane %v534, 0
          %v538 = vadd.f32 %v518, %v536
          %v539 = vadd.f32 %v533, %v536
          %540 = vst [vmem:[#allocation2] sm:$0xff] %v538
          %541 = vst [vmem:[#allocation2 + $0x8] sm:$0xff] %v539
          %542 = vst [vmem:[#allocation3] sm:$0xff] 0.0
          %543 = vst [vmem:[#allocation3 + $0x8] sm:$0xff] 0.0
        $region90: #{decoder_layer.15} parent=81 // pred_fallthru
          _
        %v544 = vld [vmem:[#allocation2] sm:$0xff]
        %v545 = vld [vmem:[#allocation2 + $0x8] sm:$0xff]
        %v546 = vld [vmem:[%s383] sm:$0xff]
        %v547 = vld [vmem:[%s383 + $0x8] sm:$0xff]
        %v548 = vld [vmem:[%s383 + $0x10] sm:$0xff]
        %v549 = vld [vmem:[%s383 + $0x18] sm:$0xff]
        %v550 = vld [vmem:[%s383 + $0x20] sm:$0xff]
        %v551 = vld [vmem:[%s383 + $0x28] sm:$0xff]
        %v552 = vld [vmem:[%s383 + $0x30] sm:$0xff]
        %v553 = vld [vmem:[%s383 + $0x38] sm:$0xff]
        %v554 = vld [vmem:[%s383 + $0x40] sm:$0xff]
        %v555 = vld [vmem:[%s383 + $0x48] sm:$0xff]
        %v556 = vld [vmem:[%s383 + $0x50] sm:$0xff]
        %v557 = vld [vmem:[%s383 + $0x58] sm:$0xff]
        %v558 = vld [vmem:[%s383 + $0x60] sm:$0xff]
        %v559 = vld [vmem:[%s383 + $0x68] sm:$0xff]
        %v560 = vld [vmem:[%s383 + $0x70] sm:$0xff]
        %v561 = vld [vmem:[%s383 + $0x78] sm:$0xff]
        %v562 = vld [vmem:[%s428] sm:$0x1]
        %v564 = vperm.slane %v562, 0
        %566 = vmatpush.msra.mxu0 %v561
        %567 = vmatpush.msra.mxu0 %v560
        %568 = vmatpush.msra.mxu0 %v559
        %569 = vmatpush.msra.mxu0 %v558
        %570 = vmatpush.msra.mxu0 %v557
        %571 = vmatpush.msra.mxu0 %v556
        %572 = vmatpush.msra.mxu0 %v555
        %573 = vmatpush.msra.mxu0 %v554
        %574 = vmatpush.msra.mxu0 %v553
        %575 = vmatpush.msra.mxu0 %v552
        %576 = vmatpush.msra.mxu0 %v551
        %577 = vmatpush.msra.mxu0 %v550
        %578 = vmatpush.msra.mxu0 %v549
        %579 = vmatpush.msra.mxu0 %v548
        %580 = vmatpush.msra.mxu0 %v547
        %581 = vmatpush.msra.mxu0 %v546
        %582 = vmatmul.f32.gmra.mxu0 %v544
        %v583 = vpop.f32.mrf.mxu0
        %v584 = vadd.f32 %v564, %v583
        %585 = vmatmul.f32.gmra.mxu0 %v545
        %v586 = vpop.f32.mrf.mxu0
        %v587 = vadd.f32 %v564, %v586
        %588 = vdwg.mxu0
        %v589 = vmax.f32 %v584, 0.0
        %v590 = vmax.f32 %v587, 0.0
        %v591 = vld [vmem:[#allocation3] sm:$0xff]
        %v592 = vld [vmem:[#allocation3 + $0x8] sm:$0xff]
        %v593 = vld [vmem:[%s433] sm:$0xff]
        %v594 = vld [vmem:[%s433 + $0x8] sm:$0xff]
        %v595 = vld [vmem:[%s433 + $0x10] sm:$0xff]
        %v596 = vld [vmem:[%s433 + $0x18] sm:$0xff]
        %v597 = vld [vmem:[%s433 + $0x20] sm:$0xff]
        %v598 = vld [vmem:[%s433 + $0x28] sm:$0xff]
        %v599 = vld [vmem:[%s433 + $0x30] sm:$0xff]
        %v600 = vld [vmem:[%s433 + $0x38] sm:$0xff]
        %v601 = vld [vmem:[%s433 + $0x40] sm:$0xff]
        %v602 = vld [vmem:[%s433 + $0x48] sm:$0xff]
        %v603 = vld [vmem:[%s433 + $0x50] sm:$0xff]
        %v604 = vld [vmem:[%s433 + $0x58] sm:$0xff]
        %v605 = vld [vmem:[%s433 + $0x60] sm:$0xff]
        %v606 = vld [vmem:[%s433 + $0x68] sm:$0xff]
        %v607 = vld [vmem:[%s433 + $0x70] sm:$0xff]
        %v608 = vld [vmem:[%s433 + $0x78] sm:$0xff]
        %609 = vmatpush.msra.mxu0 %v608
        %610 = vmatpush.msra.mxu0 %v607
        %611 = vmatpush.msra.mxu0 %v606
        %612 = vmatpush.msra.mxu0 %v605
        %613 = vmatpush.msra.mxu0 %v604
        %614 = vmatpush.msra.mxu0 %v603
        %615 = vmatpush.msra.mxu0 %v602
        %616 = vmatpush.msra.mxu0 %v601
        %617 = vmatpush.msra.mxu0 %v600
        %618 = vmatpush.msra.mxu0 %v599
        %619 = vmatpush.msra.mxu0 %v598
        %620 = vmatpush.msra.mxu0 %v597
        %621 = vmatpush.msra.mxu0 %v596
        %622 = vmatpush.msra.mxu0 %v595
        %623 = vmatpush.msra.mxu0 %v594
        %624 = vmatpush.msra.mxu0 %v593
        %625 = vmatmul.f32.gmra.mxu0 %v589
        %v626 = vpop.f32.mrf.mxu0
        %v627 = vadd.f32 0.0, %v626
        %628 = vmatmul.f32.gmra.mxu0 %v590
        %v629 = vpop.f32.mrf.mxu0
        %v630 = vadd.f32 0.0, %v629
        %631 = vdwg.mxu0
        %v632 = vadd.f32 %v591, %v627
        %v633 = vadd.f32 %v592, %v630
        %634 = vst [vmem:[#allocation3] sm:$0xff] %v632
        %635 = vst [vmem:[#allocation3 + $0x8] sm:$0xff] %v633
        %p636 = scmp.eq.s32.totalorder %s24, 1
        // Predicated region
        $region91: #{decoder_layer.15} parent=81 // pred_check
          %p637 = pneg %p636
        $region92: #{decoder_layer.15} parent=81 // pred_check_branch
          %639 = sbr.rel (%p637) target = $region94
        $region93: #{decoder_layer.15} parent=81 // pred_region
          %v640 = vld [vmem:[%s424] sm:$0xff]
          %v641 = vld [vmem:[%s424 + $0x8] sm:$0xff]
          %v642 = vld [vmem:[#allocation3] sm:$0xff]
          %v643 = vld [vmem:[#allocation3 + $0x8] sm:$0xff]
          %v644 = vadd.f32 %v640, %v642
          %v645 = vadd.f32 %v641, %v643
          %v646 = vld [vmem:[%s6] sm:$0x1]
          %v648 = vperm.slane %v646, 0
          %v650 = vadd.f32 %v644, %v648
          %v651 = vadd.f32 %v645, %v648
          %652 = vst [vmem:[#allocation5] sm:$0xff] %v650
          %653 = vst [vmem:[#allocation5 + $0x8] sm:$0xff] %v651
        $region94: #{decoder_layer.15} parent=81 // pred_fallthru
          _
        // Predicated region
        $region95: #{decoder_layer.15} parent=81 // pred_check
          %p654 = pneg %p216
        $region96: #{decoder_layer.15} parent=81 // pred_check_branch
          %656 = sbr.rel (%p654) target = $region98
        $region97: #{decoder_layer.15} parent=81 // pred_region
          %s657 = smul.u32 2, %s23
          %659 = vsyncadd [#allocation6], 0
          %s660 = smul.addr %s657, 8
          %s661 = scalar_lea.hbm %s7, %s660
          %s662 = sshll.u32 [#allocation5], 4
          %s663 = int_to_ptr.vmem [resolvable:$true] %s662
          %s664 = sshll.u32 %s661, 4
          %s665 = int_to_ptr.hbm [resolvable:$true] %s664
          %670 = dma.vmem_to_hbm [thread:$0]  %s663, 256, %s665, [#allocation6], 128, 128, 8
        $region98: #{decoder_layer.15} parent=81 // pred_fallthru
          _
        // Predicated region
        $region99: #{decoder_layer.15} parent=81 // pred_check
          %p671 = pneg %p216
        $region100: #{decoder_layer.15} parent=81 // pred_check_branch
          %673 = sbr.rel (%p671) target = $region102
        $region101: #{decoder_layer.15} parent=81 // pred_region
          %675 = dma.done [#allocation6], 256
        $region102: #{decoder_layer.15} parent=81 // pred_fallthru
          _
      $region82: #{decoder_layer.15} parent=5 // pred_fallthru
        _
      %p676 = scmp.le.s32.totalorder 2, %s14
      // Predicated region
      $region103: #{decoder_layer.15} parent=5 // pred_check
        %p677 = pneg %p676
      $region104: #{decoder_layer.15} parent=5 // pred_check_branch
        %679 = sbr.rel (%p677) target = $region106
      $region105: #{decoder_layer.15} parent=5 // pred_region
        %s680 = ssub.s32 %s14, 2
      $region106: #{decoder_layer.15} parent=5 // pred_fallthru
        _
    $region6: #{decoder_layer.15} parent=1 // loop_footer
      %s18 = sadd.s32 1, %s14
    $region7: #{decoder_layer.15} parent=1 // loop_footer_branch
      %13 = sbr.rel target = $region3
    $region8: #{decoder_layer.15} parent=1 // loop_exit
      _
    %681 = vsyncpa [#allocation6], 1
    %s682 = scalar_lea.sflag [#allocation6], 1
    %683 = vsyncpa %s682, 1

// kernel: decoder_layer.13
$region0: #{decoder_layer.13}
  #allocation0 [shape = 'u32[]', space=smem, size = 0x4, offset = 0x4, fixed_abs, tag = 'smem constant byte address 0x4 - core index']
  #allocation1 [shape = 'u32[72,128]{1,0:T(1,128)}', space=vmem, size = 0x9000, scoped, tag = 'internal scratch']
  %s0 = inlined_call_operand.vmem [shape: f32[2,8,128], index: 0, kind: input, shape index: {}]
  %s1 = inlined_call_operand.vmem [shape: f32[2,16,256], index: 1, kind: input, shape index: {}, may-alias: {1,2}]
  %s2 = inlined_call_operand.vmem [shape: f32[2,16,256], index: 2, kind: input, shape index: {}, may-alias: {1,2}]
  %s3 = inlined_call_operand.vmem [shape: f32[2,8,16], index: 3, kind: input, shape index: {}]
  %s4 = inlined_call_operand.vmem [shape: f32[2,8,128], index: 4, kind: output, shape index: {}]
  %s5 = sld [smem:[#allocation0]]
  $region125: #{decoder_layer.13} parent=0
    _
  %s7 = ssub.s32 1, %s5
  %s8 = scalar_select 0, %s7, %s5
  $region1: #{decoder_layer.13} parent=0
    #allocation2 [shape = 'u8[16384]{0}', space=vmem, size = 0x4000, scoped, tag = 'input window, operand 1']
    #allocation3 [shape = 'u8[16384]{0}', space=vmem, size = 0x4000, scoped, tag = 'input window, operand 2']
    loop: start=0, step=1, limit=4
    $region2: #{decoder_layer.13} parent=1 // loop_pre_header
      _
    $region3: #{decoder_layer.13} parent=1 // loop_header
      %s10 = sphi 0, %s14
      %p11 = scmp.ge.s32.totalorder %s10, 4
      %s17 = sphi 0, %s29
      %s18 = sphi 0, %s25
      %s19 = sphi 0, %s17
      %s20 = sphi 0, %s18
      %s21 = sphi 0, %s19
      %s22 = sphi 0, %s20
      %s34 = sphi 0, %s36
      %s37 = sphi 0, %s34
      %s38 = sphi 0, %s37
      %s54 = sphi 0, %s38
      %s62 = sphi 0, %s64
      %s65 = sphi 0, %s62
      %s66 = sphi 0, %s65
      %s82 = sphi 0, %s66
      %s92 = sphi 0, %s94
      %s95 = sphi 0, %s92
      %s96 = sphi 0, %s95
      %s112 = sphi 0, %s96
      %s118 = sphi 0, %s120
      %s121 = sphi 0, %s118
      %s122 = sphi 0, %s121
      %s138 = sphi 0, %s122
      %s146 = sphi 0, %s148
      %s149 = sphi 0, %s146
      %s150 = sphi 0, %s149
      %s166 = sphi 0, %s150
    $region4: #{decoder_layer.13} parent=1 // loop_header_branch
      %13 = sbr.rel (%p11) target = $region8
    $region5: #{decoder_layer.13} parent=1 // loop_body
      %s15 = ssub.s32 %s10, 1
      %s16 = ssub.s32 %s10, 2
      %s23 = sadd.s32 1, %s18
      %p24 = scmp.ge.s32.totalorder %s23, 1
      %s25 = scalar_select %p24, 0, %s23
      %s26 = sadd.s32 1, %s17
      %s27 = scalar_select %p24, %s26, %s17
      %p28 = scmp.ge.s32.totalorder %s27, 2
      %s29 = scalar_select %p28, 0, %s27
      %s30 = ssub.s32 %s17, %s29
      %s31 = ssub.s32 %s18, %s25
      %s32 = sor.u32 %s30, %s31
      %p33 = scmp.eq.s32.totalorder %s32, 0
      %s35 = sadd.s32 %s34, 1
      %s36 = scalar_select %p33, %s34, %s35
      %p39 = pneg %p33
      %p40 = scmp.eq.s32.totalorder %s10, 1
      %p41 = por %p39, %p40
      %p42 = scmp.ne.s32.totalorder %s34, %s37
      %p43 = scmp.eq.s32.totalorder %s10, 0
      %p44 = por %p42, %p43
      %p45 = scmp.ne.s32.totalorder %s34, %s37
      %p46 = scmp.eq.s32.totalorder %s15, 1
      %p47 = por %p45, %p46
      %p48 = scmp.ne.s32.totalorder %s37, %s38
      %p49 = scmp.eq.s32.totalorder %s15, 0
      %p50 = por %p48, %p49
      %p51 = scmp.ne.s32.totalorder %s37, %s38
      %p52 = scmp.eq.s32.totalorder %s16, 1
      %p53 = por %p51, %p52
      %p55 = scmp.ne.s32.totalorder %s38, %s54
      %p56 = scmp.eq.s32.totalorder %s16, 0
      %p57 = por %p55, %p56
      %s58 = ssub.s32 %s17, %s29
      %s59 = ssub.s32 %s18, %s25
      %s60 = sor.u32 %s58, %s59
      %p61 = scmp.eq.s32.totalorder %s60, 0
      %s63 = sadd.s32 %s62, 1
      %s64 = scalar_select %p61, %s62, %s63
      %p67 = pneg %p61
      %p68 = scmp.eq.s32.totalorder %s10, 1
      %p69 = por %p67, %p68
      %p70 = scmp.ne.s32.totalorder %s62, %s65
      %p71 = scmp.eq.s32.totalorder %s10, 0
      %p72 = por %p70, %p71
      %p73 = scmp.ne.s32.totalorder %s62, %s65
      %p74 = scmp.eq.s32.totalorder %s15, 1
      %p75 = por %p73, %p74
      %p76 = scmp.ne.s32.totalorder %s65, %s66
      %p77 = scmp.eq.s32.totalorder %s15, 0
      %p78 = por %p76, %p77
      %p79 = scmp.ne.s32.totalorder %s65, %s66
      %p80 = scmp.eq.s32.totalorder %s16, 1
      %p81 = por %p79, %p80
      %p83 = scmp.ne.s32.totalorder %s66, %s82
      %p84 = scmp.eq.s32.totalorder %s16, 0
      %p85 = por %p83, %p84
      %s86 = sadd.s32 %s18, 1
      %s87 = sadd.s32 %s25, 1
      %s88 = ssub.s32 %s17, %s29
      %s89 = ssub.s32 %s86, %s87
      %s90 = sor.u32 %s88, %s89
      %p91 = scmp.eq.s32.totalorder %s90, 0
      %s93 = sadd.s32 %s92, 1
      %s94 = scalar_select %p91, %s92, %s93
      %p97 = pneg %p91
      %p98 = scmp.eq.s32.totalorder %s10, 1
      %p99 = por %p97, %p98
      %p100 = scmp.ne.s32.totalorder %s92, %s95
      %p101 = scmp.eq.s32.totalorder %s10, 0
      %p102 = por %p100, %p101
      %p103 = scmp.ne.s32.totalorder %s92, %s95
      %p104 = scmp.eq.s32.totalorder %s15, 1
      %p105 = por %p103, %p104
      %p106 = scmp.ne.s32.totalorder %s95, %s96
      %p107 = scmp.eq.s32.totalorder %s15, 0
      %p108 = por %p106, %p107
      %p109 = scmp.ne.s32.totalorder %s95, %s96
      %p110 = scmp.eq.s32.totalorder %s16, 1
      %p111 = por %p109, %p110
      %p113 = scmp.ne.s32.totalorder %s96, %s112
      %p114 = scmp.eq.s32.totalorder %s16, 0
      %p115 = por %p113, %p114
      %s116 = ssub.s32 %s17, %s29
      %p117 = scmp.eq.s32.totalorder %s116, 0
      %s119 = sadd.s32 %s118, 1
      %s120 = scalar_select %p117, %s118, %s119
      %p123 = pneg %p117
      %p124 = scmp.eq.s32.totalorder %s10, 1
      %p125 = por %p123, %p124
      %p126 = scmp.ne.s32.totalorder %s118, %s121
      %p127 = scmp.eq.s32.totalorder %s10, 0
      %p128 = por %p126, %p127
      %p129 = scmp.ne.s32.totalorder %s118, %s121
      %p130 = scmp.eq.s32.totalorder %s15, 1
      %p131 = por %p129, %p130
      %p132 = scmp.ne.s32.totalorder %s121, %s122
      %p133 = scmp.eq.s32.totalorder %s15, 0
      %p134 = por %p132, %p133
      %p135 = scmp.ne.s32.totalorder %s121, %s122
      %p136 = scmp.eq.s32.totalorder %s16, 1
      %p137 = por %p135, %p136
      %p139 = scmp.ne.s32.totalorder %s122, %s138
      %p140 = scmp.eq.s32.totalorder %s16, 0
      %p141 = por %p139, %p140
      %s142 = ssub.s32 %s17, %s29
      %s143 = ssub.s32 %s18, %s25
      %s144 = sor.u32 %s142, %s143
      %p145 = scmp.eq.s32.totalorder %s144, 0
      %s147 = sadd.s32 %s146, 1
      %s148 = scalar_select %p145, %s146, %s147
      %p151 = pneg %p145
      %p152 = scmp.eq.s32.totalorder %s10, 1
      %p153 = por %p151, %p152
      %p154 = scmp.ne.s32.totalorder %s146, %s149
      %p155 = scmp.eq.s32.totalorder %s10, 0
      %p156 = por %p154, %p155
      %p157 = scmp.ne.s32.totalorder %s146, %s149
      %p158 = scmp.eq.s32.totalorder %s15, 1
      %p159 = por %p157, %p158
      %p160 = scmp.ne.s32.totalorder %s149, %s150
      %p161 = scmp.eq.s32.totalorder %s15, 0
      %p162 = por %p160, %p161
      %p163 = scmp.ne.s32.totalorder %s149, %s150
      %p164 = scmp.eq.s32.totalorder %s16, 1
      %p165 = por %p163, %p164
      %p167 = scmp.ne.s32.totalorder %s150, %s166
      %p168 = scmp.eq.s32.totalorder %s16, 0
      %p169 = por %p167, %p168
      %p170 = scmp.le.s32.totalorder 1, %s10
      %p171 = scmp.lt.s32.totalorder %s10, 3
      %p172 = pnand %p170, %p171
      %p173 = pneg %p172
      // Predicated region
      $region9: #{decoder_layer.13} parent=5 // pred_check
        _
      $region10: #{decoder_layer.13} parent=5 // pred_check_branch
        %175 = sbr.rel (%p172) target = $region12
      $region11: #{decoder_layer.13} parent=5 // pred_region
        %s176 = ssub.s32 %s10, 1
      $region12: #{decoder_layer.13} parent=5 // pred_fallthru
        _
      %p177 = scmp.lt.s32.totalorder %s10, 2
      // Predicated region
      $region13: #{decoder_layer.13} parent=5 // pred_check
        %p178 = pneg %p177
      $region14: #{decoder_layer.13} parent=5 // pred_check_branch
        %180 = sbr.rel (%p178) target = $region16
      $region15: #{decoder_layer.13} parent=5 // pred_region
        // Predicated region
        $region17: #{decoder_layer.13} parent=15 // pred_check
          %p181 = pneg %p44
        $region18: #{decoder_layer.13} parent=15 // pred_check_branch
          %183 = sbr.rel (%p181) target = $region20
        $region19: #{decoder_layer.13} parent=15 // pred_region
          %p184 = scmp.lt.s32.totalorder %s17, 1
          %s185 = scalar_select %p184, %s17, 1
          %p186 = scmp.lt.s32.totalorder %s18, 0
          %s187 = scalar_select %p186, %s18, 0
          %s188 = sadd.s32 %s187, %s185
          %s189 = smul.addr %s188, 8
          %s190 = scalar_lea.vmem %s0, %s189
        $region20: #{decoder_layer.13} parent=15 // pred_fallthru
          _
        // Predicated region
        $region21: #{decoder_layer.13} parent=15 // pred_check
          %p191 = pneg %p72
        $region22: #{decoder_layer.13} parent=15 // pred_check_branch
          %193 = sbr.rel (%p191) target = $region24
        $region23: #{decoder_layer.13} parent=15 // pred_region
          %s194 = sand.u32 %s62, 1
          %s195 = sand.u32 %s62, 1
          %s196 = smul.addr %s195, 16
          %s197 = scalar_lea.vmem [#allocation2], %s196
          %s198 = smul.addr %s17, 4
          %s199 = sadd.s32 %s18, %s198
          %s200 = smul.addr %s199, 8
          %s201 = scalar_lea.vmem %s1, %s200
          // Predicated region
          $region25: #{decoder_layer.13} parent=23 // pred_check
            _
          $region26: #{decoder_layer.13} parent=23 // pred_check_branch
            %203 = sbr.rel (0) target = $region28
          $region27: #{decoder_layer.13} parent=23 // pred_region
            // Predicated region
            $region29: #{decoder_layer.13} parent=27 // pred_check
              _
            $region30: #{decoder_layer.13} parent=27 // pred_check_branch
              %205 = sbr.rel (0) target = $region32
            $region31: #{decoder_layer.13} parent=27 // pred_region
              // Predicated region
              $region44: #{decoder_layer.13} parent=31 // pred_check
                _
              $region45: #{decoder_layer.13} parent=31 // pred_check_branch
                %223 = sbr.rel (0) target = $region47
              $region46: #{decoder_layer.13} parent=31 // pred_region
                loop: start=0, step=1, limit=1
                $region48: #{decoder_layer.13} parent=46 // loop_pre_header
                  _
                $region49: #{decoder_layer.13} parent=46 // loop_header
                  %s225 = sphi 0, %s229
                  %p226 = scmp.ge.s32.totalorder %s225, 1
                  %s230 = sphi %s201, %s201
                  %s231 = sphi %s197, %s197
                $region50: #{decoder_layer.13} parent=46 // loop_header_branch
                  %228 = sbr.rel (%p226) target = $region54
                $region51: #{decoder_layer.13} parent=46 // loop_body
                  %v232 = vld [vmem:[%s230] sm:$0xff]
                  %233 = vst [vmem:[%s231] sm:$0xff] %v232
                  %v234 = vld [vmem:[%s230 + $0x10] sm:$0xff]
                  %235 = vst [vmem:[%s231 + $0x8] sm:$0xff] %v234
                $region52: #{decoder_layer.13} parent=46 // loop_footer
                  %s229 = sadd.s32 1, %s225
                $region53: #{decoder_layer.13} parent=46 // loop_footer_branch
                  %224 = sbr.rel target = $region49
                $region54: #{decoder_layer.13} parent=46 // loop_exit
                  _
              $region47: #{decoder_layer.13} parent=31 // pred_fallthru
                _
              // Predicated region
              $region55: #{decoder_layer.13} parent=31 // pred_check
                _
              $region56: #{decoder_layer.13} parent=31 // pred_check_branch
                %237 = sbr.rel target = $region58
              $region57: #{decoder_layer.13} parent=31 // pred_region
                _
              $region58: #{decoder_layer.13} parent=31 // pred_fallthru
                _
            $region32: #{decoder_layer.13} parent=27 // pred_fallthru
              _
            // Predicated region
            $region33: #{decoder_layer.13} parent=27 // pred_check
              _
            $region34: #{decoder_layer.13} parent=27 // pred_check_branch
              %207 = sbr.rel target = $region36
            $region35: #{decoder_layer.13} parent=27 // pred_region
              %s209 = ssub.s32 256, 1
              loop: start=0, step=1, limit=1
              $region37: #{decoder_layer.13} parent=35 // loop_pre_header
                _
              $region38: #{decoder_layer.13} parent=35 // loop_header
                %s211 = sphi 0, %s215
                %p212 = scmp.ge.s32.totalorder %s211, 1
                %s216 = sphi %s201, %s201
                %s217 = sphi %s197, %s197
              $region39: #{decoder_layer.13} parent=35 // loop_header_branch
                %214 = sbr.rel (%p212) target = $region43
              $region40: #{decoder_layer.13} parent=35 // loop_body
                %v218 = vld [vmem:[%s216] sm:%s209]
                %219 = vst [vmem:[%s217] sm:%s209] %v218
                %v220 = vld [vmem:[%s216 + $0x10] sm:%s209]
                %221 = vst [vmem:[%s217 + $0x8] sm:%s209] %v220
              $region41: #{decoder_layer.13} parent=35 // loop_footer
                %s215 = sadd.s32 1, %s211
              $region42: #{decoder_layer.13} parent=35 // loop_footer_branch
                %210 = sbr.rel target = $region38
              $region43: #{decoder_layer.13} parent=35 // loop_exit
                _
            $region36: #{decoder_layer.13} parent=27 // pred_fallthru
              _
          $region28: #{decoder_layer.13} parent=23 // pred_fallthru
            _
          %238 = vnop
        $region24: #{decoder_layer.13} parent=15 // pred_fallthru
          _
        // Predicated region
        $region59: #{decoder_layer.13} parent=15 // pred_check
          %p239 = pneg %p102
        $region60: #{decoder_layer.13} parent=15 // pred_check_branch
          %241 = sbr.rel (%p239) target = $region62
        $region61: #{decoder_layer.13} parent=15 // pred_region
          %s242 = sand.u32 %s92, 1
          %s243 = sand.u32 %s92, 1
          %s244 = smul.addr %s243, 16
          %s245 = scalar_lea.vmem [#allocation3], %s244
          %s246 = sadd.s32 %s18, 1
          %s247 = smul.addr %s17, 4
          %s248 = sadd.s32 %s246, %s247
          %s249 = smul.addr %s248, 8
          %s250 = scalar_lea.vmem %s2, %s249
          // Predicated region
          $region63: #{decoder_layer.13} parent=61 // pred_check
            _
          $region64: #{decoder_layer.13} parent=61 // pred_check_branch
            %252 = sbr.rel (0) target = $region66
          $region65: #{decoder_layer.13} parent=61 // pred_region
            // Predicated region
            $region67: #{decoder_layer.13} parent=65 // pred_check
              _
            $region68: #{decoder_layer.13} parent=65 // pred_check_branch
              %254 = sbr.rel (0) target = $region70
            $region69: #{decoder_layer.13} parent=65 // pred_region
              // Predicated region
              $region82: #{decoder_layer.13} parent=69 // pred_check
                _
              $region83: #{decoder_layer.13} parent=69 // pred_check_branch
                %272 = sbr.rel (0) target = $region85
              $region84: #{decoder_layer.13} parent=69 // pred_region
                loop: start=0, step=1, limit=1
                $region86: #{decoder_layer.13} parent=84 // loop_pre_header
                  _
                $region87: #{decoder_layer.13} parent=84 // loop_header
                  %s274 = sphi 0, %s278
                  %p275 = scmp.ge.s32.totalorder %s274, 1
                  %s279 = sphi %s250, %s250
                  %s280 = sphi %s245, %s245
                $region88: #{decoder_layer.13} parent=84 // loop_header_branch
                  %277 = sbr.rel (%p275) target = $region92
                $region89: #{decoder_layer.13} parent=84 // loop_body
                  %v281 = vld [vmem:[%s279] sm:$0xff]
                  %282 = vst [vmem:[%s280] sm:$0xff] %v281
                  %v283 = vld [vmem:[%s279 + $0x10] sm:$0xff]
                  %284 = vst [vmem:[%s280 + $0x8] sm:$0xff] %v283
                $region90: #{decoder_layer.13} parent=84 // loop_footer
                  %s278 = sadd.s32 1, %s274
                $region91: #{decoder_layer.13} parent=84 // loop_footer_branch
                  %273 = sbr.rel target = $region87
                $region92: #{decoder_layer.13} parent=84 // loop_exit
                  _
              $region85: #{decoder_layer.13} parent=69 // pred_fallthru
                _
              // Predicated region
              $region93: #{decoder_layer.13} parent=69 // pred_check
                _
              $region94: #{decoder_layer.13} parent=69 // pred_check_branch
                %286 = sbr.rel target = $region96
              $region95: #{decoder_layer.13} parent=69 // pred_region
                _
              $region96: #{decoder_layer.13} parent=69 // pred_fallthru
                _
            $region70: #{decoder_layer.13} parent=65 // pred_fallthru
              _
            // Predicated region
            $region71: #{decoder_layer.13} parent=65 // pred_check
              _
            $region72: #{decoder_layer.13} parent=65 // pred_check_branch
              %256 = sbr.rel target = $region74
            $region73: #{decoder_layer.13} parent=65 // pred_region
              %s258 = ssub.s32 256, 1
              loop: start=0, step=1, limit=1
              $region75: #{decoder_layer.13} parent=73 // loop_pre_header
                _
              $region76: #{decoder_layer.13} parent=73 // loop_header
                %s260 = sphi 0, %s264
                %p261 = scmp.ge.s32.totalorder %s260, 1
                %s265 = sphi %s250, %s250
                %s266 = sphi %s245, %s245
              $region77: #{decoder_layer.13} parent=73 // loop_header_branch
                %263 = sbr.rel (%p261) target = $region81
              $region78: #{decoder_layer.13} parent=73 // loop_body
                %v267 = vld [vmem:[%s265] sm:%s258]
                %268 = vst [vmem:[%s266] sm:%s258] %v267
                %v269 = vld [vmem:[%s265 + $0x10] sm:%s258]
                %270 = vst [vmem:[%s266 + $0x8] sm:%s258] %v269
              $region79: #{decoder_layer.13} parent=73 // loop_footer
                %s264 = sadd.s32 1, %s260
              $region80: #{decoder_layer.13} parent=73 // loop_footer_branch
                %259 = sbr.rel target = $region76
              $region81: #{decoder_layer.13} parent=73 // loop_exit
                _
            $region74: #{decoder_layer.13} parent=65 // pred_fallthru
              _
          $region66: #{decoder_layer.13} parent=61 // pred_fallthru
            _
          %287 = vnop
        $region62: #{decoder_layer.13} parent=15 // pred_fallthru
          _
        // Predicated region
        $region97: #{decoder_layer.13} parent=15 // pred_check
          %p288 = pneg %p128
        $region98: #{decoder_layer.13} parent=15 // pred_check_branch
          %290 = sbr.rel (%p288) target = $region100
        $region99: #{decoder_layer.13} parent=15 // pred_region
          %p291 = scmp.lt.s32.totalorder %s17, 1
          %s292 = scalar_select %p291, %s17, 1
          %s293 = smul.addr %s292, 8
          %s294 = scalar_lea.vmem %s3, %s293
        $region100: #{decoder_layer.13} parent=15 // pred_fallthru
          _
      $region16: #{decoder_layer.13} parent=5 // pred_fallthru
        _
      %p295 = scmp.le.s32.totalorder 1, %s10
      %p296 = scmp.lt.s32.totalorder %s10, 3
      %p297 = pnand %p295, %p296
      %p298 = pneg %p297
      // Predicated region
      $region101: #{decoder_layer.13} parent=5 // pred_check
        _
      $region102: #{decoder_layer.13} parent=5 // pred_check_branch
        %300 = sbr.rel (%p297) target = $region104
      $region103: #{decoder_layer.13} parent=5 // pred_region
        %s301 = ssub.s32 %s10, 1
        %s302 = sand.u32 %s65, 1
        %s303 = sand.u32 %s65, 1
        %s304 = smul.addr %s303, 16
        %s305 = scalar_lea.vmem [#allocation2], %s304
        // Predicated region
        $region105: #{decoder_layer.13} parent=103 // pred_check
          %p306 = pneg %p78
        $region106: #{decoder_layer.13} parent=103 // pred_check_branch
          %308 = sbr.rel (%p306) target = $region108
        $region107: #{decoder_layer.13} parent=103 // pred_region
          _
        $region108: #{decoder_layer.13} parent=103 // pred_fallthru
          _
        %s309 = sand.u32 %s95, 1
        %s310 = sand.u32 %s95, 1
        %s311 = smul.addr %s310, 16
        %s312 = scalar_lea.vmem [#allocation3], %s311
        // Predicated region
        $region109: #{decoder_layer.13} parent=103 // pred_check
          %p313 = pneg %p108
        $region110: #{decoder_layer.13} parent=103 // pred_check_branch
          %315 = sbr.rel (%p313) target = $region112
        $region111: #{decoder_layer.13} parent=103 // pred_region
          _
        $region112: #{decoder_layer.13} parent=103 // pred_fallthru
          _
        %p316 = scmp.lt.s32.totalorder %s19, 1
        %s317 = scalar_select %p316, %s19, 1
        %p318 = scmp.lt.s32.totalorder %s20, 0
        %s319 = scalar_select %p318, %s20, 0
        %s320 = sadd.s32 %s319, %s317
        %s321 = smul.addr %s320, 8
        %s322 = scalar_lea.vmem %s0, %s321
        %p323 = pneg %p50
        %p324 = pneg %p47
        %s325 = sand.u32 %s65, 1
        %s326 = sand.u32 %s65, 1
        %s327 = smul.addr %s326, 16
        %s328 = scalar_lea.vmem [#allocation2], %s327
        %p329 = pneg %p78
        %p330 = pneg %p75
        %s331 = sand.u32 %s95, 1
        %s332 = sand.u32 %s95, 1
        %s333 = smul.addr %s332, 16
        %s334 = scalar_lea.vmem [#allocation3], %s333
        %p335 = pneg %p108
        %p336 = pneg %p105
        %p337 = scmp.lt.s32.totalorder %s19, 1
        %s338 = scalar_select %p337, %s19, 1
        %s339 = smul.addr %s338, 8
        %s340 = scalar_lea.vmem %s3, %s339
        %p341 = pneg %p134
        %p342 = pneg %p131
        %p343 = pneg %p162
        %p344 = pneg %p159
        %p345 = scmp.lt.s32.totalorder %s19, 1
        %s346 = scalar_select %p345, %s19, 1
        %p347 = scmp.lt.s32.totalorder %s20, 0
        %s348 = scalar_select %p347, %s20, 0
        %s349 = sadd.s32 %s348, %s346
        %s350 = smul.addr %s349, 8
        %s351 = scalar_lea.vmem %s4, %s350
        %p352 = scmp.lt.s32.totalorder %s19, 1
        %s353 = scalar_select %p352, %s19, 1
        %p354 = scmp.lt.s32.totalorder %s20, 0
        %s355 = scalar_select %p354, %s20, 0
        %s356 = sadd.s32 %s355, %s353
        %s357 = smul.addr %s356, 8
        %s358 = scalar_lea.vmem %s0, %s357
        %s359 = sadd.s32 %s20, 1
        %p360 = scmp.lt.s32.totalorder %s19, 1
        %s361 = scalar_select %p360, %s19, 1
        %s362 = smul.addr %s361, 8
        %s363 = scalar_lea.vmem %s3, %s362
        %p364 = scmp.lt.s32.totalorder %s19, 1
        %s365 = scalar_select %p364, %s19, 1
        %p366 = scmp.lt.s32.totalorder %s20, 0
        %s367 = scalar_select %p366, %s20, 0
        %s368 = sadd.s32 %s367, %s365
        %s369 = smul.addr %s368, 8
        %s370 = scalar_lea.vmem %s4, %s369
        %v371 = vld [vmem:[%s358] sm:$0xff]
        %v372 = vld [vmem:[%s305] sm:$0xff]
        %v373 = vld [vmem:[%s305 + $0x8] sm:$0xff]
        %v374 = vld [vmem:[%s312] sm:$0xff]
        %v375 = vld [vmem:[%s312 + $0x8] sm:$0xff]
        %v376 = vld [vmem:[%s363] sm:$0xff]
        %v377 = vmul.f32 %v371, 0.17677669
        %vm378 = vcmask 261120
        %v380 = vsel %vm378, %v377, 0
        %v383 = vsel %vm378, %v372, 0
        %v386 = vsel %vm378, %v373, 0
        %388 = vmatpush.xpose.msra.mxu0 0.0
        %389 = vmatpush.xpose.msra.mxu0 0.0
        %390 = vmatpush.xpose.msra.mxu0 0.0
        %391 = vmatpush.xpose.msra.mxu0 0.0
        %392 = vmatpush.xpose.msra.mxu0 0.0
        %393 = vmatpush.xpose.msra.mxu0 0.0
        %394 = vmatpush.xpose.msra.mxu0 0.0
        %395 = vmatpush.xpose.msra.mxu0 0.0
        %396 = vmatpush.xpose.msra.mxu0 0.0
        %397 = vmatpush.xpose.msra.mxu0 0.0
        %398 = vmatpush.xpose.msra.mxu0 0.0
        %399 = vmatpush.xpose.msra.mxu0 0.0
        %400 = vmatpush.xpose.msra.mxu0 0.0
        %401 = vmatpush.xpose.msra.mxu0 0.0
        %402 = vmatpush.xpose.msra.mxu0 %v386
        %403 = vmatpush.xpose.msra.mxu0 %v383
        %404 = vmatmul.f32.gmra.mxu0 %v380
        %v405 = vpop.f32.mrf.mxu0
        %v406 = vadd.f32 0.0, %v405
        %407 = vdwg.mxu0
        %vm408 = vcmp.ne.f32.partialorder %v376, 0.0
        %v409 = vsel %vm408, %v406, -1e+09
        %vm410 = vcmask 130048
        %v411 = vsel %vm410, %v409, -inf
        %412 = vmax.xlane.f32.xlu0 %v411
        %v413 = vpop.xlane.xlu0 %412
        %v414 = vsub.f32 %v409, %v413
        %v415 = vmul.f32 %v414, 1.442695
        %v416 = vpow.pop %v415
        %v417 = vsel %vm410, %v416, 0.0
        %418 = vadd.xlane.f32.xlu0 %v417
        %v419 = vpop.xlane.xlu0 %418
        %v421 = vsel %vm410, %v416, 0
        %423 = vmatpush.msra.mxu0 0.0
        %424 = vmatpush.msra.mxu0 0.0
        %425 = vmatpush.msra.mxu0 0.0
        %426 = vmatpush.msra.mxu0 0.0
        %427 = vmatpush.msra.mxu0 0.0
        %428 = vmatpush.msra.mxu0 0.0
        %429 = vmatpush.msra.mxu0 0.0
        %430 = vmatpush.msra.mxu0 0.0
        %431 = vmatpush.msra.mxu0 0.0
        %432 = vmatpush.msra.mxu0 0.0
        %433 = vmatpush.msra.mxu0 0.0
        %434 = vmatpush.msra.mxu0 0.0
        %435 = vmatpush.msra.mxu0 0.0
        %436 = vmatpush.msra.mxu0 0.0
        %437 = vmatpush.msra.mxu0 %v375
        %438 = vmatpush.msra.mxu0 %v374
        %439 = vmatmul.f32.gmra.mxu0 %v421
        %v440 = vpop.f32.mrf.mxu0
        %v441 = vadd.f32 0.0, %v440
        %442 = vdwg.mxu0
        %v443 = vrcp.pop %v419
        %v444 = vmul.f32 %v419, %v443
        %v445 = vsub.f32 1.0, %v444
        %v446 = vmul.f32 %v443, %v445
        %v447 = vadd.f32 %v443, %v446
        %vm448 = vweird.f32 %v419
        %vm449 = vweird.f32 %v443
        %vm450 = vmor %vm448, %vm449
        %v451 = vsel %vm450, %v443, %v447
        %v452 = vand.u32 2147483647, %v419
        %vm453 = vcmp.eq.f32.partialorder %v452, 8.507059e+37
        %v454 = vand.u32 %v419, 2147483648
        %v455 = vor.u32 1.1754944e-38, %v454
        %v456 = vsel %vm453, %v455, %v451
        %v457 = vmul.f32 %v441, %v456
        %458 = vrot.lane.b32.xlu0 %v377, 96
        %v459 = vpop.permute.xlu0 %458
        %460 = vrot.lane.b32.xlu0 %v372, 96
        %v461 = vpop.permute.xlu0 %460
        %462 = vrot.lane.b32.xlu0 %v373, 96
        %v463 = vpop.permute.xlu0 %462
        %v464 = vsel %vm378, %v459, 0
        %v466 = vsel %vm378, %v461, 0
        %v468 = vsel %vm378, %v463, 0
        %470 = vmatpush.xpose.msra.mxu0 0.0
        %471 = vmatpush.xpose.msra.mxu0 0.0
        %472 = vmatpush.xpose.msra.mxu0 0.0
        %473 = vmatpush.xpose.msra.mxu0 0.0
        %474 = vmatpush.xpose.msra.mxu0 0.0
        %475 = vmatpush.xpose.msra.mxu0 0.0
        %476 = vmatpush.xpose.msra.mxu0 0.0
        %477 = vmatpush.xpose.msra.mxu0 0.0
        %478 = vmatpush.xpose.msra.mxu0 0.0
        %479 = vmatpush.xpose.msra.mxu0 0.0
        %480 = vmatpush.xpose.msra.mxu0 0.0
        %481 = vmatpush.xpose.msra.mxu0 0.0
        %482 = vmatpush.xpose.msra.mxu0 0.0
        %483 = vmatpush.xpose.msra.mxu0 0.0
        %484 = vmatpush.xpose.msra.mxu0 %v468
        %485 = vmatpush.xpose.msra.mxu0 %v466
        %486 = vmatmul.f32.gmra.mxu0 %v464
        %v487 = vpop.f32.mrf.mxu0
        %v488 = vadd.f32 0.0, %v487
        %489 = vdwg.mxu0
        %v490 = vsel %vm408, %v488, -1e+09
        %v491 = vsel %vm410, %v490, -inf
        %492 = vmax.xlane.f32.xlu0 %v491
        %v493 = vpop.xlane.xlu0 %492
        %v494 = vsub.f32 %v490, %v493
        %v495 = vmul.f32 %v494, 1.442695
        %v496 = vpow.pop %v495
        %v497 = vsel %vm410, %v496, 0.0
        %498 = vadd.xlane.f32.xlu0 %v497
        %v499 = vpop.xlane.xlu0 %498
        %502 = vrot.lane.b32.xlu0 %v374, 96
        %v503 = vpop.permute.xlu0 %502
        %504 = vrot.lane.b32.xlu0 %v375, 96
        %v505 = vpop.permute.xlu0 %504
        %v509 = vsel %vm410, %v496, 0
        %511 = vmatpush.msra.mxu0 0.0
        %512 = vmatpush.msra.mxu0 0.0
        %513 = vmatpush.msra.mxu0 0.0
        %514 = vmatpush.msra.mxu0 0.0
        %515 = vmatpush.msra.mxu0 0.0
        %516 = vmatpush.msra.mxu0 0.0
        %517 = vmatpush.msra.mxu0 0.0
        %518 = vmatpush.msra.mxu0 0.0
        %519 = vmatpush.msra.mxu0 0.0
        %520 = vmatpush.msra.mxu0 0.0
        %521 = vmatpush.msra.mxu0 0.0
        %522 = vmatpush.msra.mxu0 0.0
        %523 = vmatpush.msra.mxu0 0.0
        %524 = vmatpush.msra.mxu0 0.0
        %525 = vmatpush.msra.mxu0 %v505
        %526 = vmatpush.msra.mxu0 %v503
        %527 = vmatmul.f32.gmra.mxu0 %v509
        %v528 = vpop.f32.mrf.mxu0
        %v529 = vadd.f32 0.0, %v528
        %530 = vdwg.mxu0
        %v531 = vrcp.pop %v499
        %v532 = vmul.f32 %v499, %v531
        %v533 = vsub.f32 1.0, %v532
        %v534 = vmul.f32 %v531, %v533
        %v535 = vadd.f32 %v531, %v534
        %vm536 = vweird.f32 %v499
        %vm537 = vweird.f32 %v531
        %vm538 = vmor %vm536, %vm537
        %v539 = vsel %vm538, %v531, %v535
        %v540 = vand.u32 2147483647, %v499
        %vm541 = vcmp.eq.f32.partialorder %v540, 8.507059e+37
        %v542 = vand.u32 %v499, 2147483648
        %v543 = vor.u32 1.1754944e-38, %v542
        %v544 = vsel %vm541, %v543, %v539
        %v545 = vmul.f32 %v529, %v544
        %546 = vrot.lane.b32.xlu0 %v377, 64
        %v547 = vpop.permute.xlu0 %546
        %548 = vrot.lane.b32.xlu0 %v372, 64
        %v549 = vpop.permute.xlu0 %548
        %550 = vrot.lane.b32.xlu0 %v373, 64
        %v551 = vpop.permute.xlu0 %550
        %v552 = vsel %vm378, %v547, 0
        %v554 = vsel %vm378, %v549, 0
        %v556 = vsel %vm378, %v551, 0
        %558 = vmatpush.xpose.msra.mxu0 0.0
        %559 = vmatpush.xpose.msra.mxu0 0.0
        %560 = vmatpush.xpose.msra.mxu0 0.0
        %561 = vmatpush.xpose.msra.mxu0 0.0
        %562 = vmatpush.xpose.msra.mxu0 0.0
        %563 = vmatpush.xpose.msra.mxu0 0.0
        %564 = vmatpush.xpose.msra.mxu0 0.0
        %565 = vmatpush.xpose.msra.mxu0 0.0
        %566 = vmatpush.xpose.msra.mxu0 0.0
        %567 = vmatpush.xpose.msra.mxu0 0.0
        %568 = vmatpush.xpose.msra.mxu0 0.0
        %569 = vmatpush.xpose.msra.mxu0 0.0
        %570 = vmatpush.xpose.msra.mxu0 0.0
        %571 = vmatpush.xpose.msra.mxu0 0.0
        %572 = vmatpush.xpose.msra.mxu0 %v556
        %573 = vmatpush.xpose.msra.mxu0 %v554
        %574 = vmatmul.f32.gmra.mxu0 %v552
        %v575 = vpop.f32.mrf.mxu0
        %v576 = vadd.f32 0.0, %v575
        %577 = vdwg.mxu0
        %v578 = vsel %vm408, %v576, -1e+09
        %v579 = vsel %vm410, %v578, -inf
        %580 = vmax.xlane.f32.xlu0 %v579
        %v581 = vpop.xlane.xlu0 %580
        %v582 = vsub.f32 %v578, %v581
        %v583 = vmul.f32 %v582, 1.442695
        %v584 = vpow.pop %v583
        %v585 = vsel %vm410, %v584, 0.0
        %586 = vadd.xlane.f32.xlu0 %v585
        %v587 = vpop.xlane.xlu0 %586
        %588 = vrot.lane.b32.xlu0 %v374, 64
        %v589 = vpop.permute.xlu0 %588
        %590 = vrot.lane.b32.xlu0 %v375, 64
        %v591 = vpop.permute.xlu0 %590
        %v595 = vsel %vm410, %v584, 0
        %597 = vmatpush.msra.mxu0 0.0
        %598 = vmatpush.msra.mxu0 0.0
        %599 = vmatpush.msra.mxu0 0.0
        %600 = vmatpush.msra.mxu0 0.0
        %601 = vmatpush.msra.mxu0 0.0
        %602 = vmatpush.msra.mxu0 0.0
        %603 = vmatpush.msra.mxu0 0.0
        %604 = vmatpush.msra.mxu0 0.0
        %605 = vmatpush.msra.mxu0 0.0
        %606 = vmatpush.msra.mxu0 0.0
        %607 = vmatpush.msra.mxu0 0.0
        %608 = vmatpush.msra.mxu0 0.0
        %609 = vmatpush.msra.mxu0 0.0
        %610 = vmatpush.msra.mxu0 0.0
        %611 = vmatpush.msra.mxu0 %v591
        %612 = vmatpush.msra.mxu0 %v589
        %613 = vmatmul.f32.gmra.mxu0 %v595
        %v614 = vpop.f32.mrf.mxu0
        %v615 = vadd.f32 0.0, %v614
        %616 = vdwg.mxu0
        %v617 = vrcp.pop %v587
        %v618 = vmul.f32 %v587, %v617
        %v619 = vsub.f32 1.0, %v618
        %v620 = vmul.f32 %v617, %v619
        %v621 = vadd.f32 %v617, %v620
        %vm622 = vweird.f32 %v587
        %vm623 = vweird.f32 %v617
        %vm624 = vmor %vm622, %vm623
        %v625 = vsel %vm624, %v617, %v621
        %v626 = vand.u32 2147483647, %v587
        %vm627 = vcmp.eq.f32.partialorder %v626, 8.507059e+37
        %v628 = vand.u32 %v587, 2147483648
        %v629 = vor.u32 1.1754944e-38, %v628
        %v630 = vsel %vm627, %v629, %v625
        %v631 = vmul.f32 %v615, %v630
        %632 = vrot.lane.b32.xlu0 %v377, 32
        %v633 = vpop.permute.xlu0 %632
        %634 = vrot.lane.b32.xlu0 %v372, 32
        %v635 = vpop.permute.xlu0 %634
        %636 = vrot.lane.b32.xlu0 %v373, 32
        %v637 = vpop.permute.xlu0 %636
        %v638 = vsel %vm378, %v633, 0
        %v640 = vsel %vm378, %v635, 0
        %v642 = vsel %vm378, %v637, 0
        %644 = vmatpush.xpose.msra.mxu0 0.0
        %645 = vmatpush.xpose.msra.mxu0 0.0
        %646 = vmatpush.xpose.msra.mxu0 0.0
        %647 = vmatpush.xpose.msra.mxu0 0.0
        %648 = vmatpush.xpose.msra.mxu0 0.0
        %649 = vmatpush.xpose.msra.mxu0 0.0
        %650 = vmatpush.xpose.msra.mxu0 0.0
        %651 = vmatpush.xpose.msra.mxu0 0.0
        %652 = vmatpush.xpose.msra.mxu0 0.0
        %653 = vmatpush.xpose.msra.mxu0 0.0
        %654 = vmatpush.xpose.msra.mxu0 0.0
        %655 = vmatpush.xpose.msra.mxu0 0.0
        %656 = vmatpush.xpose.msra.mxu0 0.0
        %657 = vmatpush.xpose.msra.mxu0 0.0
        %658 = vmatpush.xpose.msra.mxu0 %v642
        %659 = vmatpush.xpose.msra.mxu0 %v640
        %660 = vmatmul.f32.gmra.mxu0 %v638
        %v661 = vpop.f32.mrf.mxu0
        %v662 = vadd.f32 0.0, %v661
        %663 = vdwg.mxu0
        %v664 = vsel %vm408, %v662, -1e+09
        %v665 = vsel %vm410, %v664, -inf
        %666 = vmax.xlane.f32.xlu0 %v665
        %v667 = vpop.xlane.xlu0 %666
        %v668 = vsub.f32 %v664, %v667
        %v669 = vmul.f32 %v668, 1.442695
        %v670 = vpow.pop %v669
        %v671 = vsel %vm410, %v670, 0.0
        %672 = vadd.xlane.f32.xlu0 %v671
        %v673 = vpop.xlane.xlu0 %672
        %674 = vrot.lane.b32.xlu0 %v374, 32
        %v675 = vpop.permute.xlu0 %674
        %676 = vrot.lane.b32.xlu0 %v375, 32
        %v677 = vpop.permute.xlu0 %676
        %v681 = vsel %vm410, %v670, 0
        %683 = vmatpush.msra.mxu0 0.0
        %684 = vmatpush.msra.mxu0 0.0
        %685 = vmatpush.msra.mxu0 0.0
        %686 = vmatpush.msra.mxu0 0.0
        %687 = vmatpush.msra.mxu0 0.0
        %688 = vmatpush.msra.mxu0 0.0
        %689 = vmatpush.msra.mxu0 0.0
        %690 = vmatpush.msra.mxu0 0.0
        %691 = vmatpush.msra.mxu0 0.0
        %692 = vmatpush.msra.mxu0 0.0
        %693 = vmatpush.msra.mxu0 0.0
        %694 = vmatpush.msra.mxu0 0.0
        %695 = vmatpush.msra.mxu0 0.0
        %696 = vmatpush.msra.mxu0 0.0
        %697 = vmatpush.msra.mxu0 %v677
        %698 = vmatpush.msra.mxu0 %v675
        %699 = vmatmul.f32.gmra.mxu0 %v681
        %v700 = vpop.f32.mrf.mxu0
        %v701 = vadd.f32 0.0, %v700
        %702 = vdwg.mxu0
        %v703 = vrcp.pop %v673
        %v704 = vmul.f32 %v673, %v703
        %v705 = vsub.f32 1.0, %v704
        %v706 = vmul.f32 %v703, %v705
        %v707 = vadd.f32 %v703, %v706
        %vm708 = vweird.f32 %v673
        %vm709 = vweird.f32 %v703
        %vm710 = vmor %vm708, %vm709
        %v711 = vsel %vm710, %v703, %v707
        %v712 = vand.u32 2147483647, %v673
        %vm713 = vcmp.eq.f32.partialorder %v712, 8.507059e+37
        %v714 = vand.u32 %v673, 2147483648
        %v715 = vor.u32 1.1754944e-38, %v714
        %v716 = vsel %vm713, %v715, %v711
        %v717 = vmul.f32 %v701, %v716
        %719 = vrot.lane.b32.xlu0 %v545, 32
        %v720 = vpop.permute.xlu0 %719
        %723 = vrot.lane.b32.xlu0 %v631, 64
        %v724 = vpop.permute.xlu0 %723
        %727 = vrot.lane.b32.xlu0 %v717, 96
        %v728 = vpop.permute.xlu0 %727
        %v730 = vsel %vm378, %v457, %v720
        %vm731 = vcmask 523264
        %v732 = vsel %vm731, %v730, %v724
        %vm733 = vcmask 785408
        %v734 = vsel %vm733, %v732, %v728
        %735 = vst [vmem:[%s370] sm:$0xff] %v734
        %p736 = scmp.lt.s32.totalorder %s19, 1
        %s737 = scalar_select %p736, %s19, 1
        %p738 = scmp.lt.s32.totalorder %s20, 0
        %s739 = scalar_select %p738, %s20, 0
        %s740 = sadd.s32 %s739, %s737
        %s741 = smul.addr %s740, 8
        %s742 = scalar_lea.vmem %s4, %s741
        // Predicated region
        $region113: #{decoder_layer.13} parent=103 // pred_check
          %p743 = pneg %p159
        $region114: #{decoder_layer.13} parent=103 // pred_check_branch
          %745 = sbr.rel (%p743) target = $region116
        $region115: #{decoder_layer.13} parent=103 // pred_region
          _
        $region116: #{decoder_layer.13} parent=103 // pred_fallthru
          _
      $region104: #{decoder_layer.13} parent=5 // pred_fallthru
        _
      %p746 = scmp.le.s32.totalorder 2, %s10
      // Predicated region
      $region117: #{decoder_layer.13} parent=5 // pred_check
        %p747 = pneg %p746
      $region118: #{decoder_layer.13} parent=5 // pred_check_branch
        %749 = sbr.rel (%p747) target = $region120
      $region119: #{decoder_layer.13} parent=5 // pred_region
        %s750 = ssub.s32 %s10, 2
        // Predicated region
        $region121: #{decoder_layer.13} parent=119 // pred_check
          %p751 = pneg %p165
        $region122: #{decoder_layer.13} parent=119 // pred_check_branch
          %753 = sbr.rel (%p751) target = $region124
        $region123: #{decoder_layer.13} parent=119 // pred_region
          %p754 = scmp.lt.s32.totalorder %s21, 1
          %s755 = scalar_select %p754, %s21, 1
          %p756 = scmp.lt.s32.totalorder %s22, 0
          %s757 = scalar_select %p756, %s22, 0
          %s758 = sadd.s32 %s757, %s755
          %s759 = smul.addr %s758, 8
          %s760 = scalar_lea.vmem %s4, %s759
        $region124: #{decoder_layer.13} parent=119 // pred_fallthru
          _
      $region120: #{decoder_layer.13} parent=5 // pred_fallthru
        _
    $region6: #{decoder_layer.13} parent=1 // loop_footer
      %s14 = sadd.s32 1, %s10
    $region7: #{decoder_layer.13} parent=1 // loop_footer_branch
      %9 = sbr.rel target = $region3
    $region8: #{decoder_layer.13} parent=1 // loop_exit
      _

</llo_original>
